<compile_context>
chip_gen: v7x
topology: tpu7x:2x2x1
jax: 0.10.0
libtpu: 0.0.40
codegen_flags: <defaults>
</compile_context>

<pallas_src>
import jax
import jax.numpy as jnp
from jax.experimental import pallas as pl
from jax.experimental.pallas import tpu as pltpu

C1 = 64     # conv1 output channels
C2 = 128    # conv2 output channels
KSZ = 3     # conv kernel size
PAD = 8     # zero rows appended to the flat input (>= 2 required; 8 keeps tiling clean)


def _round_up(x, m):
    return ((x + m - 1) // m) * m


def _dims(patch_size):
    """Static shape bookkeeping for the fused kernel."""
    H = patch_size
    H1 = H - 2                        # conv1 valid output size
    P1 = H1 // 2                      # pool1 output size
    H2 = P1 - 2                       # conv2 valid output size
    P2 = H2 // 2                      # pool2 output size
    R1 = H1 * H                       # "wide" conv1 rows (row = ho*H + wo, wo in [0,H))
    M1 = R1 - H - 1                   # rows of the 2x2-window max map after conv1
    S1R = _round_up(P1 * P1 + 2, 8)   # zero-padded pooled-map rows fed to conv2
    R2 = H2 * P1                      # "wide" conv2 rows (row = ho2*P1 + wo2)
    M2 = R2 - P1 - 1                  # rows of the 2x2-window max map after conv2
    Q = P2 * P2                       # spatial positions entering fc1
    return dict(H=H, H1=H1, P1=P1, H2=H2, P2=P2, R1=R1, M1=M1, S1R=S1R,
                R2=R2, M2=M2, Q=Q)


# ---------------------------------------------------------------------------
# Fused Pallas kernel (one grid step == one image)
# ---------------------------------------------------------------------------

def _make_kernel(H, Cin, dim):
    d = _dims(H)
    R1, M1, S1R = d["R1"], d["M1"], d["S1R"]
    P1, R2, M2, Q = d["P1"], d["R2"], d["M2"], d["Q"]

    def kernel(alphas_ref, x_ref, w1_ref, b1_ref, s1_ref, w2_ref, b2_ref,
               s2_ref, wfc1_ref, b3_ref, wfc2_ref, b4_ref, o_ref):
        f32 = jnp.float32
        a1, a2, a3, a4 = (alphas_ref[0], alphas_ref[1],
                          alphas_ref[2], alphas_ref[3])
        x = x_ref[0]                                       # (H*H+PAD, Cin)

        # ---- conv1 (3x3 valid): 9 shifted-row-band matmuls + bias + PReLU ----
        acc1 = jnp.dot(x[0:R1, :], w1_ref[0], preferred_element_type=f32)
        for t in range(1, 9):
            kh, kw = divmod(t, 3)
            off = kh * H + kw
            acc1 = acc1 + jnp.dot(x[off:off + R1, :], w1_ref[t],
                                  preferred_element_type=f32)
        y1 = acc1 + b1_ref[...]                            # (R1, C1)
        y1 = jnp.where(y1 > 0, y1, a1 * y1)                # PReLU

        # ---- maxpool 2x2 / stride 2, fused epilogue ----
        # every 2x2-window max via two shifted elementwise maxes ...
        mh = jnp.maximum(y1[:R1 - H, :], y1[H:, :])
        mw = jnp.maximum(mh[:M1, :], mh[1:M1 + 1, :])      # (M1, C1)
        # ... then stride-2 window selection (+ zero pad rows for conv2's
        # shifted views) as a one-hot matmul on the idle MXU.
        p1 = jnp.dot(s1_ref[...], mw, preferred_element_type=f32)   # (S1R, C1)

        # ---- conv2 (3x3 valid) + bias + PReLU ----
        acc2 = jnp.dot(p1[0:R2, :], w2_ref[0], preferred_element_type=f32)
        for t in range(1, 9):
            kh, kw = divmod(t, 3)
            off = kh * P1 + kw
            acc2 = acc2 + jnp.dot(p1[off:off + R2, :], w2_ref[t],
                                  preferred_element_type=f32)
        y2 = acc2 + b2_ref[...]                            # (R2, C2), 128 lanes dense
        y2 = jnp.where(y2 > 0, y2, a2 * y2)

        # ---- maxpool 2x2 / stride 2 ----
        mh2 = jnp.maximum(y2[:R2 - P1, :], y2[P1:, :])
        mw2 = jnp.maximum(mh2[:M2, :], mh2[1:M2 + 1, :])   # (M2, C2)
        p2 = jnp.dot(s2_ref[...], mw2, preferred_element_type=f32)   # (Q, C2)

        # ---- fc1 + PReLU (torch NCHW flatten folded into wfc1 at pack time) ----
        o3 = b3_ref[...]                                   # (1, dim)
        for q in range(Q):
            o3 = o3 + jnp.dot(p2[q:q + 1, :], wfc1_ref[q],
                              preferred_element_type=f32)
        o3 = jnp.where(o3 > 0, o3, a3 * o3)

        # ---- fc2 + PReLU ----
        o4 = jnp.dot(o3, wfc2_ref[...], preferred_element_type=f32) + b4_ref[...]
        o4 = jnp.where(o4 > 0, o4, a4 * o4)

        o_ref[0] = o4

    return kernel


# ---------------------------------------------------------------------------
# Wrapper
# ---------------------------------------------------------------------------

def featurizer_forward(x_nchw, params):
    N, Cin, H, W = x_nchw.shape
    assert H == W, "square patches expected"
    dim = params["wfc2"].shape[0]
    d = _dims(H)

    # NCHW -> flat "NHWC rows" (row = h*W + w, channels on the lane axis),
    # plus a few zero rows so the 9 shifted row-band views stay in bounds.
    x = jnp.transpose(x_nchw, (0, 2, 3, 1)).reshape(N, H * W, Cin)
    x = jnp.pad(x, ((0, 0), (0, PAD), (0, 0)))

    def full(shape):
        rank = len(shape)
        return pl.BlockSpec(shape, lambda i: (0,) * rank)   # resident weights

    grid_spec = pltpu.PrefetchScalarGridSpec(
        num_scalar_prefetch=0,
        grid=(N,),
        in_specs=[
            pl.BlockSpec(memory_space=pltpu.MemorySpace.SMEM),         # PReLU alphas
            pl.BlockSpec((1, H * W + PAD, Cin), lambda i: (i, 0, 0)),  # image i
            full(params["w1"].shape),
            full(params["b1"].shape),
            full(params["s1"].shape),
            full(params["w2"].shape),
            full(params["b2"].shape),
            full(params["s2"].shape),
            full(params["wfc1"].shape),
            full(params["b3"].shape),
            full(params["wfc2"].shape),
            full(params["b4"].shape),
        ],
        out_specs=pl.BlockSpec((1, 1, dim), lambda i: (i, 0, 0)),
    )

    flops = 2 * N * (d["R1"] * Cin * 9 * C1 + d["S1R"] * d["M1"] * C1
                     + d["R2"] * C1 * 9 * C2 + d["Q"] * d["M2"] * C2
                     + d["Q"] * C2 * dim + dim * dim)
    bytes_accessed = 4 * (int(x.size) + sum(int(v.size) for v in params.values())
                          + N * dim)

    out = pl.pallas_call(
        _make_kernel(H, Cin, dim),
        out_shape=jax.ShapeDtypeStruct((N, 1, dim), jnp.float32),
        grid_spec=grid_spec,
        compiler_params=pltpu.CompilerParams(
            dimension_semantics=("parallel",)),
        cost_estimate=pl.CostEstimate(flops=flops, transcendentals=0,
                                      bytes_accessed=bytes_accessed),
    )(params["alphas"], x, params["w1"], params["b1"], params["s1"],
      params["w2"], params["b2"], params["s2"], params["wfc1"],
      params["b3"], params["wfc2"], params["b4"])
    return out.reshape(N, dim)


# ---------------------------------------------------------------------------
# Parameter init (torch layouts) + one-time packing into kernel layouts
# ---------------------------------------------------------------------------

def init_torch_params(key, inchannel, patch_size, dim):
    """Parameters in the original torch layouts (Conv2d OIHW, Linear (out,in))."""
    d = _dims(patch_size)
    flat_size = C2 * d["P2"] * d["P2"]
    ks = jax.random.split(key, 9)
    f32 = jnp.float32
    tp = {
        "conv1_w": jax.random.normal(ks[0], (C1, inchannel, KSZ, KSZ), f32) * 0.05,
        "conv1_b": jax.random.normal(ks[1], (C1,), f32) * 0.05,
        "conv2_w": jax.random.normal(ks[2], (C2, C1, KSZ, KSZ), f32) * 0.05,
        "conv2_b": jax.random.normal(ks[3], (C2,), f32) * 0.05,
        "fc1_w":   jax.random.normal(ks[4], (dim, flat_size), f32) * 0.05,
        "fc1_b":   jax.random.normal(ks[5], (dim,), f32) * 0.05,
        "fc2_w":   jax.random.normal(ks[6], (dim, dim), f32) * 0.05,
        "fc2_b":   jax.random.normal(ks[7], (dim,), f32) * 0.05,
        # PReLU single-parameter, torch default init 0.25
        "prelu1": jnp.full((1,), 0.25, f32),
        "prelu2": jnp.full((1,), 0.25, f32),
        "prelu3": jnp.full((1,), 0.25, f32),
        "prelu4": jnp.full((1,), 0.25, f32),
    }
    return tp, ks[8]


def pack_params(tp, inchannel, patch_size, dim):
    """Pre-lay-out weights for the fused kernel (done once, outside the hot path)."""
    d = _dims(patch_size)
    H, P1, P2, Q = d["H"], d["P1"], d["P2"], d["Q"]

    # conv weights: OIHW -> (tap = kh*3+kw, Cin, Cout)
    w1 = jnp.transpose(tp["conv1_w"], (2, 3, 1, 0)).reshape(9, inchannel, C1)
    w2 = jnp.transpose(tp["conv2_w"], (2, 3, 1, 0)).reshape(9, C1, C2)
    # fc1: fold torch's NCHW .view(N,-1) flatten (feature = c*Q + q) into the
    # weight layout: wfc1[q, c, d] = fc1_w[d, c*Q + q]
    wfc1 = jnp.transpose(tp["fc1_w"].reshape(dim, C2, Q), (2, 1, 0))
    wfc2 = jnp.transpose(tp["fc2_w"])                      # (in, out)

    # one-hot row-selection matrices for the stride-2 pooling windows
    j1 = jnp.arange(P1 * P1)
    sel1 = 2 * (j1 // P1) * H + 2 * (j1 % P1)
    s1 = (sel1[:, None] == jnp.arange(d["M1"])[None, :]).astype(jnp.float32)
    s1 = jnp.pad(s1, ((0, d["S1R"] - P1 * P1), (0, 0)))    # zero rows pad conv2 input
    j2 = jnp.arange(Q)
    sel2 = 2 * (j2 // P2) * P1 + 2 * (j2 % P2)
    s2 = (sel2[:, None] == jnp.arange(d["M2"])[None, :]).astype(jnp.float32)

    alphas = jnp.concatenate([tp["prelu1"], tp["prelu2"],
                              tp["prelu3"], tp["prelu4"]])
    return {
        "w1": w1, "b1": tp["conv1_b"].reshape(1, C1),
        "w2": w2, "b2": tp["conv2_b"].reshape(1, C2),
        "wfc1": wfc1, "b3": tp["fc1_b"].reshape(1, dim),
        "wfc2": wfc2, "b4": tp["fc2_b"].reshape(1, dim),
        "s1": s1, "s2": s2, "alphas": alphas,
    }


# ---------------------------------------------------------------------------
# Pure-JAX reference of the torch forward (for in-script validation only)
# ---------------------------------------------------------------------------

def featurizer_reference(x_nchw, tp):
    prec = jax.lax.Precision.HIGHEST

    def prelu(v, a):
        return jnp.where(v > 0, v, a * v)

    def conv(v, w, b):
        y = jax.lax.conv_general_dilated(
            v, w, (1, 1), "VALID",
            dimension_numbers=("NCHW", "OIHW", "NCHW"), precision=prec)
        return y + b[None, :, None, None]

    def mp2(v):
        return jax.lax.reduce_window(v, -jnp.inf, jax.lax.max,
                                     (1, 1, 2, 2), (1, 1, 2, 2), "VALID")

    y = mp2(prelu(conv(x_nchw, tp["conv1_w"], tp["conv1_b"]), tp["prelu1"][0]))
    y = mp2(prelu(conv(y, tp["conv2_w"], tp["conv2_b"]), tp["prelu2"][0]))
    flat = y.reshape(y.shape[0], -1)
    o3 = prelu(jnp.dot(flat, tp["fc1_w"].T, precision=prec) + tp["fc1_b"],
               tp["prelu3"][0])
    o4 = prelu(jnp.dot(o3, tp["fc2_w"].T, precision=prec) + tp["fc2_b"],
               tp["prelu4"][0])
    return o4


# ---------------------------------------------------------------------------
# Run
# ---------------------------------------------------------------------------

if __name__ == "__main__":
    inchannel, patch_size, in_dim, batch = 4, 16, 32, 2

    key = jax.random.PRNGKey(0)
    tp, xkey = init_torch_params(key, inchannel, patch_size, in_dim)
    params = pack_params(tp, inchannel, patch_size, in_dim)
    x = jax.random.normal(xkey, (batch, inchannel, patch_size, patch_size),
                          jnp.float32)

    fwd = jax.jit(featurizer_forward)
    out = fwd(x, params)
    jax.block_until_ready(out)

    assert out.shape == (batch, in_dim), out.shape
    assert out.dtype == jnp.float32
    assert bool(jnp.all(jnp.isfinite(out)))

    # validate against the pure-JAX reference of the torch forward
    ref = featurizer_reference(x, tp)
    assert bool(jnp.allclose(out, ref, rtol=3e-2, atol=1e-3)), (
        "max abs err = %g" % float(jnp.max(jnp.abs(out - ref))))

    print("KERNEL_OK")
</pallas_src>

<mosaic_0001>
module attributes {stable_mosaic.version = 11 : i64} {
  func.func @kernel(%arg0: i32, %arg1: memref<4xf32, #tpu.memory_space<smem>>, %arg2: memref<1x264x4xf32, #tpu.memory_space<vmem>>, %arg3: memref<9x4x64xf32, #tpu.memory_space<vmem>>, %arg4: memref<1x64xf32, #tpu.memory_space<vmem>>, %arg5: memref<56x207xf32, #tpu.memory_space<vmem>>, %arg6: memref<9x64x128xf32, #tpu.memory_space<vmem>>, %arg7: memref<1x128xf32, #tpu.memory_space<vmem>>, %arg8: memref<4x27xf32, #tpu.memory_space<vmem>>, %arg9: memref<4x128x32xf32, #tpu.memory_space<vmem>>, %arg10: memref<1x32xf32, #tpu.memory_space<vmem>>, %arg11: memref<32x32xf32, #tpu.memory_space<vmem>>, %arg12: memref<1x32xf32, #tpu.memory_space<vmem>>, %arg13: memref<1x1x32xf32, #tpu.memory_space<vmem>>) attributes {dimension_semantics = [#tpu.dimension_semantics<parallel>], iteration_bounds = array<i64: 2>, scalar_prefetch = 0 : i64, scratch_operands = 0 : i64, tpu.core_type = #tpu.core_type<tc>, window_params = [{transform_indices = @transform_0, window_bounds = array<i64: 4>}, {transform_indices = @transform_1, window_bounds = array<i64: 1, 264, 4>}, {pipeline_mode = #tpu.pipeline_mode<synchronous>, transform_indices = @transform_2, window_bounds = array<i64: 9, 4, 64>}, {pipeline_mode = #tpu.pipeline_mode<synchronous>, transform_indices = @transform_3, window_bounds = array<i64: 1, 64>}, {pipeline_mode = #tpu.pipeline_mode<synchronous>, transform_indices = @transform_4, window_bounds = array<i64: 56, 207>}, {pipeline_mode = #tpu.pipeline_mode<synchronous>, transform_indices = @transform_5, window_bounds = array<i64: 9, 64, 128>}, {pipeline_mode = #tpu.pipeline_mode<synchronous>, transform_indices = @transform_6, window_bounds = array<i64: 1, 128>}, {pipeline_mode = #tpu.pipeline_mode<synchronous>, transform_indices = @transform_7, window_bounds = array<i64: 4, 27>}, {pipeline_mode = #tpu.pipeline_mode<synchronous>, transform_indices = @transform_8, window_bounds = array<i64: 4, 128, 32>}, {pipeline_mode = #tpu.pipeline_mode<synchronous>, transform_indices = @transform_9, window_bounds = array<i64: 1, 32>}, {pipeline_mode = #tpu.pipeline_mode<synchronous>, transform_indices = @transform_10, window_bounds = array<i64: 32, 32>}, {pipeline_mode = #tpu.pipeline_mode<synchronous>, transform_indices = @transform_11, window_bounds = array<i64: 1, 32>}, {transform_indices = @transform_12, window_bounds = array<i64: 1, 1, 32>}]} {
    %c0 = arith.constant 0 : index
    %0 = memref.load %arg1[%c0] : memref<4xf32, #tpu.memory_space<smem>>
    %c1 = arith.constant 1 : index
    %1 = memref.load %arg1[%c1] : memref<4xf32, #tpu.memory_space<smem>>
    %c2 = arith.constant 2 : index
    %2 = memref.load %arg1[%c2] : memref<4xf32, #tpu.memory_space<smem>>
    %c3 = arith.constant 3 : index
    %3 = memref.load %arg1[%c3] : memref<4xf32, #tpu.memory_space<smem>>
    %c0_0 = arith.constant 0 : index
    %c0_1 = arith.constant 0 : index
    %c0_2 = arith.constant 0 : index
    %4 = vector.load %arg2[%c0_0, %c0_1, %c0_2] : memref<1x264x4xf32, #tpu.memory_space<vmem>>, vector<1x264x4xf32>
    %5 = vector.shape_cast %4 : vector<1x264x4xf32> to vector<264x4xf32>
    %6 = vector.extract_strided_slice %5 {offsets = [0, 0], sizes = [224, 4], strides = [1, 1]} : vector<264x4xf32> to vector<224x4xf32>
    %c0_3 = arith.constant 0 : index
    %c0_4 = arith.constant 0 : index
    %c0_5 = arith.constant 0 : index
    %7 = vector.load %arg3[%c0_3, %c0_4, %c0_5] : memref<9x4x64xf32, #tpu.memory_space<vmem>>, vector<1x4x64xf32>
    %8 = vector.shape_cast %7 : vector<1x4x64xf32> to vector<4x64xf32>
    %cst = arith.constant dense<0.000000e+00> : vector<224x64xf32>
    %9 = tpu.matmul %6, %8, %cst {dimension_numbers = #tpu.dot_dimension_numbers<[1], [0], [0], [1], [0, 0, 1, 1], [], []>} : vector<224x4xf32>, vector<4x64xf32>, vector<224x64xf32> -> vector<224x64xf32>
    %10 = vector.extract_strided_slice %5 {offsets = [1, 0], sizes = [224, 4], strides = [1, 1]} : vector<264x4xf32> to vector<224x4xf32>
    %c1_6 = arith.constant 1 : index
    %c0_7 = arith.constant 0 : index
    %c0_8 = arith.constant 0 : index
    %11 = vector.load %arg3[%c1_6, %c0_7, %c0_8] : memref<9x4x64xf32, #tpu.memory_space<vmem>>, vector<1x4x64xf32>
    %12 = vector.shape_cast %11 : vector<1x4x64xf32> to vector<4x64xf32>
    %cst_9 = arith.constant dense<0.000000e+00> : vector<224x64xf32>
    %13 = tpu.matmul %10, %12, %cst_9 {dimension_numbers = #tpu.dot_dimension_numbers<[1], [0], [0], [1], [0, 0, 1, 1], [], []>} : vector<224x4xf32>, vector<4x64xf32>, vector<224x64xf32> -> vector<224x64xf32>
    %14 = arith.addf %9, %13 : vector<224x64xf32>
    %15 = vector.extract_strided_slice %5 {offsets = [2, 0], sizes = [224, 4], strides = [1, 1]} : vector<264x4xf32> to vector<224x4xf32>
    %c2_10 = arith.constant 2 : index
    %c0_11 = arith.constant 0 : index
    %c0_12 = arith.constant 0 : index
    %16 = vector.load %arg3[%c2_10, %c0_11, %c0_12] : memref<9x4x64xf32, #tpu.memory_space<vmem>>, vector<1x4x64xf32>
    %17 = vector.shape_cast %16 : vector<1x4x64xf32> to vector<4x64xf32>
    %cst_13 = arith.constant dense<0.000000e+00> : vector<224x64xf32>
    %18 = tpu.matmul %15, %17, %cst_13 {dimension_numbers = #tpu.dot_dimension_numbers<[1], [0], [0], [1], [0, 0, 1, 1], [], []>} : vector<224x4xf32>, vector<4x64xf32>, vector<224x64xf32> -> vector<224x64xf32>
    %19 = arith.addf %14, %18 : vector<224x64xf32>
    %20 = vector.extract_strided_slice %5 {offsets = [16, 0], sizes = [224, 4], strides = [1, 1]} : vector<264x4xf32> to vector<224x4xf32>
    %c3_14 = arith.constant 3 : index
    %c0_15 = arith.constant 0 : index
    %c0_16 = arith.constant 0 : index
    %21 = vector.load %arg3[%c3_14, %c0_15, %c0_16] : memref<9x4x64xf32, #tpu.memory_space<vmem>>, vector<1x4x64xf32>
    %22 = vector.shape_cast %21 : vector<1x4x64xf32> to vector<4x64xf32>
    %cst_17 = arith.constant dense<0.000000e+00> : vector<224x64xf32>
    %23 = tpu.matmul %20, %22, %cst_17 {dimension_numbers = #tpu.dot_dimension_numbers<[1], [0], [0], [1], [0, 0, 1, 1], [], []>} : vector<224x4xf32>, vector<4x64xf32>, vector<224x64xf32> -> vector<224x64xf32>
    %24 = arith.addf %19, %23 : vector<224x64xf32>
    %25 = vector.extract_strided_slice %5 {offsets = [17, 0], sizes = [224, 4], strides = [1, 1]} : vector<264x4xf32> to vector<224x4xf32>
    %c4 = arith.constant 4 : index
    %c0_18 = arith.constant 0 : index
    %c0_19 = arith.constant 0 : index
    %26 = vector.load %arg3[%c4, %c0_18, %c0_19] : memref<9x4x64xf32, #tpu.memory_space<vmem>>, vector<1x4x64xf32>
    %27 = vector.shape_cast %26 : vector<1x4x64xf32> to vector<4x64xf32>
    %cst_20 = arith.constant dense<0.000000e+00> : vector<224x64xf32>
    %28 = tpu.matmul %25, %27, %cst_20 {dimension_numbers = #tpu.dot_dimension_numbers<[1], [0], [0], [1], [0, 0, 1, 1], [], []>} : vector<224x4xf32>, vector<4x64xf32>, vector<224x64xf32> -> vector<224x64xf32>
    %29 = arith.addf %24, %28 : vector<224x64xf32>
    %30 = vector.extract_strided_slice %5 {offsets = [18, 0], sizes = [224, 4], strides = [1, 1]} : vector<264x4xf32> to vector<224x4xf32>
    %c5 = arith.constant 5 : index
    %c0_21 = arith.constant 0 : index
    %c0_22 = arith.constant 0 : index
    %31 = vector.load %arg3[%c5, %c0_21, %c0_22] : memref<9x4x64xf32, #tpu.memory_space<vmem>>, vector<1x4x64xf32>
    %32 = vector.shape_cast %31 : vector<1x4x64xf32> to vector<4x64xf32>
    %cst_23 = arith.constant dense<0.000000e+00> : vector<224x64xf32>
    %33 = tpu.matmul %30, %32, %cst_23 {dimension_numbers = #tpu.dot_dimension_numbers<[1], [0], [0], [1], [0, 0, 1, 1], [], []>} : vector<224x4xf32>, vector<4x64xf32>, vector<224x64xf32> -> vector<224x64xf32>
    %34 = arith.addf %29, %33 : vector<224x64xf32>
    %35 = vector.extract_strided_slice %5 {offsets = [32, 0], sizes = [224, 4], strides = [1, 1]} : vector<264x4xf32> to vector<224x4xf32>
    %c6 = arith.constant 6 : index
    %c0_24 = arith.constant 0 : index
    %c0_25 = arith.constant 0 : index
    %36 = vector.load %arg3[%c6, %c0_24, %c0_25] : memref<9x4x64xf32, #tpu.memory_space<vmem>>, vector<1x4x64xf32>
    %37 = vector.shape_cast %36 : vector<1x4x64xf32> to vector<4x64xf32>
    %cst_26 = arith.constant dense<0.000000e+00> : vector<224x64xf32>
    %38 = tpu.matmul %35, %37, %cst_26 {dimension_numbers = #tpu.dot_dimension_numbers<[1], [0], [0], [1], [0, 0, 1, 1], [], []>} : vector<224x4xf32>, vector<4x64xf32>, vector<224x64xf32> -> vector<224x64xf32>
    %39 = arith.addf %34, %38 : vector<224x64xf32>
    %40 = vector.extract_strided_slice %5 {offsets = [33, 0], sizes = [224, 4], strides = [1, 1]} : vector<264x4xf32> to vector<224x4xf32>
    %c7 = arith.constant 7 : index
    %c0_27 = arith.constant 0 : index
    %c0_28 = arith.constant 0 : index
    %41 = vector.load %arg3[%c7, %c0_27, %c0_28] : memref<9x4x64xf32, #tpu.memory_space<vmem>>, vector<1x4x64xf32>
    %42 = vector.shape_cast %41 : vector<1x4x64xf32> to vector<4x64xf32>
    %cst_29 = arith.constant dense<0.000000e+00> : vector<224x64xf32>
    %43 = tpu.matmul %40, %42, %cst_29 {dimension_numbers = #tpu.dot_dimension_numbers<[1], [0], [0], [1], [0, 0, 1, 1], [], []>} : vector<224x4xf32>, vector<4x64xf32>, vector<224x64xf32> -> vector<224x64xf32>
    %44 = arith.addf %39, %43 : vector<224x64xf32>
    %45 = vector.extract_strided_slice %5 {offsets = [34, 0], sizes = [224, 4], strides = [1, 1]} : vector<264x4xf32> to vector<224x4xf32>
    %c8 = arith.constant 8 : index
    %c0_30 = arith.constant 0 : index
    %c0_31 = arith.constant 0 : index
    %46 = vector.load %arg3[%c8, %c0_30, %c0_31] : memref<9x4x64xf32, #tpu.memory_space<vmem>>, vector<1x4x64xf32>
    %47 = vector.shape_cast %46 : vector<1x4x64xf32> to vector<4x64xf32>
    %cst_32 = arith.constant dense<0.000000e+00> : vector<224x64xf32>
    %48 = tpu.matmul %45, %47, %cst_32 {dimension_numbers = #tpu.dot_dimension_numbers<[1], [0], [0], [1], [0, 0, 1, 1], [], []>} : vector<224x4xf32>, vector<4x64xf32>, vector<224x64xf32> -> vector<224x64xf32>
    %49 = arith.addf %44, %48 : vector<224x64xf32>
    %c0_33 = arith.constant 0 : index
    %c0_34 = arith.constant 0 : index
    %50 = vector.load %arg4[%c0_33, %c0_34] : memref<1x64xf32, #tpu.memory_space<vmem>>, vector<1x64xf32>
    %51 = vector.broadcast %50 : vector<1x64xf32> to vector<224x64xf32>
    %52 = arith.addf %49, %51 : vector<224x64xf32>
    %cst_35 = arith.constant 0.000000e+00 : f32
    %53 = vector.broadcast %cst_35 : f32 to vector<224x64xf32>
    %54 = arith.cmpf ogt, %52, %53 : vector<224x64xf32>
    %55 = vector.broadcast %0 : f32 to vector<224x64xf32>
    %56 = arith.mulf %55, %52 : vector<224x64xf32>
    %57 = arith.select %54, %52, %56 : vector<224x64xi1>, vector<224x64xf32>
    %58 = vector.extract_strided_slice %57 {offsets = [0, 0], sizes = [208, 64], strides = [1, 1]} : vector<224x64xf32> to vector<208x64xf32>
    %59 = vector.extract_strided_slice %57 {offsets = [16, 0], sizes = [208, 64], strides = [1, 1]} : vector<224x64xf32> to vector<208x64xf32>
    %60 = arith.maximumf %58, %59 : vector<208x64xf32>
    %61 = vector.extract_strided_slice %60 {offsets = [0, 0], sizes = [207, 64], strides = [1, 1]} : vector<208x64xf32> to vector<207x64xf32>
    %62 = vector.extract_strided_slice %60 {offsets = [1, 0], sizes = [207, 64], strides = [1, 1]} : vector<208x64xf32> to vector<207x64xf32>
    %63 = arith.maximumf %61, %62 : vector<207x64xf32>
    %c0_36 = arith.constant 0 : index
    %c0_37 = arith.constant 0 : index
    %64 = vector.load %arg5[%c0_36, %c0_37] : memref<56x207xf32, #tpu.memory_space<vmem>>, vector<56x207xf32>
    %cst_38 = arith.constant dense<0.000000e+00> : vector<56x64xf32>
    %65 = tpu.matmul %64, %63, %cst_38 {dimension_numbers = #tpu.dot_dimension_numbers<[1], [0], [0], [1], [0, 0, 1, 1], [], []>} : vector<56x207xf32>, vector<207x64xf32>, vector<56x64xf32> -> vector<56x64xf32>
    %66 = vector.extract_strided_slice %65 {offsets = [0, 0], sizes = [35, 64], strides = [1, 1]} : vector<56x64xf32> to vector<35x64xf32>
    %c0_39 = arith.constant 0 : index
    %c0_40 = arith.constant 0 : index
    %c0_41 = arith.constant 0 : index
    %67 = vector.load %arg6[%c0_39, %c0_40, %c0_41] : memref<9x64x128xf32, #tpu.memory_space<vmem>>, vector<1x64x128xf32>
    %68 = vector.shape_cast %67 : vector<1x64x128xf32> to vector<64x128xf32>
    %cst_42 = arith.constant dense<0.000000e+00> : vector<35x128xf32>
    %69 = tpu.matmul %66, %68, %cst_42 {dimension_numbers = #tpu.dot_dimension_numbers<[1], [0], [0], [1], [0, 0, 1, 1], [], []>} : vector<35x64xf32>, vector<64x128xf32>, vector<35x128xf32> -> vector<35x128xf32>
    %70 = vector.extract_strided_slice %65 {offsets = [1, 0], sizes = [35, 64], strides = [1, 1]} : vector<56x64xf32> to vector<35x64xf32>
    %c1_43 = arith.constant 1 : index
    %c0_44 = arith.constant 0 : index
    %c0_45 = arith.constant 0 : index
    %71 = vector.load %arg6[%c1_43, %c0_44, %c0_45] : memref<9x64x128xf32, #tpu.memory_space<vmem>>, vector<1x64x128xf32>
    %72 = vector.shape_cast %71 : vector<1x64x128xf32> to vector<64x128xf32>
    %cst_46 = arith.constant dense<0.000000e+00> : vector<35x128xf32>
    %73 = tpu.matmul %70, %72, %cst_46 {dimension_numbers = #tpu.dot_dimension_numbers<[1], [0], [0], [1], [0, 0, 1, 1], [], []>} : vector<35x64xf32>, vector<64x128xf32>, vector<35x128xf32> -> vector<35x128xf32>
    %74 = arith.addf %69, %73 : vector<35x128xf32>
    %75 = vector.extract_strided_slice %65 {offsets = [2, 0], sizes = [35, 64], strides = [1, 1]} : vector<56x64xf32> to vector<35x64xf32>
    %c2_47 = arith.constant 2 : index
    %c0_48 = arith.constant 0 : index
    %c0_49 = arith.constant 0 : index
    %76 = vector.load %arg6[%c2_47, %c0_48, %c0_49] : memref<9x64x128xf32, #tpu.memory_space<vmem>>, vector<1x64x128xf32>
    %77 = vector.shape_cast %76 : vector<1x64x128xf32> to vector<64x128xf32>
    %cst_50 = arith.constant dense<0.000000e+00> : vector<35x128xf32>
    %78 = tpu.matmul %75, %77, %cst_50 {dimension_numbers = #tpu.dot_dimension_numbers<[1], [0], [0], [1], [0, 0, 1, 1], [], []>} : vector<35x64xf32>, vector<64x128xf32>, vector<35x128xf32> -> vector<35x128xf32>
    %79 = arith.addf %74, %78 : vector<35x128xf32>
    %80 = vector.extract_strided_slice %65 {offsets = [7, 0], sizes = [35, 64], strides = [1, 1]} : vector<56x64xf32> to vector<35x64xf32>
    %c3_51 = arith.constant 3 : index
    %c0_52 = arith.constant 0 : index
    %c0_53 = arith.constant 0 : index
    %81 = vector.load %arg6[%c3_51, %c0_52, %c0_53] : memref<9x64x128xf32, #tpu.memory_space<vmem>>, vector<1x64x128xf32>
    %82 = vector.shape_cast %81 : vector<1x64x128xf32> to vector<64x128xf32>
    %cst_54 = arith.constant dense<0.000000e+00> : vector<35x128xf32>
    %83 = tpu.matmul %80, %82, %cst_54 {dimension_numbers = #tpu.dot_dimension_numbers<[1], [0], [0], [1], [0, 0, 1, 1], [], []>} : vector<35x64xf32>, vector<64x128xf32>, vector<35x128xf32> -> vector<35x128xf32>
    %84 = arith.addf %79, %83 : vector<35x128xf32>
    %85 = vector.extract_strided_slice %65 {offsets = [8, 0], sizes = [35, 64], strides = [1, 1]} : vector<56x64xf32> to vector<35x64xf32>
    %c4_55 = arith.constant 4 : index
    %c0_56 = arith.constant 0 : index
    %c0_57 = arith.constant 0 : index
    %86 = vector.load %arg6[%c4_55, %c0_56, %c0_57] : memref<9x64x128xf32, #tpu.memory_space<vmem>>, vector<1x64x128xf32>
    %87 = vector.shape_cast %86 : vector<1x64x128xf32> to vector<64x128xf32>
    %cst_58 = arith.constant dense<0.000000e+00> : vector<35x128xf32>
    %88 = tpu.matmul %85, %87, %cst_58 {dimension_numbers = #tpu.dot_dimension_numbers<[1], [0], [0], [1], [0, 0, 1, 1], [], []>} : vector<35x64xf32>, vector<64x128xf32>, vector<35x128xf32> -> vector<35x128xf32>
    %89 = arith.addf %84, %88 : vector<35x128xf32>
    %90 = vector.extract_strided_slice %65 {offsets = [9, 0], sizes = [35, 64], strides = [1, 1]} : vector<56x64xf32> to vector<35x64xf32>
    %c5_59 = arith.constant 5 : index
    %c0_60 = arith.constant 0 : index
    %c0_61 = arith.constant 0 : index
    %91 = vector.load %arg6[%c5_59, %c0_60, %c0_61] : memref<9x64x128xf32, #tpu.memory_space<vmem>>, vector<1x64x128xf32>
    %92 = vector.shape_cast %91 : vector<1x64x128xf32> to vector<64x128xf32>
    %cst_62 = arith.constant dense<0.000000e+00> : vector<35x128xf32>
    %93 = tpu.matmul %90, %92, %cst_62 {dimension_numbers = #tpu.dot_dimension_numbers<[1], [0], [0], [1], [0, 0, 1, 1], [], []>} : vector<35x64xf32>, vector<64x128xf32>, vector<35x128xf32> -> vector<35x128xf32>
    %94 = arith.addf %89, %93 : vector<35x128xf32>
    %95 = vector.extract_strided_slice %65 {offsets = [14, 0], sizes = [35, 64], strides = [1, 1]} : vector<56x64xf32> to vector<35x64xf32>
    %c6_63 = arith.constant 6 : index
    %c0_64 = arith.constant 0 : index
    %c0_65 = arith.constant 0 : index
    %96 = vector.load %arg6[%c6_63, %c0_64, %c0_65] : memref<9x64x128xf32, #tpu.memory_space<vmem>>, vector<1x64x128xf32>
    %97 = vector.shape_cast %96 : vector<1x64x128xf32> to vector<64x128xf32>
    %cst_66 = arith.constant dense<0.000000e+00> : vector<35x128xf32>
    %98 = tpu.matmul %95, %97, %cst_66 {dimension_numbers = #tpu.dot_dimension_numbers<[1], [0], [0], [1], [0, 0, 1, 1], [], []>} : vector<35x64xf32>, vector<64x128xf32>, vector<35x128xf32> -> vector<35x128xf32>
    %99 = arith.addf %94, %98 : vector<35x128xf32>
    %100 = vector.extract_strided_slice %65 {offsets = [15, 0], sizes = [35, 64], strides = [1, 1]} : vector<56x64xf32> to vector<35x64xf32>
    %c7_67 = arith.constant 7 : index
    %c0_68 = arith.constant 0 : index
    %c0_69 = arith.constant 0 : index
    %101 = vector.load %arg6[%c7_67, %c0_68, %c0_69] : memref<9x64x128xf32, #tpu.memory_space<vmem>>, vector<1x64x128xf32>
    %102 = vector.shape_cast %101 : vector<1x64x128xf32> to vector<64x128xf32>
    %cst_70 = arith.constant dense<0.000000e+00> : vector<35x128xf32>
    %103 = tpu.matmul %100, %102, %cst_70 {dimension_numbers = #tpu.dot_dimension_numbers<[1], [0], [0], [1], [0, 0, 1, 1], [], []>} : vector<35x64xf32>, vector<64x128xf32>, vector<35x128xf32> -> vector<35x128xf32>
    %104 = arith.addf %99, %103 : vector<35x128xf32>
    %105 = vector.extract_strided_slice %65 {offsets = [16, 0], sizes = [35, 64], strides = [1, 1]} : vector<56x64xf32> to vector<35x64xf32>
    %c8_71 = arith.constant 8 : index
    %c0_72 = arith.constant 0 : index
    %c0_73 = arith.constant 0 : index
    %106 = vector.load %arg6[%c8_71, %c0_72, %c0_73] : memref<9x64x128xf32, #tpu.memory_space<vmem>>, vector<1x64x128xf32>
    %107 = vector.shape_cast %106 : vector<1x64x128xf32> to vector<64x128xf32>
    %cst_74 = arith.constant dense<0.000000e+00> : vector<35x128xf32>
    %108 = tpu.matmul %105, %107, %cst_74 {dimension_numbers = #tpu.dot_dimension_numbers<[1], [0], [0], [1], [0, 0, 1, 1], [], []>} : vector<35x64xf32>, vector<64x128xf32>, vector<35x128xf32> -> vector<35x128xf32>
    %109 = arith.addf %104, %108 : vector<35x128xf32>
    %c0_75 = arith.constant 0 : index
    %c0_76 = arith.constant 0 : index
    %110 = vector.load %arg7[%c0_75, %c0_76] : memref<1x128xf32, #tpu.memory_space<vmem>>, vector<1x128xf32>
    %111 = vector.broadcast %110 : vector<1x128xf32> to vector<35x128xf32>
    %112 = arith.addf %109, %111 : vector<35x128xf32>
    %cst_77 = arith.constant 0.000000e+00 : f32
    %113 = vector.broadcast %cst_77 : f32 to vector<35x128xf32>
    %114 = arith.cmpf ogt, %112, %113 : vector<35x128xf32>
    %115 = vector.broadcast %1 : f32 to vector<35x128xf32>
    %116 = arith.mulf %115, %112 : vector<35x128xf32>
    %117 = arith.select %114, %112, %116 : vector<35x128xi1>, vector<35x128xf32>
    %118 = vector.extract_strided_slice %117 {offsets = [0, 0], sizes = [28, 128], strides = [1, 1]} : vector<35x128xf32> to vector<28x128xf32>
    %119 = vector.extract_strided_slice %117 {offsets = [7, 0], sizes = [28, 128], strides = [1, 1]} : vector<35x128xf32> to vector<28x128xf32>
    %120 = arith.maximumf %118, %119 : vector<28x128xf32>
    %121 = vector.extract_strided_slice %120 {offsets = [0, 0], sizes = [27, 128], strides = [1, 1]} : vector<28x128xf32> to vector<27x128xf32>
    %122 = vector.extract_strided_slice %120 {offsets = [1, 0], sizes = [27, 128], strides = [1, 1]} : vector<28x128xf32> to vector<27x128xf32>
    %123 = arith.maximumf %121, %122 : vector<27x128xf32>
    %c0_78 = arith.constant 0 : index
    %c0_79 = arith.constant 0 : index
    %124 = vector.load %arg8[%c0_78, %c0_79] : memref<4x27xf32, #tpu.memory_space<vmem>>, vector<4x27xf32>
    %cst_80 = arith.constant dense<0.000000e+00> : vector<4x128xf32>
    %125 = tpu.matmul %124, %123, %cst_80 {dimension_numbers = #tpu.dot_dimension_numbers<[1], [0], [0], [1], [0, 0, 1, 1], [], []>} : vector<4x27xf32>, vector<27x128xf32>, vector<4x128xf32> -> vector<4x128xf32>
    %c0_81 = arith.constant 0 : index
    %c0_82 = arith.constant 0 : index
    %126 = vector.load %arg10[%c0_81, %c0_82] : memref<1x32xf32, #tpu.memory_space<vmem>>, vector<1x32xf32>
    %127 = vector.extract_strided_slice %125 {offsets = [0, 0], sizes = [1, 128], strides = [1, 1]} : vector<4x128xf32> to vector<1x128xf32>
    %c0_83 = arith.constant 0 : index
    %c0_84 = arith.constant 0 : index
    %c0_85 = arith.constant 0 : index
    %128 = vector.load %arg9[%c0_83, %c0_84, %c0_85] : memref<4x128x32xf32, #tpu.memory_space<vmem>>, vector<1x128x32xf32>
    %129 = vector.shape_cast %128 : vector<1x128x32xf32> to vector<128x32xf32>
    %cst_86 = arith.constant dense<0.000000e+00> : vector<1x32xf32>
    %130 = tpu.matmul %127, %129, %cst_86 {dimension_numbers = #tpu.dot_dimension_numbers<[1], [0], [0], [1], [0, 0, 1, 1], [], []>} : vector<1x128xf32>, vector<128x32xf32>, vector<1x32xf32> -> vector<1x32xf32>
    %131 = arith.addf %126, %130 : vector<1x32xf32>
    %132 = vector.extract_strided_slice %125 {offsets = [1, 0], sizes = [1, 128], strides = [1, 1]} : vector<4x128xf32> to vector<1x128xf32>
    %c1_87 = arith.constant 1 : index
    %c0_88 = arith.constant 0 : index
    %c0_89 = arith.constant 0 : index
    %133 = vector.load %arg9[%c1_87, %c0_88, %c0_89] : memref<4x128x32xf32, #tpu.memory_space<vmem>>, vector<1x128x32xf32>
    %134 = vector.shape_cast %133 : vector<1x128x32xf32> to vector<128x32xf32>
    %cst_90 = arith.constant dense<0.000000e+00> : vector<1x32xf32>
    %135 = tpu.matmul %132, %134, %cst_90 {dimension_numbers = #tpu.dot_dimension_numbers<[1], [0], [0], [1], [0, 0, 1, 1], [], []>} : vector<1x128xf32>, vector<128x32xf32>, vector<1x32xf32> -> vector<1x32xf32>
    %136 = arith.addf %131, %135 : vector<1x32xf32>
    %137 = vector.extract_strided_slice %125 {offsets = [2, 0], sizes = [1, 128], strides = [1, 1]} : vector<4x128xf32> to vector<1x128xf32>
    %c2_91 = arith.constant 2 : index
    %c0_92 = arith.constant 0 : index
    %c0_93 = arith.constant 0 : index
    %138 = vector.load %arg9[%c2_91, %c0_92, %c0_93] : memref<4x128x32xf32, #tpu.memory_space<vmem>>, vector<1x128x32xf32>
    %139 = vector.shape_cast %138 : vector<1x128x32xf32> to vector<128x32xf32>
    %cst_94 = arith.constant dense<0.000000e+00> : vector<1x32xf32>
    %140 = tpu.matmul %137, %139, %cst_94 {dimension_numbers = #tpu.dot_dimension_numbers<[1], [0], [0], [1], [0, 0, 1, 1], [], []>} : vector<1x128xf32>, vector<128x32xf32>, vector<1x32xf32> -> vector<1x32xf32>
    %141 = arith.addf %136, %140 : vector<1x32xf32>
    %142 = vector.extract_strided_slice %125 {offsets = [3, 0], sizes = [1, 128], strides = [1, 1]} : vector<4x128xf32> to vector<1x128xf32>
    %c3_95 = arith.constant 3 : index
    %c0_96 = arith.constant 0 : index
    %c0_97 = arith.constant 0 : index
    %143 = vector.load %arg9[%c3_95, %c0_96, %c0_97] : memref<4x128x32xf32, #tpu.memory_space<vmem>>, vector<1x128x32xf32>
    %144 = vector.shape_cast %143 : vector<1x128x32xf32> to vector<128x32xf32>
    %cst_98 = arith.constant dense<0.000000e+00> : vector<1x32xf32>
    %145 = tpu.matmul %142, %144, %cst_98 {dimension_numbers = #tpu.dot_dimension_numbers<[1], [0], [0], [1], [0, 0, 1, 1], [], []>} : vector<1x128xf32>, vector<128x32xf32>, vector<1x32xf32> -> vector<1x32xf32>
    %146 = arith.addf %141, %145 : vector<1x32xf32>
    %cst_99 = arith.constant 0.000000e+00 : f32
    %147 = vector.broadcast %cst_99 : f32 to vector<1x32xf32>
    %148 = arith.cmpf ogt, %146, %147 : vector<1x32xf32>
    %149 = vector.broadcast %2 : f32 to vector<1x32xf32>
    %150 = arith.mulf %149, %146 : vector<1x32xf32>
    %151 = arith.select %148, %146, %150 : vector<1x32xi1>, vector<1x32xf32>
    %c0_100 = arith.constant 0 : index
    %c0_101 = arith.constant 0 : index
    %152 = vector.load %arg11[%c0_100, %c0_101] : memref<32x32xf32, #tpu.memory_space<vmem>>, vector<32x32xf32>
    %cst_102 = arith.constant dense<0.000000e+00> : vector<1x32xf32>
    %153 = tpu.matmul %151, %152, %cst_102 {dimension_numbers = #tpu.dot_dimension_numbers<[1], [0], [0], [1], [0, 0, 1, 1], [], []>} : vector<1x32xf32>, vector<32x32xf32>, vector<1x32xf32> -> vector<1x32xf32>
    %c0_103 = arith.constant 0 : index
    %c0_104 = arith.constant 0 : index
    %154 = vector.load %arg12[%c0_103, %c0_104] : memref<1x32xf32, #tpu.memory_space<vmem>>, vector<1x32xf32>
    %155 = arith.addf %153, %154 : vector<1x32xf32>
    %cst_105 = arith.constant 0.000000e+00 : f32
    %156 = vector.broadcast %cst_105 : f32 to vector<1x32xf32>
    %157 = arith.cmpf ogt, %155, %156 : vector<1x32xf32>
    %158 = vector.broadcast %3 : f32 to vector<1x32xf32>
    %159 = arith.mulf %158, %155 : vector<1x32xf32>
    %160 = arith.select %157, %155, %159 : vector<1x32xi1>, vector<1x32xf32>
    %c0_106 = arith.constant 0 : index
    %c0_107 = arith.constant 0 : index
    %c0_108 = arith.constant 0 : index
    %161 = vector.load %arg13[%c0_106, %c0_107, %c0_108] : memref<1x1x32xf32, #tpu.memory_space<vmem>>, vector<1x1x32xf32>
    %162 = vector.shape_cast %161 : vector<1x1x32xf32> to vector<1x32xf32>
    %163 = vector.shape_cast %160 : vector<1x32xf32> to vector<1x1x32xf32>
    tpu.vector_store %arg13[%c0_106, %c0_107, %c0_108], %163 {strides = array<i32>} : memref<1x1x32xf32, #tpu.memory_space<vmem>>, vector<1x1x32xf32>,
    return
  }
  func.func @transform_0(%arg0: i32) -> i32 {
    %c0_i32 = arith.constant 0 : i32
    %c0_i32_0 = arith.constant 0 : i32
    return %c0_i32 : i32
  }
  func.func @transform_1(%arg0: i32) -> (i32, i32, i32) {
    %c0_i32 = arith.constant 0 : i32
    %c0_i32_0 = arith.constant 0 : i32
    %c0_i32_1 = arith.constant 0 : i32
    return %arg0, %c0_i32, %c0_i32_0 : i32, i32, i32
  }
  func.func @transform_2(%arg0: i32) -> (i32, i32, i32) {
    %c0_i32 = arith.constant 0 : i32
    %c0_i32_0 = arith.constant 0 : i32
    %c0_i32_1 = arith.constant 0 : i32
    %c0_i32_2 = arith.constant 0 : i32
    return %c0_i32, %c0_i32_0, %c0_i32_1 : i32, i32, i32
  }
  func.func @transform_3(%arg0: i32) -> (i32, i32) {
    %c0_i32 = arith.constant 0 : i32
    %c0_i32_0 = arith.constant 0 : i32
    %c0_i32_1 = arith.constant 0 : i32
    return %c0_i32, %c0_i32_0 : i32, i32
  }
  func.func @transform_4(%arg0: i32) -> (i32, i32) {
    %c0_i32 = arith.constant 0 : i32
    %c0_i32_0 = arith.constant 0 : i32
    %c0_i32_1 = arith.constant 0 : i32
    return %c0_i32, %c0_i32_0 : i32, i32
  }
  func.func @transform_5(%arg0: i32) -> (i32, i32, i32) {
    %c0_i32 = arith.constant 0 : i32
    %c0_i32_0 = arith.constant 0 : i32
    %c0_i32_1 = arith.constant 0 : i32
    %c0_i32_2 = arith.constant 0 : i32
    return %c0_i32, %c0_i32_0, %c0_i32_1 : i32, i32, i32
  }
  func.func @transform_6(%arg0: i32) -> (i32, i32) {
    %c0_i32 = arith.constant 0 : i32
    %c0_i32_0 = arith.constant 0 : i32
    %c0_i32_1 = arith.constant 0 : i32
    return %c0_i32, %c0_i32_0 : i32, i32
  }
  func.func @transform_7(%arg0: i32) -> (i32, i32) {
    %c0_i32 = arith.constant 0 : i32
    %c0_i32_0 = arith.constant 0 : i32
    %c0_i32_1 = arith.constant 0 : i32
    return %c0_i32, %c0_i32_0 : i32, i32
  }
  func.func @transform_8(%arg0: i32) -> (i32, i32, i32) {
    %c0_i32 = arith.constant 0 : i32
    %c0_i32_0 = arith.constant 0 : i32
    %c0_i32_1 = arith.constant 0 : i32
    %c0_i32_2 = arith.constant 0 : i32
    return %c0_i32, %c0_i32_0, %c0_i32_1 : i32, i32, i32
  }
  func.func @transform_9(%arg0: i32) -> (i32, i32) {
    %c0_i32 = arith.constant 0 : i32
    %c0_i32_0 = arith.constant 0 : i32
    %c0_i32_1 = arith.constant 0 : i32
    return %c0_i32, %c0_i32_0 : i32, i32
  }
  func.func @transform_10(%arg0: i32) -> (i32, i32) {
    %c0_i32 = arith.constant 0 : i32
    %c0_i32_0 = arith.constant 0 : i32
    %c0_i32_1 = arith.constant 0 : i32
    return %c0_i32, %c0_i32_0 : i32, i32
  }
  func.func @transform_11(%arg0: i32) -> (i32, i32) {
    %c0_i32 = arith.constant 0 : i32
    %c0_i32_0 = arith.constant 0 : i32
    %c0_i32_1 = arith.constant 0 : i32
    return %c0_i32, %c0_i32_0 : i32, i32
  }
  func.func @transform_12(%arg0: i32) -> (i32, i32, i32) {
    %c0_i32 = arith.constant 0 : i32
    %c0_i32_0 = arith.constant 0 : i32
    %c0_i32_1 = arith.constant 0 : i32
    return %arg0, %c0_i32, %c0_i32_0 : i32, i32, i32
  }
}

</mosaic_0001>

<llo_original>
// kernel: featurizer_forward.1
$region0: #{featurizer_forward.1}
  #allocation0 [shape = 'u32[]', space=smem, size = 0x4, offset = 0x4, fixed_abs, tag = 'smem constant byte address 0x4 - core index']
  #allocation1 [shape = 'u32[144,128]{1,0:T(1,128)}', space=vmem, size = 0x12000, scoped, tag = 'internal scratch']
  %s0 = inlined_call_operand.vmem [shape: f32[4], index: 0, kind: input, shape index: {}]
  %s1 = inlined_call_operand.vmem [shape: f32[2,264,4], index: 1, kind: input, shape index: {}]
  %s2 = inlined_call_operand.vmem [shape: f32[9,4,64], index: 2, kind: input, shape index: {}]
  %s3 = inlined_call_operand.vmem [shape: f32[1,64], index: 3, kind: input, shape index: {}]
  %s4 = inlined_call_operand.vmem [shape: f32[56,207], index: 4, kind: input, shape index: {}]
  %s5 = inlined_call_operand.vmem [shape: f32[9,64,128], index: 5, kind: input, shape index: {}]
  %s6 = inlined_call_operand.vmem [shape: f32[1,128], index: 6, kind: input, shape index: {}]
  %s7 = inlined_call_operand.vmem [shape: f32[4,27], index: 7, kind: input, shape index: {}]
  %s8 = inlined_call_operand.vmem [shape: f32[4,128,32], index: 8, kind: input, shape index: {}]
  %s9 = inlined_call_operand.vmem [shape: f32[1,32], index: 9, kind: input, shape index: {}]
  %s10 = inlined_call_operand.vmem [shape: f32[32,32], index: 10, kind: input, shape index: {}]
  %s11 = inlined_call_operand.vmem [shape: f32[1,32], index: 11, kind: input, shape index: {}]
  %s12 = inlined_call_operand.hbm [shape: f32[2,1,32], index: 12, kind: output, shape index: {}]
  %s13 = sld [smem:[#allocation0]]
  $region85: #{featurizer_forward.1} parent=0
    _
  %s15 = ssub.s32 1, %s13
  %s16 = scalar_select 0, %s15, %s13
  $region1: #{featurizer_forward.1} parent=0
    #allocation2 [shape = 'u8[512]{0}', space=smem, size = 0x200, scoped, tag = 'input window, operand 0, single buffered']
    #allocation3 [shape = 's32[2]{0}', space=sflag, size = 0x8, scoped, tag = 'scoped memory for featurizer_forward.1']
    #allocation4 [shape = 's32[2]{0}', space=sflag, size = 0x8, scoped, tag = 'scoped memory for featurizer_forward.1']
    #allocation5 [shape = 'u8[1024]{0}', space=vmem, size = 0x400, scoped, tag = 'output window, operand 0']
    %17 = vsyncpa [#allocation4], 0
    %18 = vsyncpa [#allocation3], 0
    %s19 = scalar_lea.sflag [#allocation3], 1
    %20 = vsyncpa %s19, 0
    loop: start=0, step=1, limit=4
    $region2: #{featurizer_forward.1} parent=1 // loop_pre_header
      _
    $region3: #{featurizer_forward.1} parent=1 // loop_header
      %s22 = sphi 0, %s26
      %p23 = scmp.ge.s32.totalorder %s22, 4
      %s30 = sphi 0, %s30
      %s32 = sphi 0, %s30
      %s33 = sphi 0, %s32
      %s47 = sphi 0, %s33
      %s53 = sphi 0, %s55
      %s56 = sphi 0, %s53
      %s57 = sphi 0, %s56
      %s73 = sphi 0, %s57
      %s77 = sphi 0, %s77
      %s79 = sphi 0, %s77
      %s80 = sphi 0, %s79
      %s94 = sphi 0, %s80
      %s98 = sphi 0, %s98
      %s100 = sphi 0, %s98
      %s101 = sphi 0, %s100
      %s115 = sphi 0, %s101
      %s119 = sphi 0, %s119
      %s121 = sphi 0, %s119
      %s122 = sphi 0, %s121
      %s136 = sphi 0, %s122
      %s140 = sphi 0, %s140
      %s142 = sphi 0, %s140
      %s143 = sphi 0, %s142
      %s157 = sphi 0, %s143
      %s161 = sphi 0, %s161
      %s163 = sphi 0, %s161
      %s164 = sphi 0, %s163
      %s178 = sphi 0, %s164
      %s182 = sphi 0, %s182
      %s184 = sphi 0, %s182
      %s185 = sphi 0, %s184
      %s199 = sphi 0, %s185
      %s203 = sphi 0, %s203
      %s205 = sphi 0, %s203
      %s206 = sphi 0, %s205
      %s220 = sphi 0, %s206
      %s224 = sphi 0, %s224
      %s226 = sphi 0, %s224
      %s227 = sphi 0, %s226
      %s241 = sphi 0, %s227
      %s245 = sphi 0, %s245
      %s247 = sphi 0, %s245
      %s248 = sphi 0, %s247
      %s262 = sphi 0, %s248
      %s266 = sphi 0, %s266
      %s268 = sphi 0, %s266
      %s269 = sphi 0, %s268
      %s283 = sphi 0, %s269
      %s289 = sphi 0, %s291
      %s292 = sphi 0, %s289
      %s293 = sphi 0, %s292
      %s309 = sphi 0, %s293
    $region4: #{featurizer_forward.1} parent=1 // loop_header_branch
      %25 = sbr.rel (%p23) target = $region8
    $region5: #{featurizer_forward.1} parent=1 // loop_body
      %s27 = ssub.s32 %s22, 1
      %s28 = ssub.s32 %s22, 2
      %s29 = sadd.s32 %s22, 1
      %s31 = sadd.s32 %s30, 1
      %p34 = scmp.eq.s32.totalorder %s22, 1
      %p35 = scmp.ne.s32.totalorder %s30, %s32
      %p36 = scmp.eq.s32.totalorder %s22, 0
      %p37 = por %p35, %p36
      %p38 = scmp.ne.s32.totalorder %s30, %s32
      %p39 = scmp.eq.s32.totalorder %s27, 1
      %p40 = por %p38, %p39
      %p41 = scmp.ne.s32.totalorder %s32, %s33
      %p42 = scmp.eq.s32.totalorder %s27, 0
      %p43 = por %p41, %p42
      %p44 = scmp.ne.s32.totalorder %s32, %s33
      %p45 = scmp.eq.s32.totalorder %s28, 1
      %p46 = por %p44, %p45
      %p48 = scmp.ne.s32.totalorder %s33, %s47
      %p49 = scmp.eq.s32.totalorder %s28, 0
      %p50 = por %p48, %p49
      %s51 = ssub.s32 %s22, %s29
      %p52 = scmp.eq.s32.totalorder %s51, 0
      %s54 = sadd.s32 %s53, 1
      %s55 = scalar_select %p52, %s53, %s54
      %p58 = pneg %p52
      %p59 = scmp.eq.s32.totalorder %s22, 1
      %p60 = por %p58, %p59
      %p61 = scmp.ne.s32.totalorder %s53, %s56
      %p62 = scmp.eq.s32.totalorder %s22, 0
      %p63 = por %p61, %p62
      %p64 = scmp.ne.s32.totalorder %s53, %s56
      %p65 = scmp.eq.s32.totalorder %s27, 1
      %p66 = por %p64, %p65
      %p67 = scmp.ne.s32.totalorder %s56, %s57
      %p68 = scmp.eq.s32.totalorder %s27, 0
      %p69 = por %p67, %p68
      %p70 = scmp.ne.s32.totalorder %s56, %s57
      %p71 = scmp.eq.s32.totalorder %s28, 1
      %p72 = por %p70, %p71
      %p74 = scmp.ne.s32.totalorder %s57, %s73
      %p75 = scmp.eq.s32.totalorder %s28, 0
      %p76 = por %p74, %p75
      %s78 = sadd.s32 %s77, 1
      %p81 = scmp.eq.s32.totalorder %s22, 1
      %p82 = scmp.ne.s32.totalorder %s77, %s79
      %p83 = scmp.eq.s32.totalorder %s22, 0
      %p84 = por %p82, %p83
      %p85 = scmp.ne.s32.totalorder %s77, %s79
      %p86 = scmp.eq.s32.totalorder %s27, 1
      %p87 = por %p85, %p86
      %p88 = scmp.ne.s32.totalorder %s79, %s80
      %p89 = scmp.eq.s32.totalorder %s27, 0
      %p90 = por %p88, %p89
      %p91 = scmp.ne.s32.totalorder %s79, %s80
      %p92 = scmp.eq.s32.totalorder %s28, 1
      %p93 = por %p91, %p92
      %p95 = scmp.ne.s32.totalorder %s80, %s94
      %p96 = scmp.eq.s32.totalorder %s28, 0
      %p97 = por %p95, %p96
      %s99 = sadd.s32 %s98, 1
      %p102 = scmp.eq.s32.totalorder %s22, 1
      %p103 = scmp.ne.s32.totalorder %s98, %s100
      %p104 = scmp.eq.s32.totalorder %s22, 0
      %p105 = por %p103, %p104
      %p106 = scmp.ne.s32.totalorder %s98, %s100
      %p107 = scmp.eq.s32.totalorder %s27, 1
      %p108 = por %p106, %p107
      %p109 = scmp.ne.s32.totalorder %s100, %s101
      %p110 = scmp.eq.s32.totalorder %s27, 0
      %p111 = por %p109, %p110
      %p112 = scmp.ne.s32.totalorder %s100, %s101
      %p113 = scmp.eq.s32.totalorder %s28, 1
      %p114 = por %p112, %p113
      %p116 = scmp.ne.s32.totalorder %s101, %s115
      %p117 = scmp.eq.s32.totalorder %s28, 0
      %p118 = por %p116, %p117
      %s120 = sadd.s32 %s119, 1
      %p123 = scmp.eq.s32.totalorder %s22, 1
      %p124 = scmp.ne.s32.totalorder %s119, %s121
      %p125 = scmp.eq.s32.totalorder %s22, 0
      %p126 = por %p124, %p125
      %p127 = scmp.ne.s32.totalorder %s119, %s121
      %p128 = scmp.eq.s32.totalorder %s27, 1
      %p129 = por %p127, %p128
      %p130 = scmp.ne.s32.totalorder %s121, %s122
      %p131 = scmp.eq.s32.totalorder %s27, 0
      %p132 = por %p130, %p131
      %p133 = scmp.ne.s32.totalorder %s121, %s122
      %p134 = scmp.eq.s32.totalorder %s28, 1
      %p135 = por %p133, %p134
      %p137 = scmp.ne.s32.totalorder %s122, %s136
      %p138 = scmp.eq.s32.totalorder %s28, 0
      %p139 = por %p137, %p138
      %s141 = sadd.s32 %s140, 1
      %p144 = scmp.eq.s32.totalorder %s22, 1
      %p145 = scmp.ne.s32.totalorder %s140, %s142
      %p146 = scmp.eq.s32.totalorder %s22, 0
      %p147 = por %p145, %p146
      %p148 = scmp.ne.s32.totalorder %s140, %s142
      %p149 = scmp.eq.s32.totalorder %s27, 1
      %p150 = por %p148, %p149
      %p151 = scmp.ne.s32.totalorder %s142, %s143
      %p152 = scmp.eq.s32.totalorder %s27, 0
      %p153 = por %p151, %p152
      %p154 = scmp.ne.s32.totalorder %s142, %s143
      %p155 = scmp.eq.s32.totalorder %s28, 1
      %p156 = por %p154, %p155
      %p158 = scmp.ne.s32.totalorder %s143, %s157
      %p159 = scmp.eq.s32.totalorder %s28, 0
      %p160 = por %p158, %p159
      %s162 = sadd.s32 %s161, 1
      %p165 = scmp.eq.s32.totalorder %s22, 1
      %p166 = scmp.ne.s32.totalorder %s161, %s163
      %p167 = scmp.eq.s32.totalorder %s22, 0
      %p168 = por %p166, %p167
      %p169 = scmp.ne.s32.totalorder %s161, %s163
      %p170 = scmp.eq.s32.totalorder %s27, 1
      %p171 = por %p169, %p170
      %p172 = scmp.ne.s32.totalorder %s163, %s164
      %p173 = scmp.eq.s32.totalorder %s27, 0
      %p174 = por %p172, %p173
      %p175 = scmp.ne.s32.totalorder %s163, %s164
      %p176 = scmp.eq.s32.totalorder %s28, 1
      %p177 = por %p175, %p176
      %p179 = scmp.ne.s32.totalorder %s164, %s178
      %p180 = scmp.eq.s32.totalorder %s28, 0
      %p181 = por %p179, %p180
      %s183 = sadd.s32 %s182, 1
      %p186 = scmp.eq.s32.totalorder %s22, 1
      %p187 = scmp.ne.s32.totalorder %s182, %s184
      %p188 = scmp.eq.s32.totalorder %s22, 0
      %p189 = por %p187, %p188
      %p190 = scmp.ne.s32.totalorder %s182, %s184
      %p191 = scmp.eq.s32.totalorder %s27, 1
      %p192 = por %p190, %p191
      %p193 = scmp.ne.s32.totalorder %s184, %s185
      %p194 = scmp.eq.s32.totalorder %s27, 0
      %p195 = por %p193, %p194
      %p196 = scmp.ne.s32.totalorder %s184, %s185
      %p197 = scmp.eq.s32.totalorder %s28, 1
      %p198 = por %p196, %p197
      %p200 = scmp.ne.s32.totalorder %s185, %s199
      %p201 = scmp.eq.s32.totalorder %s28, 0
      %p202 = por %p200, %p201
      %s204 = sadd.s32 %s203, 1
      %p207 = scmp.eq.s32.totalorder %s22, 1
      %p208 = scmp.ne.s32.totalorder %s203, %s205
      %p209 = scmp.eq.s32.totalorder %s22, 0
      %p210 = por %p208, %p209
      %p211 = scmp.ne.s32.totalorder %s203, %s205
      %p212 = scmp.eq.s32.totalorder %s27, 1
      %p213 = por %p211, %p212
      %p214 = scmp.ne.s32.totalorder %s205, %s206
      %p215 = scmp.eq.s32.totalorder %s27, 0
      %p216 = por %p214, %p215
      %p217 = scmp.ne.s32.totalorder %s205, %s206
      %p218 = scmp.eq.s32.totalorder %s28, 1
      %p219 = por %p217, %p218
      %p221 = scmp.ne.s32.totalorder %s206, %s220
      %p222 = scmp.eq.s32.totalorder %s28, 0
      %p223 = por %p221, %p222
      %s225 = sadd.s32 %s224, 1
      %p228 = scmp.eq.s32.totalorder %s22, 1
      %p229 = scmp.ne.s32.totalorder %s224, %s226
      %p230 = scmp.eq.s32.totalorder %s22, 0
      %p231 = por %p229, %p230
      %p232 = scmp.ne.s32.totalorder %s224, %s226
      %p233 = scmp.eq.s32.totalorder %s27, 1
      %p234 = por %p232, %p233
      %p235 = scmp.ne.s32.totalorder %s226, %s227
      %p236 = scmp.eq.s32.totalorder %s27, 0
      %p237 = por %p235, %p236
      %p238 = scmp.ne.s32.totalorder %s226, %s227
      %p239 = scmp.eq.s32.totalorder %s28, 1
      %p240 = por %p238, %p239
      %p242 = scmp.ne.s32.totalorder %s227, %s241
      %p243 = scmp.eq.s32.totalorder %s28, 0
      %p244 = por %p242, %p243
      %s246 = sadd.s32 %s245, 1
      %p249 = scmp.eq.s32.totalorder %s22, 1
      %p250 = scmp.ne.s32.totalorder %s245, %s247
      %p251 = scmp.eq.s32.totalorder %s22, 0
      %p252 = por %p250, %p251
      %p253 = scmp.ne.s32.totalorder %s245, %s247
      %p254 = scmp.eq.s32.totalorder %s27, 1
      %p255 = por %p253, %p254
      %p256 = scmp.ne.s32.totalorder %s247, %s248
      %p257 = scmp.eq.s32.totalorder %s27, 0
      %p258 = por %p256, %p257
      %p259 = scmp.ne.s32.totalorder %s247, %s248
      %p260 = scmp.eq.s32.totalorder %s28, 1
      %p261 = por %p259, %p260
      %p263 = scmp.ne.s32.totalorder %s248, %s262
      %p264 = scmp.eq.s32.totalorder %s28, 0
      %p265 = por %p263, %p264
      %s267 = sadd.s32 %s266, 1
      %p270 = scmp.eq.s32.totalorder %s22, 1
      %p271 = scmp.ne.s32.totalorder %s266, %s268
      %p272 = scmp.eq.s32.totalorder %s22, 0
      %p273 = por %p271, %p272
      %p274 = scmp.ne.s32.totalorder %s266, %s268
      %p275 = scmp.eq.s32.totalorder %s27, 1
      %p276 = por %p274, %p275
      %p277 = scmp.ne.s32.totalorder %s268, %s269
      %p278 = scmp.eq.s32.totalorder %s27, 0
      %p279 = por %p277, %p278
      %p280 = scmp.ne.s32.totalorder %s268, %s269
      %p281 = scmp.eq.s32.totalorder %s28, 1
      %p282 = por %p280, %p281
      %p284 = scmp.ne.s32.totalorder %s269, %s283
      %p285 = scmp.eq.s32.totalorder %s28, 0
      %p286 = por %p284, %p285
      %s287 = ssub.s32 %s22, %s29
      %p288 = scmp.eq.s32.totalorder %s287, 0
      %s290 = sadd.s32 %s289, 1
      %s291 = scalar_select %p288, %s289, %s290
      %p294 = pneg %p288
      %p295 = scmp.eq.s32.totalorder %s22, 1
      %p296 = por %p294, %p295
      %p297 = scmp.ne.s32.totalorder %s289, %s292
      %p298 = scmp.eq.s32.totalorder %s22, 0
      %p299 = por %p297, %p298
      %p300 = scmp.ne.s32.totalorder %s289, %s292
      %p301 = scmp.eq.s32.totalorder %s27, 1
      %p302 = por %p300, %p301
      %p303 = scmp.ne.s32.totalorder %s292, %s293
      %p304 = scmp.eq.s32.totalorder %s27, 0
      %p305 = por %p303, %p304
      %p306 = scmp.ne.s32.totalorder %s292, %s293
      %p307 = scmp.eq.s32.totalorder %s28, 1
      %p308 = por %p306, %p307
      %p310 = scmp.ne.s32.totalorder %s293, %s309
      %p311 = scmp.eq.s32.totalorder %s28, 0
      %p312 = por %p310, %p311
      %p313 = scmp.le.s32.totalorder 1, %s22
      %p314 = scmp.lt.s32.totalorder %s22, 3
      %p315 = pnand %p313, %p314
      %p316 = pneg %p315
      // Predicated region
      $region9: #{featurizer_forward.1} parent=5 // pred_check
        _
      $region10: #{featurizer_forward.1} parent=5 // pred_check_branch
        %318 = sbr.rel (%p315) target = $region12
      $region11: #{featurizer_forward.1} parent=5 // pred_region
        %s319 = ssub.s32 %s22, 1
        // Predicated region
        $region13: #{featurizer_forward.1} parent=11 // pred_check
          %p320 = pneg %p43
        $region14: #{featurizer_forward.1} parent=11 // pred_check_branch
          %322 = sbr.rel (%p320) target = $region16
        $region15: #{featurizer_forward.1} parent=11 // pred_region
          %s324 = ssub.s32 16, 16
          %325 = vsyncadd [#allocation4], %s324
          %s327 = sshll.u32 %s0, 4
          %s328 = int_to_ptr.vmem [resolvable:$true] %s327
          %330 = dma.vmem_to_smem %s328, 16, [#allocation2], [#allocation4]
        $region16: #{featurizer_forward.1} parent=11 // pred_fallthru
          _
        // Predicated region
        $region17: #{featurizer_forward.1} parent=11 // pred_check
          %p331 = pneg %p90
        $region18: #{featurizer_forward.1} parent=11 // pred_check_branch
          %333 = sbr.rel (%p331) target = $region20
        $region19: #{featurizer_forward.1} parent=11 // pred_region
          _
        $region20: #{featurizer_forward.1} parent=11 // pred_fallthru
          _
        // Predicated region
        $region21: #{featurizer_forward.1} parent=11 // pred_check
          %p334 = pneg %p111
        $region22: #{featurizer_forward.1} parent=11 // pred_check_branch
          %336 = sbr.rel (%p334) target = $region24
        $region23: #{featurizer_forward.1} parent=11 // pred_region
          _
        $region24: #{featurizer_forward.1} parent=11 // pred_fallthru
          _
        // Predicated region
        $region25: #{featurizer_forward.1} parent=11 // pred_check
          %p337 = pneg %p132
        $region26: #{featurizer_forward.1} parent=11 // pred_check_branch
          %339 = sbr.rel (%p337) target = $region28
        $region27: #{featurizer_forward.1} parent=11 // pred_region
          _
        $region28: #{featurizer_forward.1} parent=11 // pred_fallthru
          _
        // Predicated region
        $region29: #{featurizer_forward.1} parent=11 // pred_check
          %p340 = pneg %p153
        $region30: #{featurizer_forward.1} parent=11 // pred_check_branch
          %342 = sbr.rel (%p340) target = $region32
        $region31: #{featurizer_forward.1} parent=11 // pred_region
          _
        $region32: #{featurizer_forward.1} parent=11 // pred_fallthru
          _
        // Predicated region
        $region33: #{featurizer_forward.1} parent=11 // pred_check
          %p343 = pneg %p174
        $region34: #{featurizer_forward.1} parent=11 // pred_check_branch
          %345 = sbr.rel (%p343) target = $region36
        $region35: #{featurizer_forward.1} parent=11 // pred_region
          _
        $region36: #{featurizer_forward.1} parent=11 // pred_fallthru
          _
        // Predicated region
        $region37: #{featurizer_forward.1} parent=11 // pred_check
          %p346 = pneg %p195
        $region38: #{featurizer_forward.1} parent=11 // pred_check_branch
          %348 = sbr.rel (%p346) target = $region40
        $region39: #{featurizer_forward.1} parent=11 // pred_region
          _
        $region40: #{featurizer_forward.1} parent=11 // pred_fallthru
          _
        // Predicated region
        $region41: #{featurizer_forward.1} parent=11 // pred_check
          %p349 = pneg %p216
        $region42: #{featurizer_forward.1} parent=11 // pred_check_branch
          %351 = sbr.rel (%p349) target = $region44
        $region43: #{featurizer_forward.1} parent=11 // pred_region
          _
        $region44: #{featurizer_forward.1} parent=11 // pred_fallthru
          _
        // Predicated region
        $region45: #{featurizer_forward.1} parent=11 // pred_check
          %p352 = pneg %p237
        $region46: #{featurizer_forward.1} parent=11 // pred_check_branch
          %354 = sbr.rel (%p352) target = $region48
        $region47: #{featurizer_forward.1} parent=11 // pred_region
          _
        $region48: #{featurizer_forward.1} parent=11 // pred_fallthru
          _
        // Predicated region
        $region49: #{featurizer_forward.1} parent=11 // pred_check
          %p355 = pneg %p258
        $region50: #{featurizer_forward.1} parent=11 // pred_check_branch
          %357 = sbr.rel (%p355) target = $region52
        $region51: #{featurizer_forward.1} parent=11 // pred_region
          _
        $region52: #{featurizer_forward.1} parent=11 // pred_fallthru
          _
        // Predicated region
        $region53: #{featurizer_forward.1} parent=11 // pred_check
          %p358 = pneg %p279
        $region54: #{featurizer_forward.1} parent=11 // pred_check_branch
          %360 = sbr.rel (%p358) target = $region56
        $region55: #{featurizer_forward.1} parent=11 // pred_region
          _
        $region56: #{featurizer_forward.1} parent=11 // pred_fallthru
          _
      $region12: #{featurizer_forward.1} parent=5 // pred_fallthru
        _
      %p361 = scmp.lt.s32.totalorder %s22, 2
      // Predicated region
      $region57: #{featurizer_forward.1} parent=5 // pred_check
        %p362 = pneg %p361
      $region58: #{featurizer_forward.1} parent=5 // pred_check_branch
        %364 = sbr.rel (%p362) target = $region60
      $region59: #{featurizer_forward.1} parent=5 // pred_region
        // Predicated region
        $region61: #{featurizer_forward.1} parent=59 // pred_check
          %p365 = pneg %p63
        $region62: #{featurizer_forward.1} parent=59 // pred_check_branch
          %367 = sbr.rel (%p365) target = $region64
        $region63: #{featurizer_forward.1} parent=59 // pred_region
          %p368 = scmp.lt.s32.totalorder %s22, 1
          %s369 = scalar_select %p368, %s22, 1
          %s370 = smul.addr %s369, 33
          %s371 = smul.addr %s370, 8
          %s372 = scalar_lea.vmem %s1, %s371
        $region64: #{featurizer_forward.1} parent=59 // pred_fallthru
          _
      $region60: #{featurizer_forward.1} parent=5 // pred_fallthru
        _
      %p373 = scmp.le.s32.totalorder 1, %s22
      %p374 = scmp.lt.s32.totalorder %s22, 3
      %p375 = pnand %p373, %p374
      %p376 = pneg %p375
      // Predicated region
      $region65: #{featurizer_forward.1} parent=5 // pred_check
        _
      $region66: #{featurizer_forward.1} parent=5 // pred_check_branch
        %378 = sbr.rel (%p375) target = $region68
      $region67: #{featurizer_forward.1} parent=5 // pred_region
        %s379 = ssub.s32 %s22, 1
        // Predicated region
        $region69: #{featurizer_forward.1} parent=67 // pred_check
          %p380 = pneg %p43
        $region70: #{featurizer_forward.1} parent=67 // pred_check_branch
          %382 = sbr.rel (%p380) target = $region72
        $region71: #{featurizer_forward.1} parent=67 // pred_region
          %383 = dma.done [#allocation4], 16
        $region72: #{featurizer_forward.1} parent=67 // pred_fallthru
          _
        %384 = sfence
        %p385 = pneg %p43
        %p386 = pneg %p40
        %p387 = scmp.lt.s32.totalorder %s27, 1
        %s388 = scalar_select %p387, %s27, 1
        %s389 = smul.addr %s388, 33
        %s390 = smul.addr %s389, 8
        %s391 = scalar_lea.vmem %s1, %s390
        %p392 = pneg %p69
        %p393 = pneg %p66
        %p394 = pneg %p90
        %p395 = pneg %p87
        %p396 = pneg %p111
        %p397 = pneg %p108
        %p398 = pneg %p132
        %p399 = pneg %p129
        %p400 = pneg %p153
        %p401 = pneg %p150
        %p402 = pneg %p174
        %p403 = pneg %p171
        %p404 = pneg %p195
        %p405 = pneg %p192
        %p406 = pneg %p216
        %p407 = pneg %p213
        %p408 = pneg %p237
        %p409 = pneg %p234
        %p410 = pneg %p258
        %p411 = pneg %p255
        %p412 = pneg %p279
        %p413 = pneg %p276
        %p414 = pneg %p305
        %p415 = pneg %p302
        %s416 = sand.u32 %s292, 1
        %s417 = scalar_lea.sflag [#allocation3], %s416
        %s418 = sand.u32 %s292, 1
        %s419 = scalar_lea.vmem [#allocation5], %s418
        %p420 = scmp.lt.s32.totalorder %s27, 1
        %s421 = scalar_select %p420, %s27, 1
        %s422 = smul.addr %s421, 33
        %s423 = smul.addr %s422, 8
        %s424 = scalar_lea.vmem %s1, %s423
        %s425 = sld [smem:[#allocation2]]
        %s426 = sld [smem:[#allocation2 + $0x1]]
        %s427 = sld [smem:[#allocation2 + $0x2]]
        %s428 = sld [smem:[#allocation2 + $0x3]]
        %v429 = vld [vmem:[%s424] sm:$0xff]
        %v430 = vld [vmem:[%s424 + $0x8] sm:$0xff]
        %v431 = vld [vmem:[%s424 + $0x10] sm:$0xff]
        %v432 = vld [vmem:[%s424 + $0x18] sm:$0xff]
        %v433 = vld [vmem:[%s424 + $0x20] sm:$0xff]
        %v434 = vld [vmem:[%s424 + $0x28] sm:$0xff]
        %v435 = vld [vmem:[%s424 + $0x30] sm:$0xff]
        %v436 = vld [vmem:[%s424 + $0x38] sm:$0xff]
        %v437 = vld [vmem:[%s424 + $0x40] sm:$0xff]
        %v438 = vld [vmem:[%s424 + $0x48] sm:$0xff]
        %v439 = vld [vmem:[%s424 + $0x50] sm:$0xff]
        %v440 = vld [vmem:[%s424 + $0x58] sm:$0xff]
        %v441 = vld [vmem:[%s424 + $0x60] sm:$0xff]
        %v442 = vld [vmem:[%s424 + $0x68] sm:$0xff]
        %v443 = vld [vmem:[%s424 + $0x70] sm:$0xff]
        %v444 = vld [vmem:[%s424 + $0x78] sm:$0xff]
        %v445 = vld [vmem:[%s424 + $0x80] sm:$0xff]
        %v446 = vld [vmem:[%s424 + $0x88] sm:$0xff]
        %v447 = vld [vmem:[%s424 + $0x90] sm:$0xff]
        %v448 = vld [vmem:[%s424 + $0x98] sm:$0xff]
        %v449 = vld [vmem:[%s424 + $0xa0] sm:$0xff]
        %v450 = vld [vmem:[%s424 + $0xa8] sm:$0xff]
        %v451 = vld [vmem:[%s424 + $0xb0] sm:$0xff]
        %v452 = vld [vmem:[%s424 + $0xb8] sm:$0xff]
        %v453 = vld [vmem:[%s424 + $0xc0] sm:$0xff]
        %v454 = vld [vmem:[%s424 + $0xc8] sm:$0xff]
        %v455 = vld [vmem:[%s424 + $0xd0] sm:$0xff]
        %v456 = vld [vmem:[%s424 + $0xd8] sm:$0xff]
        %v457 = vld [vmem:[%s424 + $0xe0] sm:$0xff]
        %v458 = vld [vmem:[%s424 + $0xe8] sm:$0xff]
        %v459 = vld [vmem:[%s424 + $0xf0] sm:$0xff]
        %v460 = vld [vmem:[%s424 + $0xf8] sm:$0xff]
        %v461 = vld [vmem:[%s424 + $0x100] sm:$0xff]
        %v462 = vld [vmem:[%s2] sm:$0xf]
        %s463 = scalar_lea.vmem %s2, 4
        %v464 = vld [vmem:[%s463] sm:$0xf]
        %vm494 = vcmask 1046528
        %v495 = vrot.slane %v429, 1
        %v496 = vrot.slane %v430, 1
        %v497 = vsel %vm494, %v495, %v496
        %v498 = vrot.slane %v431, 1
        %v499 = vsel %vm494, %v496, %v498
        %v500 = vrot.slane %v432, 1
        %v501 = vsel %vm494, %v498, %v500
        %v502 = vrot.slane %v433, 1
        %v503 = vsel %vm494, %v500, %v502
        %v504 = vrot.slane %v434, 1
        %v505 = vsel %vm494, %v502, %v504
        %v506 = vrot.slane %v435, 1
        %v507 = vsel %vm494, %v504, %v506
        %v508 = vrot.slane %v436, 1
        %v509 = vsel %vm494, %v506, %v508
        %v510 = vrot.slane %v437, 1
        %v511 = vsel %vm494, %v508, %v510
        %v512 = vrot.slane %v438, 1
        %v513 = vsel %vm494, %v510, %v512
        %v514 = vrot.slane %v439, 1
        %v515 = vsel %vm494, %v512, %v514
        %v516 = vrot.slane %v440, 1
        %v517 = vsel %vm494, %v514, %v516
        %v518 = vrot.slane %v441, 1
        %v519 = vsel %vm494, %v516, %v518
        %v520 = vrot.slane %v442, 1
        %v521 = vsel %vm494, %v518, %v520
        %v522 = vrot.slane %v443, 1
        %v523 = vsel %vm494, %v520, %v522
        %v524 = vrot.slane %v444, 1
        %v525 = vsel %vm494, %v522, %v524
        %v526 = vrot.slane %v445, 1
        %v527 = vsel %vm494, %v524, %v526
        %v528 = vrot.slane %v446, 1
        %v529 = vsel %vm494, %v526, %v528
        %v530 = vrot.slane %v447, 1
        %v531 = vsel %vm494, %v528, %v530
        %v532 = vrot.slane %v448, 1
        %v533 = vsel %vm494, %v530, %v532
        %v534 = vrot.slane %v449, 1
        %v535 = vsel %vm494, %v532, %v534
        %v536 = vrot.slane %v450, 1
        %v537 = vsel %vm494, %v534, %v536
        %v538 = vrot.slane %v451, 1
        %v539 = vsel %vm494, %v536, %v538
        %v540 = vrot.slane %v452, 1
        %v541 = vsel %vm494, %v538, %v540
        %v542 = vrot.slane %v453, 1
        %v543 = vsel %vm494, %v540, %v542
        %v544 = vrot.slane %v454, 1
        %v545 = vsel %vm494, %v542, %v544
        %v546 = vrot.slane %v455, 1
        %v547 = vsel %vm494, %v544, %v546
        %v548 = vrot.slane %v456, 1
        %v549 = vsel %vm494, %v546, %v548
        %v550 = vrot.slane %v457, 1
        %v551 = vsel %vm494, %v548, %v550
        %vm552 = vcmask 31744
        %v553 = vsel %vm552, %v497, 0
        %v555 = vsel %vm552, %v499, 0
        %v557 = vsel %vm552, %v501, 0
        %v559 = vsel %vm552, %v503, 0
        %v561 = vsel %vm552, %v505, 0
        %v563 = vsel %vm552, %v507, 0
        %v565 = vsel %vm552, %v509, 0
        %v567 = vsel %vm552, %v511, 0
        %v569 = vsel %vm552, %v513, 0
        %v571 = vsel %vm552, %v515, 0
        %v573 = vsel %vm552, %v517, 0
        %v575 = vsel %vm552, %v519, 0
        %v577 = vsel %vm552, %v521, 0
        %v579 = vsel %vm552, %v523, 0
        %v581 = vsel %vm552, %v525, 0
        %v583 = vsel %vm552, %v527, 0
        %v585 = vsel %vm552, %v529, 0
        %v587 = vsel %vm552, %v531, 0
        %v589 = vsel %vm552, %v533, 0
        %v591 = vsel %vm552, %v535, 0
        %v593 = vsel %vm552, %v537, 0
        %v595 = vsel %vm552, %v539, 0
        %v597 = vsel %vm552, %v541, 0
        %v599 = vsel %vm552, %v543, 0
        %v601 = vsel %vm552, %v545, 0
        %v603 = vsel %vm552, %v547, 0
        %v605 = vsel %vm552, %v549, 0
        %v607 = vsel %vm552, %v551, 0
        %vm609 = vcmask 1043456
        %v611 = vsel %vm609, %v464, 0
        %613 = vmatprep.subr.mxu0 0.0
        %614 = vmatpush1.msra.mxu0 %v611
        %615 = vmatprep.subr.mxu0 0.0
        %616 = vmatpush1.msra.mxu0 0.0
        %617 = vmatprep.subr.mxu0 0.0
        %618 = vmatpush1.msra.mxu0 0.0
        %619 = vmatprep.subr.mxu0 0.0
        %620 = vmatpush1.msra.mxu0 0.0
        %621 = vmatprep.subr.mxu0 0.0
        %622 = vmatpush1.msra.mxu0 0.0
        %623 = vmatprep.subr.mxu0 0.0
        %624 = vmatpush1.msra.mxu0 0.0
        %625 = vmatprep.subr.mxu0 0.0
        %626 = vmatpush1.msra.mxu0 0.0
        %627 = vmatprep.subr.mxu0 0.0
        %628 = vmatpush1.msra.mxu0 0.0
        %629 = vmatprep.subr.mxu0 0.0
        %630 = vmatpush1.msra.mxu0 0.0
        %631 = vmatprep.subr.mxu0 0.0
        %632 = vmatpush1.msra.mxu0 0.0
        %633 = vmatprep.subr.mxu0 0.0
        %634 = vmatpush1.msra.mxu0 0.0
        %635 = vmatprep.subr.mxu0 0.0
        %636 = vmatpush1.msra.mxu0 0.0
        %637 = vmatprep.subr.mxu0 0.0
        %638 = vmatpush1.msra.mxu0 0.0
        %639 = vmatprep.subr.mxu0 0.0
        %640 = vmatpush1.msra.mxu0 0.0
        %641 = vmatprep.subr.mxu0 0.0
        %642 = vmatpush1.msra.mxu0 0.0
        %643 = vmatprep.subr.mxu0 0.0
        %644 = vmatpush1.msra.mxu0 0.0
        %645 = vmatprep.subr.mxu0 0.0
        %646 = vmatpush1.msra.mxu0 0.0
        %647 = vmatprep.subr.mxu0 0.0
        %648 = vmatpush1.msra.mxu0 0.0
        %649 = vmatprep.subr.mxu0 0.0
        %650 = vmatpush1.msra.mxu0 0.0
        %651 = vmatprep.subr.mxu0 0.0
        %652 = vmatpush1.msra.mxu0 0.0
        %653 = vmatprep.subr.mxu0 0.0
        %654 = vmatpush1.msra.mxu0 0.0
        %655 = vmatprep.subr.mxu0 0.0
        %656 = vmatpush1.msra.mxu0 0.0
        %657 = vmatprep.subr.mxu0 0.0
        %658 = vmatpush1.msra.mxu0 0.0
        %659 = vmatprep.subr.mxu0 0.0
        %660 = vmatpush1.msra.mxu0 0.0
        %661 = vmatprep.subr.mxu0 0.0
        %662 = vmatpush1.msra.mxu0 0.0
        %663 = vmatprep.subr.mxu0 0.0
        %664 = vmatpush1.msra.mxu0 0.0
        %665 = vmatprep.subr.mxu0 0.0
        %666 = vmatpush1.msra.mxu0 0.0
        %667 = vmatprep.subr.mxu0 0.0
        %668 = vmatpush1.msra.mxu0 0.0
        %669 = vmatprep.subr.mxu0 0.0
        %670 = vmatpush1.msra.mxu0 0.0
        %671 = vmatprep.subr.mxu0 0.0
        %672 = vmatpush1.msra.mxu0 0.0
        %673 = vmatprep.subr.mxu0 0.0
        %674 = vmatpush1.msra.mxu0 0.0
        %675 = vmatprep.subr.mxu0 0.0
        %676 = vmatpush1.msra.mxu0 0.0
        %677 = vmatprep.mubr.f32.mxu0 0.0
        %678 = vmatmul.mubr.f32.gmra.mrb[0].mxu0 %v553
        %v679 = vpop.f32.mrb[0].mxu0
        %v680 = vadd.f32 0.0, %v679
        %v681 = vpop.f32.mrb[0].mxu0
        %682 = vmatprep.mubr.f32.mxu0 0.0
        %683 = vmatmul.mubr.f32.gmra.mrb[0].mxu0 %v555
        %v684 = vpop.f32.mrb[0].mxu0
        %v685 = vadd.f32 0.0, %v684
        %v686 = vpop.f32.mrb[0].mxu0
        %687 = vmatprep.mubr.f32.mxu0 0.0
        %688 = vmatmul.mubr.f32.gmra.mrb[0].mxu0 %v557
        %v689 = vpop.f32.mrb[0].mxu0
        %v690 = vadd.f32 0.0, %v689
        %v691 = vpop.f32.mrb[0].mxu0
        %692 = vmatprep.mubr.f32.mxu0 0.0
        %693 = vmatmul.mubr.f32.gmra.mrb[0].mxu0 %v559
        %v694 = vpop.f32.mrb[0].mxu0
        %v695 = vadd.f32 0.0, %v694
        %v696 = vpop.f32.mrb[0].mxu0
        %697 = vmatprep.mubr.f32.mxu0 0.0
        %698 = vmatmul.mubr.f32.gmra.mrb[0].mxu0 %v561
        %v699 = vpop.f32.mrb[0].mxu0
        %v700 = vadd.f32 0.0, %v699
        %v701 = vpop.f32.mrb[0].mxu0
        %702 = vmatprep.mubr.f32.mxu0 0.0
        %703 = vmatmul.mubr.f32.gmra.mrb[0].mxu0 %v563
        %v704 = vpop.f32.mrb[0].mxu0
        %v705 = vadd.f32 0.0, %v704
        %v706 = vpop.f32.mrb[0].mxu0
        %707 = vmatprep.mubr.f32.mxu0 0.0
        %708 = vmatmul.mubr.f32.gmra.mrb[0].mxu0 %v565
        %v709 = vpop.f32.mrb[0].mxu0
        %v710 = vadd.f32 0.0, %v709
        %v711 = vpop.f32.mrb[0].mxu0
        %712 = vmatprep.mubr.f32.mxu0 0.0
        %713 = vmatmul.mubr.f32.gmra.mrb[0].mxu0 %v567
        %v714 = vpop.f32.mrb[0].mxu0
        %v715 = vadd.f32 0.0, %v714
        %v716 = vpop.f32.mrb[0].mxu0
        %717 = vmatprep.mubr.f32.mxu0 0.0
        %718 = vmatmul.mubr.f32.gmra.mrb[0].mxu0 %v569
        %v719 = vpop.f32.mrb[0].mxu0
        %v720 = vadd.f32 0.0, %v719
        %v721 = vpop.f32.mrb[0].mxu0
        %722 = vmatprep.mubr.f32.mxu0 0.0
        %723 = vmatmul.mubr.f32.gmra.mrb[0].mxu0 %v571
        %v724 = vpop.f32.mrb[0].mxu0
        %v725 = vadd.f32 0.0, %v724
        %v726 = vpop.f32.mrb[0].mxu0
        %727 = vmatprep.mubr.f32.mxu0 0.0
        %728 = vmatmul.mubr.f32.gmra.mrb[0].mxu0 %v573
        %v729 = vpop.f32.mrb[0].mxu0
        %v730 = vadd.f32 0.0, %v729
        %v731 = vpop.f32.mrb[0].mxu0
        %732 = vmatprep.mubr.f32.mxu0 0.0
        %733 = vmatmul.mubr.f32.gmra.mrb[0].mxu0 %v575
        %v734 = vpop.f32.mrb[0].mxu0
        %v735 = vadd.f32 0.0, %v734
        %v736 = vpop.f32.mrb[0].mxu0
        %737 = vmatprep.mubr.f32.mxu0 0.0
        %738 = vmatmul.mubr.f32.gmra.mrb[0].mxu0 %v577
        %v739 = vpop.f32.mrb[0].mxu0
        %v740 = vadd.f32 0.0, %v739
        %v741 = vpop.f32.mrb[0].mxu0
        %742 = vmatprep.mubr.f32.mxu0 0.0
        %743 = vmatmul.mubr.f32.gmra.mrb[0].mxu0 %v579
        %v744 = vpop.f32.mrb[0].mxu0
        %v745 = vadd.f32 0.0, %v744
        %v746 = vpop.f32.mrb[0].mxu0
        %747 = vmatprep.mubr.f32.mxu0 0.0
        %748 = vmatmul.mubr.f32.gmra.mrb[0].mxu0 %v581
        %v749 = vpop.f32.mrb[0].mxu0
        %v750 = vadd.f32 0.0, %v749
        %v751 = vpop.f32.mrb[0].mxu0
        %752 = vmatprep.mubr.f32.mxu0 0.0
        %753 = vmatmul.mubr.f32.gmra.mrb[0].mxu0 %v583
        %v754 = vpop.f32.mrb[0].mxu0
        %v755 = vadd.f32 0.0, %v754
        %v756 = vpop.f32.mrb[0].mxu0
        %757 = vmatprep.mubr.f32.mxu0 0.0
        %758 = vmatmul.mubr.f32.gmra.mrb[0].mxu0 %v585
        %v759 = vpop.f32.mrb[0].mxu0
        %v760 = vadd.f32 0.0, %v759
        %v761 = vpop.f32.mrb[0].mxu0
        %762 = vmatprep.mubr.f32.mxu0 0.0
        %763 = vmatmul.mubr.f32.gmra.mrb[0].mxu0 %v587
        %v764 = vpop.f32.mrb[0].mxu0
        %v765 = vadd.f32 0.0, %v764
        %v766 = vpop.f32.mrb[0].mxu0
        %767 = vmatprep.mubr.f32.mxu0 0.0
        %768 = vmatmul.mubr.f32.gmra.mrb[0].mxu0 %v589
        %v769 = vpop.f32.mrb[0].mxu0
        %v770 = vadd.f32 0.0, %v769
        %v771 = vpop.f32.mrb[0].mxu0
        %772 = vmatprep.mubr.f32.mxu0 0.0
        %773 = vmatmul.mubr.f32.gmra.mrb[0].mxu0 %v591
        %v774 = vpop.f32.mrb[0].mxu0
        %v775 = vadd.f32 0.0, %v774
        %v776 = vpop.f32.mrb[0].mxu0
        %777 = vmatprep.mubr.f32.mxu0 0.0
        %778 = vmatmul.mubr.f32.gmra.mrb[0].mxu0 %v593
        %v779 = vpop.f32.mrb[0].mxu0
        %v780 = vadd.f32 0.0, %v779
        %v781 = vpop.f32.mrb[0].mxu0
        %782 = vmatprep.mubr.f32.mxu0 0.0
        %783 = vmatmul.mubr.f32.gmra.mrb[0].mxu0 %v595
        %v784 = vpop.f32.mrb[0].mxu0
        %v785 = vadd.f32 0.0, %v784
        %v786 = vpop.f32.mrb[0].mxu0
        %787 = vmatprep.mubr.f32.mxu0 0.0
        %788 = vmatmul.mubr.f32.gmra.mrb[0].mxu0 %v597
        %v789 = vpop.f32.mrb[0].mxu0
        %v790 = vadd.f32 0.0, %v789
        %v791 = vpop.f32.mrb[0].mxu0
        %792 = vmatprep.mubr.f32.mxu0 0.0
        %793 = vmatmul.mubr.f32.gmra.mrb[0].mxu0 %v599
        %v794 = vpop.f32.mrb[0].mxu0
        %v795 = vadd.f32 0.0, %v794
        %v796 = vpop.f32.mrb[0].mxu0
        %797 = vmatprep.mubr.f32.mxu0 0.0
        %798 = vmatmul.mubr.f32.gmra.mrb[0].mxu0 %v601
        %v799 = vpop.f32.mrb[0].mxu0
        %v800 = vadd.f32 0.0, %v799
        %v801 = vpop.f32.mrb[0].mxu0
        %802 = vmatprep.mubr.f32.mxu0 0.0
        %803 = vmatmul.mubr.f32.gmra.mrb[0].mxu0 %v603
        %v804 = vpop.f32.mrb[0].mxu0
        %v805 = vadd.f32 0.0, %v804
        %v806 = vpop.f32.mrb[0].mxu0
        %807 = vmatprep.mubr.f32.mxu0 0.0
        %808 = vmatmul.mubr.f32.gmra.mrb[0].mxu0 %v605
        %v809 = vpop.f32.mrb[0].mxu0
        %v810 = vadd.f32 0.0, %v809
        %v811 = vpop.f32.mrb[0].mxu0
        %812 = vmatprep.mubr.f32.mxu0 0.0
        %813 = vmatmul.mubr.f32.gmra.mrb[0].mxu0 %v607
        %v814 = vpop.f32.mrb[0].mxu0
        %v815 = vadd.f32 0.0, %v814
        %v816 = vpop.f32.mrb[0].mxu0
        %817 = vdwg.mxu0
        %v818 = vsel %vm552, %v429, 0
        %v820 = vsel %vm552, %v430, 0
        %v822 = vsel %vm552, %v431, 0
        %v824 = vsel %vm552, %v432, 0
        %v826 = vsel %vm552, %v433, 0
        %v828 = vsel %vm552, %v434, 0
        %v830 = vsel %vm552, %v435, 0
        %v832 = vsel %vm552, %v436, 0
        %v834 = vsel %vm552, %v437, 0
        %v836 = vsel %vm552, %v438, 0
        %v838 = vsel %vm552, %v439, 0
        %v840 = vsel %vm552, %v440, 0
        %v842 = vsel %vm552, %v441, 0
        %v844 = vsel %vm552, %v442, 0
        %v846 = vsel %vm552, %v443, 0
        %v848 = vsel %vm552, %v444, 0
        %v850 = vsel %vm552, %v445, 0
        %v852 = vsel %vm552, %v446, 0
        %v854 = vsel %vm552, %v447, 0
        %v856 = vsel %vm552, %v448, 0
        %v858 = vsel %vm552, %v449, 0
        %v860 = vsel %vm552, %v450, 0
        %v862 = vsel %vm552, %v451, 0
        %v864 = vsel %vm552, %v452, 0
        %v866 = vsel %vm552, %v453, 0
        %v868 = vsel %vm552, %v454, 0
        %v870 = vsel %vm552, %v455, 0
        %v872 = vsel %vm552, %v456, 0
        %v875 = vsel %vm609, %v462, 0
        %877 = vmatprep.subr.mxu0 0.0
        %878 = vmatpush1.msra.mxu0 %v875
        %879 = vmatprep.subr.mxu0 0.0
        %880 = vmatpush1.msra.mxu0 0.0
        %881 = vmatprep.subr.mxu0 0.0
        %882 = vmatpush1.msra.mxu0 0.0
        %883 = vmatprep.subr.mxu0 0.0
        %884 = vmatpush1.msra.mxu0 0.0
        %885 = vmatprep.subr.mxu0 0.0
        %886 = vmatpush1.msra.mxu0 0.0
        %887 = vmatprep.subr.mxu0 0.0
        %888 = vmatpush1.msra.mxu0 0.0
        %889 = vmatprep.subr.mxu0 0.0
        %890 = vmatpush1.msra.mxu0 0.0
        %891 = vmatprep.subr.mxu0 0.0
        %892 = vmatpush1.msra.mxu0 0.0
        %893 = vmatprep.subr.mxu0 0.0
        %894 = vmatpush1.msra.mxu0 0.0
        %895 = vmatprep.subr.mxu0 0.0
        %896 = vmatpush1.msra.mxu0 0.0
        %897 = vmatprep.subr.mxu0 0.0
        %898 = vmatpush1.msra.mxu0 0.0
        %899 = vmatprep.subr.mxu0 0.0
        %900 = vmatpush1.msra.mxu0 0.0
        %901 = vmatprep.subr.mxu0 0.0
        %902 = vmatpush1.msra.mxu0 0.0
        %903 = vmatprep.subr.mxu0 0.0
        %904 = vmatpush1.msra.mxu0 0.0
        %905 = vmatprep.subr.mxu0 0.0
        %906 = vmatpush1.msra.mxu0 0.0
        %907 = vmatprep.subr.mxu0 0.0
        %908 = vmatpush1.msra.mxu0 0.0
        %909 = vmatprep.subr.mxu0 0.0
        %910 = vmatpush1.msra.mxu0 0.0
        %911 = vmatprep.subr.mxu0 0.0
        %912 = vmatpush1.msra.mxu0 0.0
        %913 = vmatprep.subr.mxu0 0.0
        %914 = vmatpush1.msra.mxu0 0.0
        %915 = vmatprep.subr.mxu0 0.0
        %916 = vmatpush1.msra.mxu0 0.0
        %917 = vmatprep.subr.mxu0 0.0
        %918 = vmatpush1.msra.mxu0 0.0
        %919 = vmatprep.subr.mxu0 0.0
        %920 = vmatpush1.msra.mxu0 0.0
        %921 = vmatprep.subr.mxu0 0.0
        %922 = vmatpush1.msra.mxu0 0.0
        %923 = vmatprep.subr.mxu0 0.0
        %924 = vmatpush1.msra.mxu0 0.0
        %925 = vmatprep.subr.mxu0 0.0
        %926 = vmatpush1.msra.mxu0 0.0
        %927 = vmatprep.subr.mxu0 0.0
        %928 = vmatpush1.msra.mxu0 0.0
        %929 = vmatprep.subr.mxu0 0.0
        %930 = vmatpush1.msra.mxu0 0.0
        %931 = vmatprep.subr.mxu0 0.0
        %932 = vmatpush1.msra.mxu0 0.0
        %933 = vmatprep.subr.mxu0 0.0
        %934 = vmatpush1.msra.mxu0 0.0
        %935 = vmatprep.subr.mxu0 0.0
        %936 = vmatpush1.msra.mxu0 0.0
        %937 = vmatprep.subr.mxu0 0.0
        %938 = vmatpush1.msra.mxu0 0.0
        %939 = vmatprep.subr.mxu0 0.0
        %940 = vmatpush1.msra.mxu0 0.0
        %941 = vmatprep.mubr.f32.mxu0 0.0
        %942 = vmatmul.mubr.f32.gmra.mrb[0].mxu0 %v818
        %v943 = vpop.f32.mrb[0].mxu0
        %v944 = vadd.f32 %v680, %v943
        %v945 = vpop.f32.mrb[0].mxu0
        %946 = vmatprep.mubr.f32.mxu0 0.0
        %947 = vmatmul.mubr.f32.gmra.mrb[0].mxu0 %v820
        %v948 = vpop.f32.mrb[0].mxu0
        %v949 = vadd.f32 %v685, %v948
        %v950 = vpop.f32.mrb[0].mxu0
        %951 = vmatprep.mubr.f32.mxu0 0.0
        %952 = vmatmul.mubr.f32.gmra.mrb[0].mxu0 %v822
        %v953 = vpop.f32.mrb[0].mxu0
        %v954 = vadd.f32 %v690, %v953
        %v955 = vpop.f32.mrb[0].mxu0
        %956 = vmatprep.mubr.f32.mxu0 0.0
        %957 = vmatmul.mubr.f32.gmra.mrb[0].mxu0 %v824
        %v958 = vpop.f32.mrb[0].mxu0
        %v959 = vadd.f32 %v695, %v958
        %v960 = vpop.f32.mrb[0].mxu0
        %961 = vmatprep.mubr.f32.mxu0 0.0
        %962 = vmatmul.mubr.f32.gmra.mrb[0].mxu0 %v826
        %v963 = vpop.f32.mrb[0].mxu0
        %v964 = vadd.f32 %v700, %v963
        %v965 = vpop.f32.mrb[0].mxu0
        %966 = vmatprep.mubr.f32.mxu0 0.0
        %967 = vmatmul.mubr.f32.gmra.mrb[0].mxu0 %v828
        %v968 = vpop.f32.mrb[0].mxu0
        %v969 = vadd.f32 %v705, %v968
        %v970 = vpop.f32.mrb[0].mxu0
        %971 = vmatprep.mubr.f32.mxu0 0.0
        %972 = vmatmul.mubr.f32.gmra.mrb[0].mxu0 %v830
        %v973 = vpop.f32.mrb[0].mxu0
        %v974 = vadd.f32 %v710, %v973
        %v975 = vpop.f32.mrb[0].mxu0
        %976 = vmatprep.mubr.f32.mxu0 0.0
        %977 = vmatmul.mubr.f32.gmra.mrb[0].mxu0 %v832
        %v978 = vpop.f32.mrb[0].mxu0
        %v979 = vadd.f32 %v715, %v978
        %v980 = vpop.f32.mrb[0].mxu0
        %981 = vmatprep.mubr.f32.mxu0 0.0
        %982 = vmatmul.mubr.f32.gmra.mrb[0].mxu0 %v834
        %v983 = vpop.f32.mrb[0].mxu0
        %v984 = vadd.f32 %v720, %v983
        %v985 = vpop.f32.mrb[0].mxu0
        %986 = vmatprep.mubr.f32.mxu0 0.0
        %987 = vmatmul.mubr.f32.gmra.mrb[0].mxu0 %v836
        %v988 = vpop.f32.mrb[0].mxu0
        %v989 = vadd.f32 %v725, %v988
        %v990 = vpop.f32.mrb[0].mxu0
        %991 = vmatprep.mubr.f32.mxu0 0.0
        %992 = vmatmul.mubr.f32.gmra.mrb[0].mxu0 %v838
        %v993 = vpop.f32.mrb[0].mxu0
        %v994 = vadd.f32 %v730, %v993
        %v995 = vpop.f32.mrb[0].mxu0
        %996 = vmatprep.mubr.f32.mxu0 0.0
        %997 = vmatmul.mubr.f32.gmra.mrb[0].mxu0 %v840
        %v998 = vpop.f32.mrb[0].mxu0
        %v999 = vadd.f32 %v735, %v998
        %v1000 = vpop.f32.mrb[0].mxu0
        %1001 = vmatprep.mubr.f32.mxu0 0.0
        %1002 = vmatmul.mubr.f32.gmra.mrb[0].mxu0 %v842
        %v1003 = vpop.f32.mrb[0].mxu0
        %v1004 = vadd.f32 %v740, %v1003
        %v1005 = vpop.f32.mrb[0].mxu0
        %1006 = vmatprep.mubr.f32.mxu0 0.0
        %1007 = vmatmul.mubr.f32.gmra.mrb[0].mxu0 %v844
        %v1008 = vpop.f32.mrb[0].mxu0
        %v1009 = vadd.f32 %v745, %v1008
        %v1010 = vpop.f32.mrb[0].mxu0
        %1011 = vmatprep.mubr.f32.mxu0 0.0
        %1012 = vmatmul.mubr.f32.gmra.mrb[0].mxu0 %v846
        %v1013 = vpop.f32.mrb[0].mxu0
        %v1014 = vadd.f32 %v750, %v1013
        %v1015 = vpop.f32.mrb[0].mxu0
        %1016 = vmatprep.mubr.f32.mxu0 0.0
        %1017 = vmatmul.mubr.f32.gmra.mrb[0].mxu0 %v848
        %v1018 = vpop.f32.mrb[0].mxu0
        %v1019 = vadd.f32 %v755, %v1018
        %v1020 = vpop.f32.mrb[0].mxu0
        %1021 = vmatprep.mubr.f32.mxu0 0.0
        %1022 = vmatmul.mubr.f32.gmra.mrb[0].mxu0 %v850
        %v1023 = vpop.f32.mrb[0].mxu0
        %v1024 = vadd.f32 %v760, %v1023
        %v1025 = vpop.f32.mrb[0].mxu0
        %1026 = vmatprep.mubr.f32.mxu0 0.0
        %1027 = vmatmul.mubr.f32.gmra.mrb[0].mxu0 %v852
        %v1028 = vpop.f32.mrb[0].mxu0
        %v1029 = vadd.f32 %v765, %v1028
        %v1030 = vpop.f32.mrb[0].mxu0
        %1031 = vmatprep.mubr.f32.mxu0 0.0
        %1032 = vmatmul.mubr.f32.gmra.mrb[0].mxu0 %v854
        %v1033 = vpop.f32.mrb[0].mxu0
        %v1034 = vadd.f32 %v770, %v1033
        %v1035 = vpop.f32.mrb[0].mxu0
        %1036 = vmatprep.mubr.f32.mxu0 0.0
        %1037 = vmatmul.mubr.f32.gmra.mrb[0].mxu0 %v856
        %v1038 = vpop.f32.mrb[0].mxu0
        %v1039 = vadd.f32 %v775, %v1038
        %v1040 = vpop.f32.mrb[0].mxu0
        %1041 = vmatprep.mubr.f32.mxu0 0.0
        %1042 = vmatmul.mubr.f32.gmra.mrb[0].mxu0 %v858
        %v1043 = vpop.f32.mrb[0].mxu0
        %v1044 = vadd.f32 %v780, %v1043
        %v1045 = vpop.f32.mrb[0].mxu0
        %1046 = vmatprep.mubr.f32.mxu0 0.0
        %1047 = vmatmul.mubr.f32.gmra.mrb[0].mxu0 %v860
        %v1048 = vpop.f32.mrb[0].mxu0
        %v1049 = vadd.f32 %v785, %v1048
        %v1050 = vpop.f32.mrb[0].mxu0
        %1051 = vmatprep.mubr.f32.mxu0 0.0
        %1052 = vmatmul.mubr.f32.gmra.mrb[0].mxu0 %v862
        %v1053 = vpop.f32.mrb[0].mxu0
        %v1054 = vadd.f32 %v790, %v1053
        %v1055 = vpop.f32.mrb[0].mxu0
        %1056 = vmatprep.mubr.f32.mxu0 0.0
        %1057 = vmatmul.mubr.f32.gmra.mrb[0].mxu0 %v864
        %v1058 = vpop.f32.mrb[0].mxu0
        %v1059 = vadd.f32 %v795, %v1058
        %v1060 = vpop.f32.mrb[0].mxu0
        %1061 = vmatprep.mubr.f32.mxu0 0.0
        %1062 = vmatmul.mubr.f32.gmra.mrb[0].mxu0 %v866
        %v1063 = vpop.f32.mrb[0].mxu0
        %v1064 = vadd.f32 %v800, %v1063
        %v1065 = vpop.f32.mrb[0].mxu0
        %1066 = vmatprep.mubr.f32.mxu0 0.0
        %1067 = vmatmul.mubr.f32.gmra.mrb[0].mxu0 %v868
        %v1068 = vpop.f32.mrb[0].mxu0
        %v1069 = vadd.f32 %v805, %v1068
        %v1070 = vpop.f32.mrb[0].mxu0
        %1071 = vmatprep.mubr.f32.mxu0 0.0
        %1072 = vmatmul.mubr.f32.gmra.mrb[0].mxu0 %v870
        %v1073 = vpop.f32.mrb[0].mxu0
        %v1074 = vadd.f32 %v810, %v1073
        %v1075 = vpop.f32.mrb[0].mxu0
        %1076 = vmatprep.mubr.f32.mxu0 0.0
        %1077 = vmatmul.mubr.f32.gmra.mrb[0].mxu0 %v872
        %v1078 = vpop.f32.mrb[0].mxu0
        %v1079 = vadd.f32 %v815, %v1078
        %v1080 = vpop.f32.mrb[0].mxu0
        %1081 = vdwg.mxu0
        %s1082 = scalar_lea.vmem %s2, 8
        %v1083 = vld [vmem:[%s1082] sm:$0xf]
        %vm1084 = vcmask 1045504
        %v1085 = vrot.slane %v429, 2
        %v1086 = vrot.slane %v430, 2
        %v1087 = vsel %vm1084, %v1085, %v1086
        %v1088 = vrot.slane %v431, 2
        %v1089 = vsel %vm1084, %v1086, %v1088
        %v1090 = vrot.slane %v432, 2
        %v1091 = vsel %vm1084, %v1088, %v1090
        %v1092 = vrot.slane %v433, 2
        %v1093 = vsel %vm1084, %v1090, %v1092
        %v1094 = vrot.slane %v434, 2
        %v1095 = vsel %vm1084, %v1092, %v1094
        %v1096 = vrot.slane %v435, 2
        %v1097 = vsel %vm1084, %v1094, %v1096
        %v1098 = vrot.slane %v436, 2
        %v1099 = vsel %vm1084, %v1096, %v1098
        %v1100 = vrot.slane %v437, 2
        %v1101 = vsel %vm1084, %v1098, %v1100
        %v1102 = vrot.slane %v438, 2
        %v1103 = vsel %vm1084, %v1100, %v1102
        %v1104 = vrot.slane %v439, 2
        %v1105 = vsel %vm1084, %v1102, %v1104
        %v1106 = vrot.slane %v440, 2
        %v1107 = vsel %vm1084, %v1104, %v1106
        %v1108 = vrot.slane %v441, 2
        %v1109 = vsel %vm1084, %v1106, %v1108
        %v1110 = vrot.slane %v442, 2
        %v1111 = vsel %vm1084, %v1108, %v1110
        %v1112 = vrot.slane %v443, 2
        %v1113 = vsel %vm1084, %v1110, %v1112
        %v1114 = vrot.slane %v444, 2
        %v1115 = vsel %vm1084, %v1112, %v1114
        %v1116 = vrot.slane %v445, 2
        %v1117 = vsel %vm1084, %v1114, %v1116
        %v1118 = vrot.slane %v446, 2
        %v1119 = vsel %vm1084, %v1116, %v1118
        %v1120 = vrot.slane %v447, 2
        %v1121 = vsel %vm1084, %v1118, %v1120
        %v1122 = vrot.slane %v448, 2
        %v1123 = vsel %vm1084, %v1120, %v1122
        %v1124 = vrot.slane %v449, 2
        %v1125 = vsel %vm1084, %v1122, %v1124
        %v1126 = vrot.slane %v450, 2
        %v1127 = vsel %vm1084, %v1124, %v1126
        %v1128 = vrot.slane %v451, 2
        %v1129 = vsel %vm1084, %v1126, %v1128
        %v1130 = vrot.slane %v452, 2
        %v1131 = vsel %vm1084, %v1128, %v1130
        %v1132 = vrot.slane %v453, 2
        %v1133 = vsel %vm1084, %v1130, %v1132
        %v1134 = vrot.slane %v454, 2
        %v1135 = vsel %vm1084, %v1132, %v1134
        %v1136 = vrot.slane %v455, 2
        %v1137 = vsel %vm1084, %v1134, %v1136
        %v1138 = vrot.slane %v456, 2
        %v1139 = vsel %vm1084, %v1136, %v1138
        %v1140 = vrot.slane %v457, 2
        %v1141 = vsel %vm1084, %v1138, %v1140
        %v1142 = vsel %vm552, %v1087, 0
        %v1144 = vsel %vm552, %v1089, 0
        %v1146 = vsel %vm552, %v1091, 0
        %v1148 = vsel %vm552, %v1093, 0
        %v1150 = vsel %vm552, %v1095, 0
        %v1152 = vsel %vm552, %v1097, 0
        %v1154 = vsel %vm552, %v1099, 0
        %v1156 = vsel %vm552, %v1101, 0
        %v1158 = vsel %vm552, %v1103, 0
        %v1160 = vsel %vm552, %v1105, 0
        %v1162 = vsel %vm552, %v1107, 0
        %v1164 = vsel %vm552, %v1109, 0
        %v1166 = vsel %vm552, %v1111, 0
        %v1168 = vsel %vm552, %v1113, 0
        %v1170 = vsel %vm552, %v1115, 0
        %v1172 = vsel %vm552, %v1117, 0
        %v1174 = vsel %vm552, %v1119, 0
        %v1176 = vsel %vm552, %v1121, 0
        %v1178 = vsel %vm552, %v1123, 0
        %v1180 = vsel %vm552, %v1125, 0
        %v1182 = vsel %vm552, %v1127, 0
        %v1184 = vsel %vm552, %v1129, 0
        %v1186 = vsel %vm552, %v1131, 0
        %v1188 = vsel %vm552, %v1133, 0
        %v1190 = vsel %vm552, %v1135, 0
        %v1192 = vsel %vm552, %v1137, 0
        %v1194 = vsel %vm552, %v1139, 0
        %v1196 = vsel %vm552, %v1141, 0
        %v1199 = vsel %vm609, %v1083, 0
        %1201 = vmatprep.subr.mxu0 0.0
        %1202 = vmatpush1.msra.mxu0 %v1199
        %1203 = vmatprep.subr.mxu0 0.0
        %1204 = vmatpush1.msra.mxu0 0.0
        %1205 = vmatprep.subr.mxu0 0.0
        %1206 = vmatpush1.msra.mxu0 0.0
        %1207 = vmatprep.subr.mxu0 0.0
        %1208 = vmatpush1.msra.mxu0 0.0
        %1209 = vmatprep.subr.mxu0 0.0
        %1210 = vmatpush1.msra.mxu0 0.0
        %1211 = vmatprep.subr.mxu0 0.0
        %1212 = vmatpush1.msra.mxu0 0.0
        %1213 = vmatprep.subr.mxu0 0.0
        %1214 = vmatpush1.msra.mxu0 0.0
        %1215 = vmatprep.subr.mxu0 0.0
        %1216 = vmatpush1.msra.mxu0 0.0
        %1217 = vmatprep.subr.mxu0 0.0
        %1218 = vmatpush1.msra.mxu0 0.0
        %1219 = vmatprep.subr.mxu0 0.0
        %1220 = vmatpush1.msra.mxu0 0.0
        %1221 = vmatprep.subr.mxu0 0.0
        %1222 = vmatpush1.msra.mxu0 0.0
        %1223 = vmatprep.subr.mxu0 0.0
        %1224 = vmatpush1.msra.mxu0 0.0
        %1225 = vmatprep.subr.mxu0 0.0
        %1226 = vmatpush1.msra.mxu0 0.0
        %1227 = vmatprep.subr.mxu0 0.0
        %1228 = vmatpush1.msra.mxu0 0.0
        %1229 = vmatprep.subr.mxu0 0.0
        %1230 = vmatpush1.msra.mxu0 0.0
        %1231 = vmatprep.subr.mxu0 0.0
        %1232 = vmatpush1.msra.mxu0 0.0
        %1233 = vmatprep.subr.mxu0 0.0
        %1234 = vmatpush1.msra.mxu0 0.0
        %1235 = vmatprep.subr.mxu0 0.0
        %1236 = vmatpush1.msra.mxu0 0.0
        %1237 = vmatprep.subr.mxu0 0.0
        %1238 = vmatpush1.msra.mxu0 0.0
        %1239 = vmatprep.subr.mxu0 0.0
        %1240 = vmatpush1.msra.mxu0 0.0
        %1241 = vmatprep.subr.mxu0 0.0
        %1242 = vmatpush1.msra.mxu0 0.0
        %1243 = vmatprep.subr.mxu0 0.0
        %1244 = vmatpush1.msra.mxu0 0.0
        %1245 = vmatprep.subr.mxu0 0.0
        %1246 = vmatpush1.msra.mxu0 0.0
        %1247 = vmatprep.subr.mxu0 0.0
        %1248 = vmatpush1.msra.mxu0 0.0
        %1249 = vmatprep.subr.mxu0 0.0
        %1250 = vmatpush1.msra.mxu0 0.0
        %1251 = vmatprep.subr.mxu0 0.0
        %1252 = vmatpush1.msra.mxu0 0.0
        %1253 = vmatprep.subr.mxu0 0.0
        %1254 = vmatpush1.msra.mxu0 0.0
        %1255 = vmatprep.subr.mxu0 0.0
        %1256 = vmatpush1.msra.mxu0 0.0
        %1257 = vmatprep.subr.mxu0 0.0
        %1258 = vmatpush1.msra.mxu0 0.0
        %1259 = vmatprep.subr.mxu0 0.0
        %1260 = vmatpush1.msra.mxu0 0.0
        %1261 = vmatprep.subr.mxu0 0.0
        %1262 = vmatpush1.msra.mxu0 0.0
        %1263 = vmatprep.subr.mxu0 0.0
        %1264 = vmatpush1.msra.mxu0 0.0
        %1265 = vmatprep.mubr.f32.mxu0 0.0
        %1266 = vmatmul.mubr.f32.gmra.mrb[0].mxu0 %v1142
        %v1267 = vpop.f32.mrb[0].mxu0
        %v1268 = vadd.f32 0.0, %v1267
        %v1269 = vpop.f32.mrb[0].mxu0
        %1270 = vmatprep.mubr.f32.mxu0 0.0
        %1271 = vmatmul.mubr.f32.gmra.mrb[0].mxu0 %v1144
        %v1272 = vpop.f32.mrb[0].mxu0
        %v1273 = vadd.f32 0.0, %v1272
        %v1274 = vpop.f32.mrb[0].mxu0
        %1275 = vmatprep.mubr.f32.mxu0 0.0
        %1276 = vmatmul.mubr.f32.gmra.mrb[0].mxu0 %v1146
        %v1277 = vpop.f32.mrb[0].mxu0
        %v1278 = vadd.f32 0.0, %v1277
        %v1279 = vpop.f32.mrb[0].mxu0
        %1280 = vmatprep.mubr.f32.mxu0 0.0
        %1281 = vmatmul.mubr.f32.gmra.mrb[0].mxu0 %v1148
        %v1282 = vpop.f32.mrb[0].mxu0
        %v1283 = vadd.f32 0.0, %v1282
        %v1284 = vpop.f32.mrb[0].mxu0
        %1285 = vmatprep.mubr.f32.mxu0 0.0
        %1286 = vmatmul.mubr.f32.gmra.mrb[0].mxu0 %v1150
        %v1287 = vpop.f32.mrb[0].mxu0
        %v1288 = vadd.f32 0.0, %v1287
        %v1289 = vpop.f32.mrb[0].mxu0
        %1290 = vmatprep.mubr.f32.mxu0 0.0
        %1291 = vmatmul.mubr.f32.gmra.mrb[0].mxu0 %v1152
        %v1292 = vpop.f32.mrb[0].mxu0
        %v1293 = vadd.f32 0.0, %v1292
        %v1294 = vpop.f32.mrb[0].mxu0
        %1295 = vmatprep.mubr.f32.mxu0 0.0
        %1296 = vmatmul.mubr.f32.gmra.mrb[0].mxu0 %v1154
        %v1297 = vpop.f32.mrb[0].mxu0
        %v1298 = vadd.f32 0.0, %v1297
        %v1299 = vpop.f32.mrb[0].mxu0
        %1300 = vmatprep.mubr.f32.mxu0 0.0
        %1301 = vmatmul.mubr.f32.gmra.mrb[0].mxu0 %v1156
        %v1302 = vpop.f32.mrb[0].mxu0
        %v1303 = vadd.f32 0.0, %v1302
        %v1304 = vpop.f32.mrb[0].mxu0
        %1305 = vmatprep.mubr.f32.mxu0 0.0
        %1306 = vmatmul.mubr.f32.gmra.mrb[0].mxu0 %v1158
        %v1307 = vpop.f32.mrb[0].mxu0
        %v1308 = vadd.f32 0.0, %v1307
        %v1309 = vpop.f32.mrb[0].mxu0
        %1310 = vmatprep.mubr.f32.mxu0 0.0
        %1311 = vmatmul.mubr.f32.gmra.mrb[0].mxu0 %v1160
        %v1312 = vpop.f32.mrb[0].mxu0
        %v1313 = vadd.f32 0.0, %v1312
        %v1314 = vpop.f32.mrb[0].mxu0
        %1315 = vmatprep.mubr.f32.mxu0 0.0
        %1316 = vmatmul.mubr.f32.gmra.mrb[0].mxu0 %v1162
        %v1317 = vpop.f32.mrb[0].mxu0
        %v1318 = vadd.f32 0.0, %v1317
        %v1319 = vpop.f32.mrb[0].mxu0
        %1320 = vmatprep.mubr.f32.mxu0 0.0
        %1321 = vmatmul.mubr.f32.gmra.mrb[0].mxu0 %v1164
        %v1322 = vpop.f32.mrb[0].mxu0
        %v1323 = vadd.f32 0.0, %v1322
        %v1324 = vpop.f32.mrb[0].mxu0
        %1325 = vmatprep.mubr.f32.mxu0 0.0
        %1326 = vmatmul.mubr.f32.gmra.mrb[0].mxu0 %v1166
        %v1327 = vpop.f32.mrb[0].mxu0
        %v1328 = vadd.f32 0.0, %v1327
        %v1329 = vpop.f32.mrb[0].mxu0
        %1330 = vmatprep.mubr.f32.mxu0 0.0
        %1331 = vmatmul.mubr.f32.gmra.mrb[0].mxu0 %v1168
        %v1332 = vpop.f32.mrb[0].mxu0
        %v1333 = vadd.f32 0.0, %v1332
        %v1334 = vpop.f32.mrb[0].mxu0
        %1335 = vmatprep.mubr.f32.mxu0 0.0
        %1336 = vmatmul.mubr.f32.gmra.mrb[0].mxu0 %v1170
        %v1337 = vpop.f32.mrb[0].mxu0
        %v1338 = vadd.f32 0.0, %v1337
        %v1339 = vpop.f32.mrb[0].mxu0
        %1340 = vmatprep.mubr.f32.mxu0 0.0
        %1341 = vmatmul.mubr.f32.gmra.mrb[0].mxu0 %v1172
        %v1342 = vpop.f32.mrb[0].mxu0
        %v1343 = vadd.f32 0.0, %v1342
        %v1344 = vpop.f32.mrb[0].mxu0
        %1345 = vmatprep.mubr.f32.mxu0 0.0
        %1346 = vmatmul.mubr.f32.gmra.mrb[0].mxu0 %v1174
        %v1347 = vpop.f32.mrb[0].mxu0
        %v1348 = vadd.f32 0.0, %v1347
        %v1349 = vpop.f32.mrb[0].mxu0
        %1350 = vmatprep.mubr.f32.mxu0 0.0
        %1351 = vmatmul.mubr.f32.gmra.mrb[0].mxu0 %v1176
        %v1352 = vpop.f32.mrb[0].mxu0
        %v1353 = vadd.f32 0.0, %v1352
        %v1354 = vpop.f32.mrb[0].mxu0
        %1355 = vmatprep.mubr.f32.mxu0 0.0
        %1356 = vmatmul.mubr.f32.gmra.mrb[0].mxu0 %v1178
        %v1357 = vpop.f32.mrb[0].mxu0
        %v1358 = vadd.f32 0.0, %v1357
        %v1359 = vpop.f32.mrb[0].mxu0
        %1360 = vmatprep.mubr.f32.mxu0 0.0
        %1361 = vmatmul.mubr.f32.gmra.mrb[0].mxu0 %v1180
        %v1362 = vpop.f32.mrb[0].mxu0
        %v1363 = vadd.f32 0.0, %v1362
        %v1364 = vpop.f32.mrb[0].mxu0
        %1365 = vmatprep.mubr.f32.mxu0 0.0
        %1366 = vmatmul.mubr.f32.gmra.mrb[0].mxu0 %v1182
        %v1367 = vpop.f32.mrb[0].mxu0
        %v1368 = vadd.f32 0.0, %v1367
        %v1369 = vpop.f32.mrb[0].mxu0
        %1370 = vmatprep.mubr.f32.mxu0 0.0
        %1371 = vmatmul.mubr.f32.gmra.mrb[0].mxu0 %v1184
        %v1372 = vpop.f32.mrb[0].mxu0
        %v1373 = vadd.f32 0.0, %v1372
        %v1374 = vpop.f32.mrb[0].mxu0
        %1375 = vmatprep.mubr.f32.mxu0 0.0
        %1376 = vmatmul.mubr.f32.gmra.mrb[0].mxu0 %v1186
        %v1377 = vpop.f32.mrb[0].mxu0
        %v1378 = vadd.f32 0.0, %v1377
        %v1379 = vpop.f32.mrb[0].mxu0
        %1380 = vmatprep.mubr.f32.mxu0 0.0
        %1381 = vmatmul.mubr.f32.gmra.mrb[0].mxu0 %v1188
        %v1382 = vpop.f32.mrb[0].mxu0
        %v1383 = vadd.f32 0.0, %v1382
        %v1384 = vpop.f32.mrb[0].mxu0
        %1385 = vmatprep.mubr.f32.mxu0 0.0
        %1386 = vmatmul.mubr.f32.gmra.mrb[0].mxu0 %v1190
        %v1387 = vpop.f32.mrb[0].mxu0
        %v1388 = vadd.f32 0.0, %v1387
        %v1389 = vpop.f32.mrb[0].mxu0
        %1390 = vmatprep.mubr.f32.mxu0 0.0
        %1391 = vmatmul.mubr.f32.gmra.mrb[0].mxu0 %v1192
        %v1392 = vpop.f32.mrb[0].mxu0
        %v1393 = vadd.f32 0.0, %v1392
        %v1394 = vpop.f32.mrb[0].mxu0
        %1395 = vmatprep.mubr.f32.mxu0 0.0
        %1396 = vmatmul.mubr.f32.gmra.mrb[0].mxu0 %v1194
        %v1397 = vpop.f32.mrb[0].mxu0
        %v1398 = vadd.f32 0.0, %v1397
        %v1399 = vpop.f32.mrb[0].mxu0
        %1400 = vmatprep.mubr.f32.mxu0 0.0
        %1401 = vmatmul.mubr.f32.gmra.mrb[0].mxu0 %v1196
        %v1402 = vpop.f32.mrb[0].mxu0
        %v1403 = vadd.f32 0.0, %v1402
        %v1404 = vpop.f32.mrb[0].mxu0
        %1405 = vdwg.mxu0
        %v1406 = vadd.f32 %v944, %v1268
        %v1407 = vadd.f32 %v949, %v1273
        %v1408 = vadd.f32 %v954, %v1278
        %v1409 = vadd.f32 %v959, %v1283
        %v1410 = vadd.f32 %v964, %v1288
        %v1411 = vadd.f32 %v969, %v1293
        %v1412 = vadd.f32 %v974, %v1298
        %v1413 = vadd.f32 %v979, %v1303
        %v1414 = vadd.f32 %v984, %v1308
        %v1415 = vadd.f32 %v989, %v1313
        %v1416 = vadd.f32 %v994, %v1318
        %v1417 = vadd.f32 %v999, %v1323
        %v1418 = vadd.f32 %v1004, %v1328
        %v1419 = vadd.f32 %v1009, %v1333
        %v1420 = vadd.f32 %v1014, %v1338
        %v1421 = vadd.f32 %v1019, %v1343
        %v1422 = vadd.f32 %v1024, %v1348
        %v1423 = vadd.f32 %v1029, %v1353
        %v1424 = vadd.f32 %v1034, %v1358
        %v1425 = vadd.f32 %v1039, %v1363
        %v1426 = vadd.f32 %v1044, %v1368
        %v1427 = vadd.f32 %v1049, %v1373
        %v1428 = vadd.f32 %v1054, %v1378
        %v1429 = vadd.f32 %v1059, %v1383
        %v1430 = vadd.f32 %v1064, %v1388
        %v1431 = vadd.f32 %v1069, %v1393
        %v1432 = vadd.f32 %v1074, %v1398
        %v1433 = vadd.f32 %v1079, %v1403
        %s1434 = scalar_lea.vmem %s2, 12
        %v1435 = vld [vmem:[%s1434] sm:$0xf]
        %v1436 = vsel %vm552, %v457, 0
        %v1439 = vsel %vm552, %v458, 0
        %v1442 = vsel %vm609, %v1435, 0
        %1444 = vmatprep.subr.mxu0 0.0
        %1445 = vmatpush1.msra.mxu0 %v1442
        %1446 = vmatprep.subr.mxu0 0.0
        %1447 = vmatpush1.msra.mxu0 0.0
        %1448 = vmatprep.subr.mxu0 0.0
        %1449 = vmatpush1.msra.mxu0 0.0
        %1450 = vmatprep.subr.mxu0 0.0
        %1451 = vmatpush1.msra.mxu0 0.0
        %1452 = vmatprep.subr.mxu0 0.0
        %1453 = vmatpush1.msra.mxu0 0.0
        %1454 = vmatprep.subr.mxu0 0.0
        %1455 = vmatpush1.msra.mxu0 0.0
        %1456 = vmatprep.subr.mxu0 0.0
        %1457 = vmatpush1.msra.mxu0 0.0
        %1458 = vmatprep.subr.mxu0 0.0
        %1459 = vmatpush1.msra.mxu0 0.0
        %1460 = vmatprep.subr.mxu0 0.0
        %1461 = vmatpush1.msra.mxu0 0.0
        %1462 = vmatprep.subr.mxu0 0.0
        %1463 = vmatpush1.msra.mxu0 0.0
        %1464 = vmatprep.subr.mxu0 0.0
        %1465 = vmatpush1.msra.mxu0 0.0
        %1466 = vmatprep.subr.mxu0 0.0
        %1467 = vmatpush1.msra.mxu0 0.0
        %1468 = vmatprep.subr.mxu0 0.0
        %1469 = vmatpush1.msra.mxu0 0.0
        %1470 = vmatprep.subr.mxu0 0.0
        %1471 = vmatpush1.msra.mxu0 0.0
        %1472 = vmatprep.subr.mxu0 0.0
        %1473 = vmatpush1.msra.mxu0 0.0
        %1474 = vmatprep.subr.mxu0 0.0
        %1475 = vmatpush1.msra.mxu0 0.0
        %1476 = vmatprep.subr.mxu0 0.0
        %1477 = vmatpush1.msra.mxu0 0.0
        %1478 = vmatprep.subr.mxu0 0.0
        %1479 = vmatpush1.msra.mxu0 0.0
        %1480 = vmatprep.subr.mxu0 0.0
        %1481 = vmatpush1.msra.mxu0 0.0
        %1482 = vmatprep.subr.mxu0 0.0
        %1483 = vmatpush1.msra.mxu0 0.0
        %1484 = vmatprep.subr.mxu0 0.0
        %1485 = vmatpush1.msra.mxu0 0.0
        %1486 = vmatprep.subr.mxu0 0.0
        %1487 = vmatpush1.msra.mxu0 0.0
        %1488 = vmatprep.subr.mxu0 0.0
        %1489 = vmatpush1.msra.mxu0 0.0
        %1490 = vmatprep.subr.mxu0 0.0
        %1491 = vmatpush1.msra.mxu0 0.0
        %1492 = vmatprep.subr.mxu0 0.0
        %1493 = vmatpush1.msra.mxu0 0.0
        %1494 = vmatprep.subr.mxu0 0.0
        %1495 = vmatpush1.msra.mxu0 0.0
        %1496 = vmatprep.subr.mxu0 0.0
        %1497 = vmatpush1.msra.mxu0 0.0
        %1498 = vmatprep.subr.mxu0 0.0
        %1499 = vmatpush1.msra.mxu0 0.0
        %1500 = vmatprep.subr.mxu0 0.0
        %1501 = vmatpush1.msra.mxu0 0.0
        %1502 = vmatprep.subr.mxu0 0.0
        %1503 = vmatpush1.msra.mxu0 0.0
        %1504 = vmatprep.subr.mxu0 0.0
        %1505 = vmatpush1.msra.mxu0 0.0
        %1506 = vmatprep.subr.mxu0 0.0
        %1507 = vmatpush1.msra.mxu0 0.0
        %1508 = vmatprep.mubr.f32.mxu0 0.0
        %1509 = vmatmul.mubr.f32.gmra.mrb[0].mxu0 %v822
        %v1510 = vpop.f32.mrb[0].mxu0
        %v1511 = vadd.f32 0.0, %v1510
        %v1512 = vpop.f32.mrb[0].mxu0
        %1513 = vmatprep.mubr.f32.mxu0 0.0
        %1514 = vmatmul.mubr.f32.gmra.mrb[0].mxu0 %v824
        %v1515 = vpop.f32.mrb[0].mxu0
        %v1516 = vadd.f32 0.0, %v1515
        %v1517 = vpop.f32.mrb[0].mxu0
        %1518 = vmatprep.mubr.f32.mxu0 0.0
        %1519 = vmatmul.mubr.f32.gmra.mrb[0].mxu0 %v826
        %v1520 = vpop.f32.mrb[0].mxu0
        %v1521 = vadd.f32 0.0, %v1520
        %v1522 = vpop.f32.mrb[0].mxu0
        %1523 = vmatprep.mubr.f32.mxu0 0.0
        %1524 = vmatmul.mubr.f32.gmra.mrb[0].mxu0 %v828
        %v1525 = vpop.f32.mrb[0].mxu0
        %v1526 = vadd.f32 0.0, %v1525
        %v1527 = vpop.f32.mrb[0].mxu0
        %1528 = vmatprep.mubr.f32.mxu0 0.0
        %1529 = vmatmul.mubr.f32.gmra.mrb[0].mxu0 %v830
        %v1530 = vpop.f32.mrb[0].mxu0
        %v1531 = vadd.f32 0.0, %v1530
        %v1532 = vpop.f32.mrb[0].mxu0
        %1533 = vmatprep.mubr.f32.mxu0 0.0
        %1534 = vmatmul.mubr.f32.gmra.mrb[0].mxu0 %v832
        %v1535 = vpop.f32.mrb[0].mxu0
        %v1536 = vadd.f32 0.0, %v1535
        %v1537 = vpop.f32.mrb[0].mxu0
        %1538 = vmatprep.mubr.f32.mxu0 0.0
        %1539 = vmatmul.mubr.f32.gmra.mrb[0].mxu0 %v834
        %v1540 = vpop.f32.mrb[0].mxu0
        %v1541 = vadd.f32 0.0, %v1540
        %v1542 = vpop.f32.mrb[0].mxu0
        %1543 = vmatprep.mubr.f32.mxu0 0.0
        %1544 = vmatmul.mubr.f32.gmra.mrb[0].mxu0 %v836
        %v1545 = vpop.f32.mrb[0].mxu0
        %v1546 = vadd.f32 0.0, %v1545
        %v1547 = vpop.f32.mrb[0].mxu0
        %1548 = vmatprep.mubr.f32.mxu0 0.0
        %1549 = vmatmul.mubr.f32.gmra.mrb[0].mxu0 %v838
        %v1550 = vpop.f32.mrb[0].mxu0
        %v1551 = vadd.f32 0.0, %v1550
        %v1552 = vpop.f32.mrb[0].mxu0
        %1553 = vmatprep.mubr.f32.mxu0 0.0
        %1554 = vmatmul.mubr.f32.gmra.mrb[0].mxu0 %v840
        %v1555 = vpop.f32.mrb[0].mxu0
        %v1556 = vadd.f32 0.0, %v1555
        %v1557 = vpop.f32.mrb[0].mxu0
        %1558 = vmatprep.mubr.f32.mxu0 0.0
        %1559 = vmatmul.mubr.f32.gmra.mrb[0].mxu0 %v842
        %v1560 = vpop.f32.mrb[0].mxu0
        %v1561 = vadd.f32 0.0, %v1560
        %v1562 = vpop.f32.mrb[0].mxu0
        %1563 = vmatprep.mubr.f32.mxu0 0.0
        %1564 = vmatmul.mubr.f32.gmra.mrb[0].mxu0 %v844
        %v1565 = vpop.f32.mrb[0].mxu0
        %v1566 = vadd.f32 0.0, %v1565
        %v1567 = vpop.f32.mrb[0].mxu0
        %1568 = vmatprep.mubr.f32.mxu0 0.0
        %1569 = vmatmul.mubr.f32.gmra.mrb[0].mxu0 %v846
        %v1570 = vpop.f32.mrb[0].mxu0
        %v1571 = vadd.f32 0.0, %v1570
        %v1572 = vpop.f32.mrb[0].mxu0
        %1573 = vmatprep.mubr.f32.mxu0 0.0
        %1574 = vmatmul.mubr.f32.gmra.mrb[0].mxu0 %v848
        %v1575 = vpop.f32.mrb[0].mxu0
        %v1576 = vadd.f32 0.0, %v1575
        %v1577 = vpop.f32.mrb[0].mxu0
        %1578 = vmatprep.mubr.f32.mxu0 0.0
        %1579 = vmatmul.mubr.f32.gmra.mrb[0].mxu0 %v850
        %v1580 = vpop.f32.mrb[0].mxu0
        %v1581 = vadd.f32 0.0, %v1580
        %v1582 = vpop.f32.mrb[0].mxu0
        %1583 = vmatprep.mubr.f32.mxu0 0.0
        %1584 = vmatmul.mubr.f32.gmra.mrb[0].mxu0 %v852
        %v1585 = vpop.f32.mrb[0].mxu0
        %v1586 = vadd.f32 0.0, %v1585
        %v1587 = vpop.f32.mrb[0].mxu0
        %1588 = vmatprep.mubr.f32.mxu0 0.0
        %1589 = vmatmul.mubr.f32.gmra.mrb[0].mxu0 %v854
        %v1590 = vpop.f32.mrb[0].mxu0
        %v1591 = vadd.f32 0.0, %v1590
        %v1592 = vpop.f32.mrb[0].mxu0
        %1593 = vmatprep.mubr.f32.mxu0 0.0
        %1594 = vmatmul.mubr.f32.gmra.mrb[0].mxu0 %v856
        %v1595 = vpop.f32.mrb[0].mxu0
        %v1596 = vadd.f32 0.0, %v1595
        %v1597 = vpop.f32.mrb[0].mxu0
        %1598 = vmatprep.mubr.f32.mxu0 0.0
        %1599 = vmatmul.mubr.f32.gmra.mrb[0].mxu0 %v858
        %v1600 = vpop.f32.mrb[0].mxu0
        %v1601 = vadd.f32 0.0, %v1600
        %v1602 = vpop.f32.mrb[0].mxu0
        %1603 = vmatprep.mubr.f32.mxu0 0.0
        %1604 = vmatmul.mubr.f32.gmra.mrb[0].mxu0 %v860
        %v1605 = vpop.f32.mrb[0].mxu0
        %v1606 = vadd.f32 0.0, %v1605
        %v1607 = vpop.f32.mrb[0].mxu0
        %1608 = vmatprep.mubr.f32.mxu0 0.0
        %1609 = vmatmul.mubr.f32.gmra.mrb[0].mxu0 %v862
        %v1610 = vpop.f32.mrb[0].mxu0
        %v1611 = vadd.f32 0.0, %v1610
        %v1612 = vpop.f32.mrb[0].mxu0
        %1613 = vmatprep.mubr.f32.mxu0 0.0
        %1614 = vmatmul.mubr.f32.gmra.mrb[0].mxu0 %v864
        %v1615 = vpop.f32.mrb[0].mxu0
        %v1616 = vadd.f32 0.0, %v1615
        %v1617 = vpop.f32.mrb[0].mxu0
        %1618 = vmatprep.mubr.f32.mxu0 0.0
        %1619 = vmatmul.mubr.f32.gmra.mrb[0].mxu0 %v866
        %v1620 = vpop.f32.mrb[0].mxu0
        %v1621 = vadd.f32 0.0, %v1620
        %v1622 = vpop.f32.mrb[0].mxu0
        %1623 = vmatprep.mubr.f32.mxu0 0.0
        %1624 = vmatmul.mubr.f32.gmra.mrb[0].mxu0 %v868
        %v1625 = vpop.f32.mrb[0].mxu0
        %v1626 = vadd.f32 0.0, %v1625
        %v1627 = vpop.f32.mrb[0].mxu0
        %1628 = vmatprep.mubr.f32.mxu0 0.0
        %1629 = vmatmul.mubr.f32.gmra.mrb[0].mxu0 %v870
        %v1630 = vpop.f32.mrb[0].mxu0
        %v1631 = vadd.f32 0.0, %v1630
        %v1632 = vpop.f32.mrb[0].mxu0
        %1633 = vmatprep.mubr.f32.mxu0 0.0
        %1634 = vmatmul.mubr.f32.gmra.mrb[0].mxu0 %v872
        %v1635 = vpop.f32.mrb[0].mxu0
        %v1636 = vadd.f32 0.0, %v1635
        %v1637 = vpop.f32.mrb[0].mxu0
        %1638 = vmatprep.mubr.f32.mxu0 0.0
        %1639 = vmatmul.mubr.f32.gmra.mrb[0].mxu0 %v1436
        %v1640 = vpop.f32.mrb[0].mxu0
        %v1641 = vadd.f32 0.0, %v1640
        %v1642 = vpop.f32.mrb[0].mxu0
        %1643 = vmatprep.mubr.f32.mxu0 0.0
        %1644 = vmatmul.mubr.f32.gmra.mrb[0].mxu0 %v1439
        %v1645 = vpop.f32.mrb[0].mxu0
        %v1646 = vadd.f32 0.0, %v1645
        %v1647 = vpop.f32.mrb[0].mxu0
        %1648 = vdwg.mxu0
        %v1649 = vadd.f32 %v1406, %v1511
        %v1650 = vadd.f32 %v1407, %v1516
        %v1651 = vadd.f32 %v1408, %v1521
        %v1652 = vadd.f32 %v1409, %v1526
        %v1653 = vadd.f32 %v1410, %v1531
        %v1654 = vadd.f32 %v1411, %v1536
        %v1655 = vadd.f32 %v1412, %v1541
        %v1656 = vadd.f32 %v1413, %v1546
        %v1657 = vadd.f32 %v1414, %v1551
        %v1658 = vadd.f32 %v1415, %v1556
        %v1659 = vadd.f32 %v1416, %v1561
        %v1660 = vadd.f32 %v1417, %v1566
        %v1661 = vadd.f32 %v1418, %v1571
        %v1662 = vadd.f32 %v1419, %v1576
        %v1663 = vadd.f32 %v1420, %v1581
        %v1664 = vadd.f32 %v1421, %v1586
        %v1665 = vadd.f32 %v1422, %v1591
        %v1666 = vadd.f32 %v1423, %v1596
        %v1667 = vadd.f32 %v1424, %v1601
        %v1668 = vadd.f32 %v1425, %v1606
        %v1669 = vadd.f32 %v1426, %v1611
        %v1670 = vadd.f32 %v1427, %v1616
        %v1671 = vadd.f32 %v1428, %v1621
        %v1672 = vadd.f32 %v1429, %v1626
        %v1673 = vadd.f32 %v1430, %v1631
        %v1674 = vadd.f32 %v1431, %v1636
        %v1675 = vadd.f32 %v1432, %v1641
        %v1676 = vadd.f32 %v1433, %v1646
        %s1677 = scalar_lea.vmem %s2, 16
        %v1678 = vld [vmem:[%s1677] sm:$0xf]
        %v1680 = vrot.slane %v458, 1
        %v1681 = vsel %vm494, %v550, %v1680
        %v1682 = vrot.slane %v459, 1
        %v1683 = vsel %vm494, %v1680, %v1682
        %v1684 = vsel %vm552, %v1681, 0
        %v1686 = vsel %vm552, %v1683, 0
        %v1689 = vsel %vm609, %v1678, 0
        %1691 = vmatprep.subr.mxu0 0.0
        %1692 = vmatpush1.msra.mxu0 %v1689
        %1693 = vmatprep.subr.mxu0 0.0
        %1694 = vmatpush1.msra.mxu0 0.0
        %1695 = vmatprep.subr.mxu0 0.0
        %1696 = vmatpush1.msra.mxu0 0.0
        %1697 = vmatprep.subr.mxu0 0.0
        %1698 = vmatpush1.msra.mxu0 0.0
        %1699 = vmatprep.subr.mxu0 0.0
        %1700 = vmatpush1.msra.mxu0 0.0
        %1701 = vmatprep.subr.mxu0 0.0
        %1702 = vmatpush1.msra.mxu0 0.0
        %1703 = vmatprep.subr.mxu0 0.0
        %1704 = vmatpush1.msra.mxu0 0.0
        %1705 = vmatprep.subr.mxu0 0.0
        %1706 = vmatpush1.msra.mxu0 0.0
        %1707 = vmatprep.subr.mxu0 0.0
        %1708 = vmatpush1.msra.mxu0 0.0
        %1709 = vmatprep.subr.mxu0 0.0
        %1710 = vmatpush1.msra.mxu0 0.0
        %1711 = vmatprep.subr.mxu0 0.0
        %1712 = vmatpush1.msra.mxu0 0.0
        %1713 = vmatprep.subr.mxu0 0.0
        %1714 = vmatpush1.msra.mxu0 0.0
        %1715 = vmatprep.subr.mxu0 0.0
        %1716 = vmatpush1.msra.mxu0 0.0
        %1717 = vmatprep.subr.mxu0 0.0
        %1718 = vmatpush1.msra.mxu0 0.0
        %1719 = vmatprep.subr.mxu0 0.0
        %1720 = vmatpush1.msra.mxu0 0.0
        %1721 = vmatprep.subr.mxu0 0.0
        %1722 = vmatpush1.msra.mxu0 0.0
        %1723 = vmatprep.subr.mxu0 0.0
        %1724 = vmatpush1.msra.mxu0 0.0
        %1725 = vmatprep.subr.mxu0 0.0
        %1726 = vmatpush1.msra.mxu0 0.0
        %1727 = vmatprep.subr.mxu0 0.0
        %1728 = vmatpush1.msra.mxu0 0.0
        %1729 = vmatprep.subr.mxu0 0.0
        %1730 = vmatpush1.msra.mxu0 0.0
        %1731 = vmatprep.subr.mxu0 0.0
        %1732 = vmatpush1.msra.mxu0 0.0
        %1733 = vmatprep.subr.mxu0 0.0
        %1734 = vmatpush1.msra.mxu0 0.0
        %1735 = vmatprep.subr.mxu0 0.0
        %1736 = vmatpush1.msra.mxu0 0.0
        %1737 = vmatprep.subr.mxu0 0.0
        %1738 = vmatpush1.msra.mxu0 0.0
        %1739 = vmatprep.subr.mxu0 0.0
        %1740 = vmatpush1.msra.mxu0 0.0
        %1741 = vmatprep.subr.mxu0 0.0
        %1742 = vmatpush1.msra.mxu0 0.0
        %1743 = vmatprep.subr.mxu0 0.0
        %1744 = vmatpush1.msra.mxu0 0.0
        %1745 = vmatprep.subr.mxu0 0.0
        %1746 = vmatpush1.msra.mxu0 0.0
        %1747 = vmatprep.subr.mxu0 0.0
        %1748 = vmatpush1.msra.mxu0 0.0
        %1749 = vmatprep.subr.mxu0 0.0
        %1750 = vmatpush1.msra.mxu0 0.0
        %1751 = vmatprep.subr.mxu0 0.0
        %1752 = vmatpush1.msra.mxu0 0.0
        %1753 = vmatprep.subr.mxu0 0.0
        %1754 = vmatpush1.msra.mxu0 0.0
        %1755 = vmatprep.mubr.f32.mxu0 0.0
        %1756 = vmatmul.mubr.f32.gmra.mrb[0].mxu0 %v557
        %v1757 = vpop.f32.mrb[0].mxu0
        %v1758 = vadd.f32 0.0, %v1757
        %v1759 = vpop.f32.mrb[0].mxu0
        %1760 = vmatprep.mubr.f32.mxu0 0.0
        %1761 = vmatmul.mubr.f32.gmra.mrb[0].mxu0 %v559
        %v1762 = vpop.f32.mrb[0].mxu0
        %v1763 = vadd.f32 0.0, %v1762
        %v1764 = vpop.f32.mrb[0].mxu0
        %1765 = vmatprep.mubr.f32.mxu0 0.0
        %1766 = vmatmul.mubr.f32.gmra.mrb[0].mxu0 %v561
        %v1767 = vpop.f32.mrb[0].mxu0
        %v1768 = vadd.f32 0.0, %v1767
        %v1769 = vpop.f32.mrb[0].mxu0
        %1770 = vmatprep.mubr.f32.mxu0 0.0
        %1771 = vmatmul.mubr.f32.gmra.mrb[0].mxu0 %v563
        %v1772 = vpop.f32.mrb[0].mxu0
        %v1773 = vadd.f32 0.0, %v1772
        %v1774 = vpop.f32.mrb[0].mxu0
        %1775 = vmatprep.mubr.f32.mxu0 0.0
        %1776 = vmatmul.mubr.f32.gmra.mrb[0].mxu0 %v565
        %v1777 = vpop.f32.mrb[0].mxu0
        %v1778 = vadd.f32 0.0, %v1777
        %v1779 = vpop.f32.mrb[0].mxu0
        %1780 = vmatprep.mubr.f32.mxu0 0.0
        %1781 = vmatmul.mubr.f32.gmra.mrb[0].mxu0 %v567
        %v1782 = vpop.f32.mrb[0].mxu0
        %v1783 = vadd.f32 0.0, %v1782
        %v1784 = vpop.f32.mrb[0].mxu0
        %1785 = vmatprep.mubr.f32.mxu0 0.0
        %1786 = vmatmul.mubr.f32.gmra.mrb[0].mxu0 %v569
        %v1787 = vpop.f32.mrb[0].mxu0
        %v1788 = vadd.f32 0.0, %v1787
        %v1789 = vpop.f32.mrb[0].mxu0
        %1790 = vmatprep.mubr.f32.mxu0 0.0
        %1791 = vmatmul.mubr.f32.gmra.mrb[0].mxu0 %v571
        %v1792 = vpop.f32.mrb[0].mxu0
        %v1793 = vadd.f32 0.0, %v1792
        %v1794 = vpop.f32.mrb[0].mxu0
        %1795 = vmatprep.mubr.f32.mxu0 0.0
        %1796 = vmatmul.mubr.f32.gmra.mrb[0].mxu0 %v573
        %v1797 = vpop.f32.mrb[0].mxu0
        %v1798 = vadd.f32 0.0, %v1797
        %v1799 = vpop.f32.mrb[0].mxu0
        %1800 = vmatprep.mubr.f32.mxu0 0.0
        %1801 = vmatmul.mubr.f32.gmra.mrb[0].mxu0 %v575
        %v1802 = vpop.f32.mrb[0].mxu0
        %v1803 = vadd.f32 0.0, %v1802
        %v1804 = vpop.f32.mrb[0].mxu0
        %1805 = vmatprep.mubr.f32.mxu0 0.0
        %1806 = vmatmul.mubr.f32.gmra.mrb[0].mxu0 %v577
        %v1807 = vpop.f32.mrb[0].mxu0
        %v1808 = vadd.f32 0.0, %v1807
        %v1809 = vpop.f32.mrb[0].mxu0
        %1810 = vmatprep.mubr.f32.mxu0 0.0
        %1811 = vmatmul.mubr.f32.gmra.mrb[0].mxu0 %v579
        %v1812 = vpop.f32.mrb[0].mxu0
        %v1813 = vadd.f32 0.0, %v1812
        %v1814 = vpop.f32.mrb[0].mxu0
        %1815 = vmatprep.mubr.f32.mxu0 0.0
        %1816 = vmatmul.mubr.f32.gmra.mrb[0].mxu0 %v581
        %v1817 = vpop.f32.mrb[0].mxu0
        %v1818 = vadd.f32 0.0, %v1817
        %v1819 = vpop.f32.mrb[0].mxu0
        %1820 = vmatprep.mubr.f32.mxu0 0.0
        %1821 = vmatmul.mubr.f32.gmra.mrb[0].mxu0 %v583
        %v1822 = vpop.f32.mrb[0].mxu0
        %v1823 = vadd.f32 0.0, %v1822
        %v1824 = vpop.f32.mrb[0].mxu0
        %1825 = vmatprep.mubr.f32.mxu0 0.0
        %1826 = vmatmul.mubr.f32.gmra.mrb[0].mxu0 %v585
        %v1827 = vpop.f32.mrb[0].mxu0
        %v1828 = vadd.f32 0.0, %v1827
        %v1829 = vpop.f32.mrb[0].mxu0
        %1830 = vmatprep.mubr.f32.mxu0 0.0
        %1831 = vmatmul.mubr.f32.gmra.mrb[0].mxu0 %v587
        %v1832 = vpop.f32.mrb[0].mxu0
        %v1833 = vadd.f32 0.0, %v1832
        %v1834 = vpop.f32.mrb[0].mxu0
        %1835 = vmatprep.mubr.f32.mxu0 0.0
        %1836 = vmatmul.mubr.f32.gmra.mrb[0].mxu0 %v589
        %v1837 = vpop.f32.mrb[0].mxu0
        %v1838 = vadd.f32 0.0, %v1837
        %v1839 = vpop.f32.mrb[0].mxu0
        %1840 = vmatprep.mubr.f32.mxu0 0.0
        %1841 = vmatmul.mubr.f32.gmra.mrb[0].mxu0 %v591
        %v1842 = vpop.f32.mrb[0].mxu0
        %v1843 = vadd.f32 0.0, %v1842
        %v1844 = vpop.f32.mrb[0].mxu0
        %1845 = vmatprep.mubr.f32.mxu0 0.0
        %1846 = vmatmul.mubr.f32.gmra.mrb[0].mxu0 %v593
        %v1847 = vpop.f32.mrb[0].mxu0
        %v1848 = vadd.f32 0.0, %v1847
        %v1849 = vpop.f32.mrb[0].mxu0
        %1850 = vmatprep.mubr.f32.mxu0 0.0
        %1851 = vmatmul.mubr.f32.gmra.mrb[0].mxu0 %v595
        %v1852 = vpop.f32.mrb[0].mxu0
        %v1853 = vadd.f32 0.0, %v1852
        %v1854 = vpop.f32.mrb[0].mxu0
        %1855 = vmatprep.mubr.f32.mxu0 0.0
        %1856 = vmatmul.mubr.f32.gmra.mrb[0].mxu0 %v597
        %v1857 = vpop.f32.mrb[0].mxu0
        %v1858 = vadd.f32 0.0, %v1857
        %v1859 = vpop.f32.mrb[0].mxu0
        %1860 = vmatprep.mubr.f32.mxu0 0.0
        %1861 = vmatmul.mubr.f32.gmra.mrb[0].mxu0 %v599
        %v1862 = vpop.f32.mrb[0].mxu0
        %v1863 = vadd.f32 0.0, %v1862
        %v1864 = vpop.f32.mrb[0].mxu0
        %1865 = vmatprep.mubr.f32.mxu0 0.0
        %1866 = vmatmul.mubr.f32.gmra.mrb[0].mxu0 %v601
        %v1867 = vpop.f32.mrb[0].mxu0
        %v1868 = vadd.f32 0.0, %v1867
        %v1869 = vpop.f32.mrb[0].mxu0
        %1870 = vmatprep.mubr.f32.mxu0 0.0
        %1871 = vmatmul.mubr.f32.gmra.mrb[0].mxu0 %v603
        %v1872 = vpop.f32.mrb[0].mxu0
        %v1873 = vadd.f32 0.0, %v1872
        %v1874 = vpop.f32.mrb[0].mxu0
        %1875 = vmatprep.mubr.f32.mxu0 0.0
        %1876 = vmatmul.mubr.f32.gmra.mrb[0].mxu0 %v605
        %v1877 = vpop.f32.mrb[0].mxu0
        %v1878 = vadd.f32 0.0, %v1877
        %v1879 = vpop.f32.mrb[0].mxu0
        %1880 = vmatprep.mubr.f32.mxu0 0.0
        %1881 = vmatmul.mubr.f32.gmra.mrb[0].mxu0 %v607
        %v1882 = vpop.f32.mrb[0].mxu0
        %v1883 = vadd.f32 0.0, %v1882
        %v1884 = vpop.f32.mrb[0].mxu0
        %1885 = vmatprep.mubr.f32.mxu0 0.0
        %1886 = vmatmul.mubr.f32.gmra.mrb[0].mxu0 %v1684
        %v1887 = vpop.f32.mrb[0].mxu0
        %v1888 = vadd.f32 0.0, %v1887
        %v1889 = vpop.f32.mrb[0].mxu0
        %1890 = vmatprep.mubr.f32.mxu0 0.0
        %1891 = vmatmul.mubr.f32.gmra.mrb[0].mxu0 %v1686
        %v1892 = vpop.f32.mrb[0].mxu0
        %v1893 = vadd.f32 0.0, %v1892
        %v1894 = vpop.f32.mrb[0].mxu0
        %1895 = vdwg.mxu0
        %v1896 = vadd.f32 %v1649, %v1758
        %v1897 = vadd.f32 %v1650, %v1763
        %v1898 = vadd.f32 %v1651, %v1768
        %v1899 = vadd.f32 %v1652, %v1773
        %v1900 = vadd.f32 %v1653, %v1778
        %v1901 = vadd.f32 %v1654, %v1783
        %v1902 = vadd.f32 %v1655, %v1788
        %v1903 = vadd.f32 %v1656, %v1793
        %v1904 = vadd.f32 %v1657, %v1798
        %v1905 = vadd.f32 %v1658, %v1803
        %v1906 = vadd.f32 %v1659, %v1808
        %v1907 = vadd.f32 %v1660, %v1813
        %v1908 = vadd.f32 %v1661, %v1818
        %v1909 = vadd.f32 %v1662, %v1823
        %v1910 = vadd.f32 %v1663, %v1828
        %v1911 = vadd.f32 %v1664, %v1833
        %v1912 = vadd.f32 %v1665, %v1838
        %v1913 = vadd.f32 %v1666, %v1843
        %v1914 = vadd.f32 %v1667, %v1848
        %v1915 = vadd.f32 %v1668, %v1853
        %v1916 = vadd.f32 %v1669, %v1858
        %v1917 = vadd.f32 %v1670, %v1863
        %v1918 = vadd.f32 %v1671, %v1868
        %v1919 = vadd.f32 %v1672, %v1873
        %v1920 = vadd.f32 %v1673, %v1878
        %v1921 = vadd.f32 %v1674, %v1883
        %v1922 = vadd.f32 %v1675, %v1888
        %v1923 = vadd.f32 %v1676, %v1893
        %s1924 = scalar_lea.vmem %s2, 20
        %v1925 = vld [vmem:[%s1924] sm:$0xf]
        %v1926 = vrot.slane %v458, 2
        %v1927 = vsel %vm1084, %v1140, %v1926
        %v1928 = vrot.slane %v459, 2
        %v1929 = vsel %vm1084, %v1926, %v1928
        %v1930 = vsel %vm552, %v1927, 0
        %v1932 = vsel %vm552, %v1929, 0
        %v1935 = vsel %vm609, %v1925, 0
        %1937 = vmatprep.subr.mxu0 0.0
        %1938 = vmatpush1.msra.mxu0 %v1935
        %1939 = vmatprep.subr.mxu0 0.0
        %1940 = vmatpush1.msra.mxu0 0.0
        %1941 = vmatprep.subr.mxu0 0.0
        %1942 = vmatpush1.msra.mxu0 0.0
        %1943 = vmatprep.subr.mxu0 0.0
        %1944 = vmatpush1.msra.mxu0 0.0
        %1945 = vmatprep.subr.mxu0 0.0
        %1946 = vmatpush1.msra.mxu0 0.0
        %1947 = vmatprep.subr.mxu0 0.0
        %1948 = vmatpush1.msra.mxu0 0.0
        %1949 = vmatprep.subr.mxu0 0.0
        %1950 = vmatpush1.msra.mxu0 0.0
        %1951 = vmatprep.subr.mxu0 0.0
        %1952 = vmatpush1.msra.mxu0 0.0
        %1953 = vmatprep.subr.mxu0 0.0
        %1954 = vmatpush1.msra.mxu0 0.0
        %1955 = vmatprep.subr.mxu0 0.0
        %1956 = vmatpush1.msra.mxu0 0.0
        %1957 = vmatprep.subr.mxu0 0.0
        %1958 = vmatpush1.msra.mxu0 0.0
        %1959 = vmatprep.subr.mxu0 0.0
        %1960 = vmatpush1.msra.mxu0 0.0
        %1961 = vmatprep.subr.mxu0 0.0
        %1962 = vmatpush1.msra.mxu0 0.0
        %1963 = vmatprep.subr.mxu0 0.0
        %1964 = vmatpush1.msra.mxu0 0.0
        %1965 = vmatprep.subr.mxu0 0.0
        %1966 = vmatpush1.msra.mxu0 0.0
        %1967 = vmatprep.subr.mxu0 0.0
        %1968 = vmatpush1.msra.mxu0 0.0
        %1969 = vmatprep.subr.mxu0 0.0
        %1970 = vmatpush1.msra.mxu0 0.0
        %1971 = vmatprep.subr.mxu0 0.0
        %1972 = vmatpush1.msra.mxu0 0.0
        %1973 = vmatprep.subr.mxu0 0.0
        %1974 = vmatpush1.msra.mxu0 0.0
        %1975 = vmatprep.subr.mxu0 0.0
        %1976 = vmatpush1.msra.mxu0 0.0
        %1977 = vmatprep.subr.mxu0 0.0
        %1978 = vmatpush1.msra.mxu0 0.0
        %1979 = vmatprep.subr.mxu0 0.0
        %1980 = vmatpush1.msra.mxu0 0.0
        %1981 = vmatprep.subr.mxu0 0.0
        %1982 = vmatpush1.msra.mxu0 0.0
        %1983 = vmatprep.subr.mxu0 0.0
        %1984 = vmatpush1.msra.mxu0 0.0
        %1985 = vmatprep.subr.mxu0 0.0
        %1986 = vmatpush1.msra.mxu0 0.0
        %1987 = vmatprep.subr.mxu0 0.0
        %1988 = vmatpush1.msra.mxu0 0.0
        %1989 = vmatprep.subr.mxu0 0.0
        %1990 = vmatpush1.msra.mxu0 0.0
        %1991 = vmatprep.subr.mxu0 0.0
        %1992 = vmatpush1.msra.mxu0 0.0
        %1993 = vmatprep.subr.mxu0 0.0
        %1994 = vmatpush1.msra.mxu0 0.0
        %1995 = vmatprep.subr.mxu0 0.0
        %1996 = vmatpush1.msra.mxu0 0.0
        %1997 = vmatprep.subr.mxu0 0.0
        %1998 = vmatpush1.msra.mxu0 0.0
        %1999 = vmatprep.subr.mxu0 0.0
        %2000 = vmatpush1.msra.mxu0 0.0
        %2001 = vmatprep.mubr.f32.mxu0 0.0
        %2002 = vmatmul.mubr.f32.gmra.mrb[0].mxu0 %v1146
        %v2003 = vpop.f32.mrb[0].mxu0
        %v2004 = vadd.f32 0.0, %v2003
        %v2005 = vpop.f32.mrb[0].mxu0
        %2006 = vmatprep.mubr.f32.mxu0 0.0
        %2007 = vmatmul.mubr.f32.gmra.mrb[0].mxu0 %v1148
        %v2008 = vpop.f32.mrb[0].mxu0
        %v2009 = vadd.f32 0.0, %v2008
        %v2010 = vpop.f32.mrb[0].mxu0
        %2011 = vmatprep.mubr.f32.mxu0 0.0
        %2012 = vmatmul.mubr.f32.gmra.mrb[0].mxu0 %v1150
        %v2013 = vpop.f32.mrb[0].mxu0
        %v2014 = vadd.f32 0.0, %v2013
        %v2015 = vpop.f32.mrb[0].mxu0
        %2016 = vmatprep.mubr.f32.mxu0 0.0
        %2017 = vmatmul.mubr.f32.gmra.mrb[0].mxu0 %v1152
        %v2018 = vpop.f32.mrb[0].mxu0
        %v2019 = vadd.f32 0.0, %v2018
        %v2020 = vpop.f32.mrb[0].mxu0
        %2021 = vmatprep.mubr.f32.mxu0 0.0
        %2022 = vmatmul.mubr.f32.gmra.mrb[0].mxu0 %v1154
        %v2023 = vpop.f32.mrb[0].mxu0
        %v2024 = vadd.f32 0.0, %v2023
        %v2025 = vpop.f32.mrb[0].mxu0
        %2026 = vmatprep.mubr.f32.mxu0 0.0
        %2027 = vmatmul.mubr.f32.gmra.mrb[0].mxu0 %v1156
        %v2028 = vpop.f32.mrb[0].mxu0
        %v2029 = vadd.f32 0.0, %v2028
        %v2030 = vpop.f32.mrb[0].mxu0
        %2031 = vmatprep.mubr.f32.mxu0 0.0
        %2032 = vmatmul.mubr.f32.gmra.mrb[0].mxu0 %v1158
        %v2033 = vpop.f32.mrb[0].mxu0
        %v2034 = vadd.f32 0.0, %v2033
        %v2035 = vpop.f32.mrb[0].mxu0
        %2036 = vmatprep.mubr.f32.mxu0 0.0
        %2037 = vmatmul.mubr.f32.gmra.mrb[0].mxu0 %v1160
        %v2038 = vpop.f32.mrb[0].mxu0
        %v2039 = vadd.f32 0.0, %v2038
        %v2040 = vpop.f32.mrb[0].mxu0
        %2041 = vmatprep.mubr.f32.mxu0 0.0
        %2042 = vmatmul.mubr.f32.gmra.mrb[0].mxu0 %v1162
        %v2043 = vpop.f32.mrb[0].mxu0
        %v2044 = vadd.f32 0.0, %v2043
        %v2045 = vpop.f32.mrb[0].mxu0
        %2046 = vmatprep.mubr.f32.mxu0 0.0
        %2047 = vmatmul.mubr.f32.gmra.mrb[0].mxu0 %v1164
        %v2048 = vpop.f32.mrb[0].mxu0
        %v2049 = vadd.f32 0.0, %v2048
        %v2050 = vpop.f32.mrb[0].mxu0
        %2051 = vmatprep.mubr.f32.mxu0 0.0
        %2052 = vmatmul.mubr.f32.gmra.mrb[0].mxu0 %v1166
        %v2053 = vpop.f32.mrb[0].mxu0
        %v2054 = vadd.f32 0.0, %v2053
        %v2055 = vpop.f32.mrb[0].mxu0
        %2056 = vmatprep.mubr.f32.mxu0 0.0
        %2057 = vmatmul.mubr.f32.gmra.mrb[0].mxu0 %v1168
        %v2058 = vpop.f32.mrb[0].mxu0
        %v2059 = vadd.f32 0.0, %v2058
        %v2060 = vpop.f32.mrb[0].mxu0
        %2061 = vmatprep.mubr.f32.mxu0 0.0
        %2062 = vmatmul.mubr.f32.gmra.mrb[0].mxu0 %v1170
        %v2063 = vpop.f32.mrb[0].mxu0
        %v2064 = vadd.f32 0.0, %v2063
        %v2065 = vpop.f32.mrb[0].mxu0
        %2066 = vmatprep.mubr.f32.mxu0 0.0
        %2067 = vmatmul.mubr.f32.gmra.mrb[0].mxu0 %v1172
        %v2068 = vpop.f32.mrb[0].mxu0
        %v2069 = vadd.f32 0.0, %v2068
        %v2070 = vpop.f32.mrb[0].mxu0
        %2071 = vmatprep.mubr.f32.mxu0 0.0
        %2072 = vmatmul.mubr.f32.gmra.mrb[0].mxu0 %v1174
        %v2073 = vpop.f32.mrb[0].mxu0
        %v2074 = vadd.f32 0.0, %v2073
        %v2075 = vpop.f32.mrb[0].mxu0
        %2076 = vmatprep.mubr.f32.mxu0 0.0
        %2077 = vmatmul.mubr.f32.gmra.mrb[0].mxu0 %v1176
        %v2078 = vpop.f32.mrb[0].mxu0
        %v2079 = vadd.f32 0.0, %v2078
        %v2080 = vpop.f32.mrb[0].mxu0
        %2081 = vmatprep.mubr.f32.mxu0 0.0
        %2082 = vmatmul.mubr.f32.gmra.mrb[0].mxu0 %v1178
        %v2083 = vpop.f32.mrb[0].mxu0
        %v2084 = vadd.f32 0.0, %v2083
        %v2085 = vpop.f32.mrb[0].mxu0
        %2086 = vmatprep.mubr.f32.mxu0 0.0
        %2087 = vmatmul.mubr.f32.gmra.mrb[0].mxu0 %v1180
        %v2088 = vpop.f32.mrb[0].mxu0
        %v2089 = vadd.f32 0.0, %v2088
        %v2090 = vpop.f32.mrb[0].mxu0
        %2091 = vmatprep.mubr.f32.mxu0 0.0
        %2092 = vmatmul.mubr.f32.gmra.mrb[0].mxu0 %v1182
        %v2093 = vpop.f32.mrb[0].mxu0
        %v2094 = vadd.f32 0.0, %v2093
        %v2095 = vpop.f32.mrb[0].mxu0
        %2096 = vmatprep.mubr.f32.mxu0 0.0
        %2097 = vmatmul.mubr.f32.gmra.mrb[0].mxu0 %v1184
        %v2098 = vpop.f32.mrb[0].mxu0
        %v2099 = vadd.f32 0.0, %v2098
        %v2100 = vpop.f32.mrb[0].mxu0
        %2101 = vmatprep.mubr.f32.mxu0 0.0
        %2102 = vmatmul.mubr.f32.gmra.mrb[0].mxu0 %v1186
        %v2103 = vpop.f32.mrb[0].mxu0
        %v2104 = vadd.f32 0.0, %v2103
        %v2105 = vpop.f32.mrb[0].mxu0
        %2106 = vmatprep.mubr.f32.mxu0 0.0
        %2107 = vmatmul.mubr.f32.gmra.mrb[0].mxu0 %v1188
        %v2108 = vpop.f32.mrb[0].mxu0
        %v2109 = vadd.f32 0.0, %v2108
        %v2110 = vpop.f32.mrb[0].mxu0
        %2111 = vmatprep.mubr.f32.mxu0 0.0
        %2112 = vmatmul.mubr.f32.gmra.mrb[0].mxu0 %v1190
        %v2113 = vpop.f32.mrb[0].mxu0
        %v2114 = vadd.f32 0.0, %v2113
        %v2115 = vpop.f32.mrb[0].mxu0
        %2116 = vmatprep.mubr.f32.mxu0 0.0
        %2117 = vmatmul.mubr.f32.gmra.mrb[0].mxu0 %v1192
        %v2118 = vpop.f32.mrb[0].mxu0
        %v2119 = vadd.f32 0.0, %v2118
        %v2120 = vpop.f32.mrb[0].mxu0
        %2121 = vmatprep.mubr.f32.mxu0 0.0
        %2122 = vmatmul.mubr.f32.gmra.mrb[0].mxu0 %v1194
        %v2123 = vpop.f32.mrb[0].mxu0
        %v2124 = vadd.f32 0.0, %v2123
        %v2125 = vpop.f32.mrb[0].mxu0
        %2126 = vmatprep.mubr.f32.mxu0 0.0
        %2127 = vmatmul.mubr.f32.gmra.mrb[0].mxu0 %v1196
        %v2128 = vpop.f32.mrb[0].mxu0
        %v2129 = vadd.f32 0.0, %v2128
        %v2130 = vpop.f32.mrb[0].mxu0
        %2131 = vmatprep.mubr.f32.mxu0 0.0
        %2132 = vmatmul.mubr.f32.gmra.mrb[0].mxu0 %v1930
        %v2133 = vpop.f32.mrb[0].mxu0
        %v2134 = vadd.f32 0.0, %v2133
        %v2135 = vpop.f32.mrb[0].mxu0
        %2136 = vmatprep.mubr.f32.mxu0 0.0
        %2137 = vmatmul.mubr.f32.gmra.mrb[0].mxu0 %v1932
        %v2138 = vpop.f32.mrb[0].mxu0
        %v2139 = vadd.f32 0.0, %v2138
        %v2140 = vpop.f32.mrb[0].mxu0
        %2141 = vdwg.mxu0
        %v2142 = vadd.f32 %v1896, %v2004
        %v2143 = vadd.f32 %v1897, %v2009
        %v2144 = vadd.f32 %v1898, %v2014
        %v2145 = vadd.f32 %v1899, %v2019
        %v2146 = vadd.f32 %v1900, %v2024
        %v2147 = vadd.f32 %v1901, %v2029
        %v2148 = vadd.f32 %v1902, %v2034
        %v2149 = vadd.f32 %v1903, %v2039
        %v2150 = vadd.f32 %v1904, %v2044
        %v2151 = vadd.f32 %v1905, %v2049
        %v2152 = vadd.f32 %v1906, %v2054
        %v2153 = vadd.f32 %v1907, %v2059
        %v2154 = vadd.f32 %v1908, %v2064
        %v2155 = vadd.f32 %v1909, %v2069
        %v2156 = vadd.f32 %v1910, %v2074
        %v2157 = vadd.f32 %v1911, %v2079
        %v2158 = vadd.f32 %v1912, %v2084
        %v2159 = vadd.f32 %v1913, %v2089
        %v2160 = vadd.f32 %v1914, %v2094
        %v2161 = vadd.f32 %v1915, %v2099
        %v2162 = vadd.f32 %v1916, %v2104
        %v2163 = vadd.f32 %v1917, %v2109
        %v2164 = vadd.f32 %v1918, %v2114
        %v2165 = vadd.f32 %v1919, %v2119
        %v2166 = vadd.f32 %v1920, %v2124
        %v2167 = vadd.f32 %v1921, %v2129
        %v2168 = vadd.f32 %v1922, %v2134
        %v2169 = vadd.f32 %v1923, %v2139
        %s2170 = scalar_lea.vmem %s2, 24
        %v2171 = vld [vmem:[%s2170] sm:$0xf]
        %v2172 = vsel %vm552, %v459, 0
        %v2175 = vsel %vm552, %v460, 0
        %v2178 = vsel %vm609, %v2171, 0
        %2180 = vmatprep.subr.mxu0 0.0
        %2181 = vmatpush1.msra.mxu0 %v2178
        %2182 = vmatprep.subr.mxu0 0.0
        %2183 = vmatpush1.msra.mxu0 0.0
        %2184 = vmatprep.subr.mxu0 0.0
        %2185 = vmatpush1.msra.mxu0 0.0
        %2186 = vmatprep.subr.mxu0 0.0
        %2187 = vmatpush1.msra.mxu0 0.0
        %2188 = vmatprep.subr.mxu0 0.0
        %2189 = vmatpush1.msra.mxu0 0.0
        %2190 = vmatprep.subr.mxu0 0.0
        %2191 = vmatpush1.msra.mxu0 0.0
        %2192 = vmatprep.subr.mxu0 0.0
        %2193 = vmatpush1.msra.mxu0 0.0
        %2194 = vmatprep.subr.mxu0 0.0
        %2195 = vmatpush1.msra.mxu0 0.0
        %2196 = vmatprep.subr.mxu0 0.0
        %2197 = vmatpush1.msra.mxu0 0.0
        %2198 = vmatprep.subr.mxu0 0.0
        %2199 = vmatpush1.msra.mxu0 0.0
        %2200 = vmatprep.subr.mxu0 0.0
        %2201 = vmatpush1.msra.mxu0 0.0
        %2202 = vmatprep.subr.mxu0 0.0
        %2203 = vmatpush1.msra.mxu0 0.0
        %2204 = vmatprep.subr.mxu0 0.0
        %2205 = vmatpush1.msra.mxu0 0.0
        %2206 = vmatprep.subr.mxu0 0.0
        %2207 = vmatpush1.msra.mxu0 0.0
        %2208 = vmatprep.subr.mxu0 0.0
        %2209 = vmatpush1.msra.mxu0 0.0
        %2210 = vmatprep.subr.mxu0 0.0
        %2211 = vmatpush1.msra.mxu0 0.0
        %2212 = vmatprep.subr.mxu0 0.0
        %2213 = vmatpush1.msra.mxu0 0.0
        %2214 = vmatprep.subr.mxu0 0.0
        %2215 = vmatpush1.msra.mxu0 0.0
        %2216 = vmatprep.subr.mxu0 0.0
        %2217 = vmatpush1.msra.mxu0 0.0
        %2218 = vmatprep.subr.mxu0 0.0
        %2219 = vmatpush1.msra.mxu0 0.0
        %2220 = vmatprep.subr.mxu0 0.0
        %2221 = vmatpush1.msra.mxu0 0.0
        %2222 = vmatprep.subr.mxu0 0.0
        %2223 = vmatpush1.msra.mxu0 0.0
        %2224 = vmatprep.subr.mxu0 0.0
        %2225 = vmatpush1.msra.mxu0 0.0
        %2226 = vmatprep.subr.mxu0 0.0
        %2227 = vmatpush1.msra.mxu0 0.0
        %2228 = vmatprep.subr.mxu0 0.0
        %2229 = vmatpush1.msra.mxu0 0.0
        %2230 = vmatprep.subr.mxu0 0.0
        %2231 = vmatpush1.msra.mxu0 0.0
        %2232 = vmatprep.subr.mxu0 0.0
        %2233 = vmatpush1.msra.mxu0 0.0
        %2234 = vmatprep.subr.mxu0 0.0
        %2235 = vmatpush1.msra.mxu0 0.0
        %2236 = vmatprep.subr.mxu0 0.0
        %2237 = vmatpush1.msra.mxu0 0.0
        %2238 = vmatprep.subr.mxu0 0.0
        %2239 = vmatpush1.msra.mxu0 0.0
        %2240 = vmatprep.subr.mxu0 0.0
        %2241 = vmatpush1.msra.mxu0 0.0
        %2242 = vmatprep.subr.mxu0 0.0
        %2243 = vmatpush1.msra.mxu0 0.0
        %2244 = vmatprep.mubr.f32.mxu0 0.0
        %2245 = vmatmul.mubr.f32.gmra.mrb[0].mxu0 %v826
        %v2246 = vpop.f32.mrb[0].mxu0
        %v2247 = vadd.f32 0.0, %v2246
        %v2248 = vpop.f32.mrb[0].mxu0
        %2249 = vmatprep.mubr.f32.mxu0 0.0
        %2250 = vmatmul.mubr.f32.gmra.mrb[0].mxu0 %v828
        %v2251 = vpop.f32.mrb[0].mxu0
        %v2252 = vadd.f32 0.0, %v2251
        %v2253 = vpop.f32.mrb[0].mxu0
        %2254 = vmatprep.mubr.f32.mxu0 0.0
        %2255 = vmatmul.mubr.f32.gmra.mrb[0].mxu0 %v830
        %v2256 = vpop.f32.mrb[0].mxu0
        %v2257 = vadd.f32 0.0, %v2256
        %v2258 = vpop.f32.mrb[0].mxu0
        %2259 = vmatprep.mubr.f32.mxu0 0.0
        %2260 = vmatmul.mubr.f32.gmra.mrb[0].mxu0 %v832
        %v2261 = vpop.f32.mrb[0].mxu0
        %v2262 = vadd.f32 0.0, %v2261
        %v2263 = vpop.f32.mrb[0].mxu0
        %2264 = vmatprep.mubr.f32.mxu0 0.0
        %2265 = vmatmul.mubr.f32.gmra.mrb[0].mxu0 %v834
        %v2266 = vpop.f32.mrb[0].mxu0
        %v2267 = vadd.f32 0.0, %v2266
        %v2268 = vpop.f32.mrb[0].mxu0
        %2269 = vmatprep.mubr.f32.mxu0 0.0
        %2270 = vmatmul.mubr.f32.gmra.mrb[0].mxu0 %v836
        %v2271 = vpop.f32.mrb[0].mxu0
        %v2272 = vadd.f32 0.0, %v2271
        %v2273 = vpop.f32.mrb[0].mxu0
        %2274 = vmatprep.mubr.f32.mxu0 0.0
        %2275 = vmatmul.mubr.f32.gmra.mrb[0].mxu0 %v838
        %v2276 = vpop.f32.mrb[0].mxu0
        %v2277 = vadd.f32 0.0, %v2276
        %v2278 = vpop.f32.mrb[0].mxu0
        %2279 = vmatprep.mubr.f32.mxu0 0.0
        %2280 = vmatmul.mubr.f32.gmra.mrb[0].mxu0 %v840
        %v2281 = vpop.f32.mrb[0].mxu0
        %v2282 = vadd.f32 0.0, %v2281
        %v2283 = vpop.f32.mrb[0].mxu0
        %2284 = vmatprep.mubr.f32.mxu0 0.0
        %2285 = vmatmul.mubr.f32.gmra.mrb[0].mxu0 %v842
        %v2286 = vpop.f32.mrb[0].mxu0
        %v2287 = vadd.f32 0.0, %v2286
        %v2288 = vpop.f32.mrb[0].mxu0
        %2289 = vmatprep.mubr.f32.mxu0 0.0
        %2290 = vmatmul.mubr.f32.gmra.mrb[0].mxu0 %v844
        %v2291 = vpop.f32.mrb[0].mxu0
        %v2292 = vadd.f32 0.0, %v2291
        %v2293 = vpop.f32.mrb[0].mxu0
        %2294 = vmatprep.mubr.f32.mxu0 0.0
        %2295 = vmatmul.mubr.f32.gmra.mrb[0].mxu0 %v846
        %v2296 = vpop.f32.mrb[0].mxu0
        %v2297 = vadd.f32 0.0, %v2296
        %v2298 = vpop.f32.mrb[0].mxu0
        %2299 = vmatprep.mubr.f32.mxu0 0.0
        %2300 = vmatmul.mubr.f32.gmra.mrb[0].mxu0 %v848
        %v2301 = vpop.f32.mrb[0].mxu0
        %v2302 = vadd.f32 0.0, %v2301
        %v2303 = vpop.f32.mrb[0].mxu0
        %2304 = vmatprep.mubr.f32.mxu0 0.0
        %2305 = vmatmul.mubr.f32.gmra.mrb[0].mxu0 %v850
        %v2306 = vpop.f32.mrb[0].mxu0
        %v2307 = vadd.f32 0.0, %v2306
        %v2308 = vpop.f32.mrb[0].mxu0
        %2309 = vmatprep.mubr.f32.mxu0 0.0
        %2310 = vmatmul.mubr.f32.gmra.mrb[0].mxu0 %v852
        %v2311 = vpop.f32.mrb[0].mxu0
        %v2312 = vadd.f32 0.0, %v2311
        %v2313 = vpop.f32.mrb[0].mxu0
        %2314 = vmatprep.mubr.f32.mxu0 0.0
        %2315 = vmatmul.mubr.f32.gmra.mrb[0].mxu0 %v854
        %v2316 = vpop.f32.mrb[0].mxu0
        %v2317 = vadd.f32 0.0, %v2316
        %v2318 = vpop.f32.mrb[0].mxu0
        %2319 = vmatprep.mubr.f32.mxu0 0.0
        %2320 = vmatmul.mubr.f32.gmra.mrb[0].mxu0 %v856
        %v2321 = vpop.f32.mrb[0].mxu0
        %v2322 = vadd.f32 0.0, %v2321
        %v2323 = vpop.f32.mrb[0].mxu0
        %2324 = vmatprep.mubr.f32.mxu0 0.0
        %2325 = vmatmul.mubr.f32.gmra.mrb[0].mxu0 %v858
        %v2326 = vpop.f32.mrb[0].mxu0
        %v2327 = vadd.f32 0.0, %v2326
        %v2328 = vpop.f32.mrb[0].mxu0
        %2329 = vmatprep.mubr.f32.mxu0 0.0
        %2330 = vmatmul.mubr.f32.gmra.mrb[0].mxu0 %v860
        %v2331 = vpop.f32.mrb[0].mxu0
        %v2332 = vadd.f32 0.0, %v2331
        %v2333 = vpop.f32.mrb[0].mxu0
        %2334 = vmatprep.mubr.f32.mxu0 0.0
        %2335 = vmatmul.mubr.f32.gmra.mrb[0].mxu0 %v862
        %v2336 = vpop.f32.mrb[0].mxu0
        %v2337 = vadd.f32 0.0, %v2336
        %v2338 = vpop.f32.mrb[0].mxu0
        %2339 = vmatprep.mubr.f32.mxu0 0.0
        %2340 = vmatmul.mubr.f32.gmra.mrb[0].mxu0 %v864
        %v2341 = vpop.f32.mrb[0].mxu0
        %v2342 = vadd.f32 0.0, %v2341
        %v2343 = vpop.f32.mrb[0].mxu0
        %2344 = vmatprep.mubr.f32.mxu0 0.0
        %2345 = vmatmul.mubr.f32.gmra.mrb[0].mxu0 %v866
        %v2346 = vpop.f32.mrb[0].mxu0
        %v2347 = vadd.f32 0.0, %v2346
        %v2348 = vpop.f32.mrb[0].mxu0
        %2349 = vmatprep.mubr.f32.mxu0 0.0
        %2350 = vmatmul.mubr.f32.gmra.mrb[0].mxu0 %v868
        %v2351 = vpop.f32.mrb[0].mxu0
        %v2352 = vadd.f32 0.0, %v2351
        %v2353 = vpop.f32.mrb[0].mxu0
        %2354 = vmatprep.mubr.f32.mxu0 0.0
        %2355 = vmatmul.mubr.f32.gmra.mrb[0].mxu0 %v870
        %v2356 = vpop.f32.mrb[0].mxu0
        %v2357 = vadd.f32 0.0, %v2356
        %v2358 = vpop.f32.mrb[0].mxu0
        %2359 = vmatprep.mubr.f32.mxu0 0.0
        %2360 = vmatmul.mubr.f32.gmra.mrb[0].mxu0 %v872
        %v2361 = vpop.f32.mrb[0].mxu0
        %v2362 = vadd.f32 0.0, %v2361
        %v2363 = vpop.f32.mrb[0].mxu0
        %2364 = vmatprep.mubr.f32.mxu0 0.0
        %2365 = vmatmul.mubr.f32.gmra.mrb[0].mxu0 %v1436
        %v2366 = vpop.f32.mrb[0].mxu0
        %v2367 = vadd.f32 0.0, %v2366
        %v2368 = vpop.f32.mrb[0].mxu0
        %2369 = vmatprep.mubr.f32.mxu0 0.0
        %2370 = vmatmul.mubr.f32.gmra.mrb[0].mxu0 %v1439
        %v2371 = vpop.f32.mrb[0].mxu0
        %v2372 = vadd.f32 0.0, %v2371
        %v2373 = vpop.f32.mrb[0].mxu0
        %2374 = vmatprep.mubr.f32.mxu0 0.0
        %2375 = vmatmul.mubr.f32.gmra.mrb[0].mxu0 %v2172
        %v2376 = vpop.f32.mrb[0].mxu0
        %v2377 = vadd.f32 0.0, %v2376
        %v2378 = vpop.f32.mrb[0].mxu0
        %2379 = vmatprep.mubr.f32.mxu0 0.0
        %2380 = vmatmul.mubr.f32.gmra.mrb[0].mxu0 %v2175
        %v2381 = vpop.f32.mrb[0].mxu0
        %v2382 = vadd.f32 0.0, %v2381
        %v2383 = vpop.f32.mrb[0].mxu0
        %2384 = vdwg.mxu0
        %v2385 = vadd.f32 %v2142, %v2247
        %v2386 = vadd.f32 %v2143, %v2252
        %v2387 = vadd.f32 %v2144, %v2257
        %v2388 = vadd.f32 %v2145, %v2262
        %v2389 = vadd.f32 %v2146, %v2267
        %v2390 = vadd.f32 %v2147, %v2272
        %v2391 = vadd.f32 %v2148, %v2277
        %v2392 = vadd.f32 %v2149, %v2282
        %v2393 = vadd.f32 %v2150, %v2287
        %v2394 = vadd.f32 %v2151, %v2292
        %v2395 = vadd.f32 %v2152, %v2297
        %v2396 = vadd.f32 %v2153, %v2302
        %v2397 = vadd.f32 %v2154, %v2307
        %v2398 = vadd.f32 %v2155, %v2312
        %v2399 = vadd.f32 %v2156, %v2317
        %v2400 = vadd.f32 %v2157, %v2322
        %v2401 = vadd.f32 %v2158, %v2327
        %v2402 = vadd.f32 %v2159, %v2332
        %v2403 = vadd.f32 %v2160, %v2337
        %v2404 = vadd.f32 %v2161, %v2342
        %v2405 = vadd.f32 %v2162, %v2347
        %v2406 = vadd.f32 %v2163, %v2352
        %v2407 = vadd.f32 %v2164, %v2357
        %v2408 = vadd.f32 %v2165, %v2362
        %v2409 = vadd.f32 %v2166, %v2367
        %v2410 = vadd.f32 %v2167, %v2372
        %v2411 = vadd.f32 %v2168, %v2377
        %v2412 = vadd.f32 %v2169, %v2382
        %s2413 = scalar_lea.vmem %s2, 28
        %v2414 = vld [vmem:[%s2413] sm:$0xf]
        %v2416 = vrot.slane %v460, 1
        %v2417 = vsel %vm494, %v1682, %v2416
        %v2418 = vrot.slane %v461, 1
        %v2419 = vsel %vm494, %v2416, %v2418
        %v2420 = vsel %vm552, %v2417, 0
        %v2422 = vsel %vm552, %v2419, 0
        %v2425 = vsel %vm609, %v2414, 0
        %2427 = vmatprep.subr.mxu0 0.0
        %2428 = vmatpush1.msra.mxu0 %v2425
        %2429 = vmatprep.subr.mxu0 0.0
        %2430 = vmatpush1.msra.mxu0 0.0
        %2431 = vmatprep.subr.mxu0 0.0
        %2432 = vmatpush1.msra.mxu0 0.0
        %2433 = vmatprep.subr.mxu0 0.0
        %2434 = vmatpush1.msra.mxu0 0.0
        %2435 = vmatprep.subr.mxu0 0.0
        %2436 = vmatpush1.msra.mxu0 0.0
        %2437 = vmatprep.subr.mxu0 0.0
        %2438 = vmatpush1.msra.mxu0 0.0
        %2439 = vmatprep.subr.mxu0 0.0
        %2440 = vmatpush1.msra.mxu0 0.0
        %2441 = vmatprep.subr.mxu0 0.0
        %2442 = vmatpush1.msra.mxu0 0.0
        %2443 = vmatprep.subr.mxu0 0.0
        %2444 = vmatpush1.msra.mxu0 0.0
        %2445 = vmatprep.subr.mxu0 0.0
        %2446 = vmatpush1.msra.mxu0 0.0
        %2447 = vmatprep.subr.mxu0 0.0
        %2448 = vmatpush1.msra.mxu0 0.0
        %2449 = vmatprep.subr.mxu0 0.0
        %2450 = vmatpush1.msra.mxu0 0.0
        %2451 = vmatprep.subr.mxu0 0.0
        %2452 = vmatpush1.msra.mxu0 0.0
        %2453 = vmatprep.subr.mxu0 0.0
        %2454 = vmatpush1.msra.mxu0 0.0
        %2455 = vmatprep.subr.mxu0 0.0
        %2456 = vmatpush1.msra.mxu0 0.0
        %2457 = vmatprep.subr.mxu0 0.0
        %2458 = vmatpush1.msra.mxu0 0.0
        %2459 = vmatprep.subr.mxu0 0.0
        %2460 = vmatpush1.msra.mxu0 0.0
        %2461 = vmatprep.subr.mxu0 0.0
        %2462 = vmatpush1.msra.mxu0 0.0
        %2463 = vmatprep.subr.mxu0 0.0
        %2464 = vmatpush1.msra.mxu0 0.0
        %2465 = vmatprep.subr.mxu0 0.0
        %2466 = vmatpush1.msra.mxu0 0.0
        %2467 = vmatprep.subr.mxu0 0.0
        %2468 = vmatpush1.msra.mxu0 0.0
        %2469 = vmatprep.subr.mxu0 0.0
        %2470 = vmatpush1.msra.mxu0 0.0
        %2471 = vmatprep.subr.mxu0 0.0
        %2472 = vmatpush1.msra.mxu0 0.0
        %2473 = vmatprep.subr.mxu0 0.0
        %2474 = vmatpush1.msra.mxu0 0.0
        %2475 = vmatprep.subr.mxu0 0.0
        %2476 = vmatpush1.msra.mxu0 0.0
        %2477 = vmatprep.subr.mxu0 0.0
        %2478 = vmatpush1.msra.mxu0 0.0
        %2479 = vmatprep.subr.mxu0 0.0
        %2480 = vmatpush1.msra.mxu0 0.0
        %2481 = vmatprep.subr.mxu0 0.0
        %2482 = vmatpush1.msra.mxu0 0.0
        %2483 = vmatprep.subr.mxu0 0.0
        %2484 = vmatpush1.msra.mxu0 0.0
        %2485 = vmatprep.subr.mxu0 0.0
        %2486 = vmatpush1.msra.mxu0 0.0
        %2487 = vmatprep.subr.mxu0 0.0
        %2488 = vmatpush1.msra.mxu0 0.0
        %2489 = vmatprep.subr.mxu0 0.0
        %2490 = vmatpush1.msra.mxu0 0.0
        %2491 = vmatprep.mubr.f32.mxu0 0.0
        %2492 = vmatmul.mubr.f32.gmra.mrb[0].mxu0 %v561
        %v2493 = vpop.f32.mrb[0].mxu0
        %v2494 = vadd.f32 0.0, %v2493
        %v2495 = vpop.f32.mrb[0].mxu0
        %2496 = vmatprep.mubr.f32.mxu0 0.0
        %2497 = vmatmul.mubr.f32.gmra.mrb[0].mxu0 %v563
        %v2498 = vpop.f32.mrb[0].mxu0
        %v2499 = vadd.f32 0.0, %v2498
        %v2500 = vpop.f32.mrb[0].mxu0
        %2501 = vmatprep.mubr.f32.mxu0 0.0
        %2502 = vmatmul.mubr.f32.gmra.mrb[0].mxu0 %v565
        %v2503 = vpop.f32.mrb[0].mxu0
        %v2504 = vadd.f32 0.0, %v2503
        %v2505 = vpop.f32.mrb[0].mxu0
        %2506 = vmatprep.mubr.f32.mxu0 0.0
        %2507 = vmatmul.mubr.f32.gmra.mrb[0].mxu0 %v567
        %v2508 = vpop.f32.mrb[0].mxu0
        %v2509 = vadd.f32 0.0, %v2508
        %v2510 = vpop.f32.mrb[0].mxu0
        %2511 = vmatprep.mubr.f32.mxu0 0.0
        %2512 = vmatmul.mubr.f32.gmra.mrb[0].mxu0 %v569
        %v2513 = vpop.f32.mrb[0].mxu0
        %v2514 = vadd.f32 0.0, %v2513
        %v2515 = vpop.f32.mrb[0].mxu0
        %2516 = vmatprep.mubr.f32.mxu0 0.0
        %2517 = vmatmul.mubr.f32.gmra.mrb[0].mxu0 %v571
        %v2518 = vpop.f32.mrb[0].mxu0
        %v2519 = vadd.f32 0.0, %v2518
        %v2520 = vpop.f32.mrb[0].mxu0
        %2521 = vmatprep.mubr.f32.mxu0 0.0
        %2522 = vmatmul.mubr.f32.gmra.mrb[0].mxu0 %v573
        %v2523 = vpop.f32.mrb[0].mxu0
        %v2524 = vadd.f32 0.0, %v2523
        %v2525 = vpop.f32.mrb[0].mxu0
        %2526 = vmatprep.mubr.f32.mxu0 0.0
        %2527 = vmatmul.mubr.f32.gmra.mrb[0].mxu0 %v575
        %v2528 = vpop.f32.mrb[0].mxu0
        %v2529 = vadd.f32 0.0, %v2528
        %v2530 = vpop.f32.mrb[0].mxu0
        %2531 = vmatprep.mubr.f32.mxu0 0.0
        %2532 = vmatmul.mubr.f32.gmra.mrb[0].mxu0 %v577
        %v2533 = vpop.f32.mrb[0].mxu0
        %v2534 = vadd.f32 0.0, %v2533
        %v2535 = vpop.f32.mrb[0].mxu0
        %2536 = vmatprep.mubr.f32.mxu0 0.0
        %2537 = vmatmul.mubr.f32.gmra.mrb[0].mxu0 %v579
        %v2538 = vpop.f32.mrb[0].mxu0
        %v2539 = vadd.f32 0.0, %v2538
        %v2540 = vpop.f32.mrb[0].mxu0
        %2541 = vmatprep.mubr.f32.mxu0 0.0
        %2542 = vmatmul.mubr.f32.gmra.mrb[0].mxu0 %v581
        %v2543 = vpop.f32.mrb[0].mxu0
        %v2544 = vadd.f32 0.0, %v2543
        %v2545 = vpop.f32.mrb[0].mxu0
        %2546 = vmatprep.mubr.f32.mxu0 0.0
        %2547 = vmatmul.mubr.f32.gmra.mrb[0].mxu0 %v583
        %v2548 = vpop.f32.mrb[0].mxu0
        %v2549 = vadd.f32 0.0, %v2548
        %v2550 = vpop.f32.mrb[0].mxu0
        %2551 = vmatprep.mubr.f32.mxu0 0.0
        %2552 = vmatmul.mubr.f32.gmra.mrb[0].mxu0 %v585
        %v2553 = vpop.f32.mrb[0].mxu0
        %v2554 = vadd.f32 0.0, %v2553
        %v2555 = vpop.f32.mrb[0].mxu0
        %2556 = vmatprep.mubr.f32.mxu0 0.0
        %2557 = vmatmul.mubr.f32.gmra.mrb[0].mxu0 %v587
        %v2558 = vpop.f32.mrb[0].mxu0
        %v2559 = vadd.f32 0.0, %v2558
        %v2560 = vpop.f32.mrb[0].mxu0
        %2561 = vmatprep.mubr.f32.mxu0 0.0
        %2562 = vmatmul.mubr.f32.gmra.mrb[0].mxu0 %v589
        %v2563 = vpop.f32.mrb[0].mxu0
        %v2564 = vadd.f32 0.0, %v2563
        %v2565 = vpop.f32.mrb[0].mxu0
        %2566 = vmatprep.mubr.f32.mxu0 0.0
        %2567 = vmatmul.mubr.f32.gmra.mrb[0].mxu0 %v591
        %v2568 = vpop.f32.mrb[0].mxu0
        %v2569 = vadd.f32 0.0, %v2568
        %v2570 = vpop.f32.mrb[0].mxu0
        %2571 = vmatprep.mubr.f32.mxu0 0.0
        %2572 = vmatmul.mubr.f32.gmra.mrb[0].mxu0 %v593
        %v2573 = vpop.f32.mrb[0].mxu0
        %v2574 = vadd.f32 0.0, %v2573
        %v2575 = vpop.f32.mrb[0].mxu0
        %2576 = vmatprep.mubr.f32.mxu0 0.0
        %2577 = vmatmul.mubr.f32.gmra.mrb[0].mxu0 %v595
        %v2578 = vpop.f32.mrb[0].mxu0
        %v2579 = vadd.f32 0.0, %v2578
        %v2580 = vpop.f32.mrb[0].mxu0
        %2581 = vmatprep.mubr.f32.mxu0 0.0
        %2582 = vmatmul.mubr.f32.gmra.mrb[0].mxu0 %v597
        %v2583 = vpop.f32.mrb[0].mxu0
        %v2584 = vadd.f32 0.0, %v2583
        %v2585 = vpop.f32.mrb[0].mxu0
        %2586 = vmatprep.mubr.f32.mxu0 0.0
        %2587 = vmatmul.mubr.f32.gmra.mrb[0].mxu0 %v599
        %v2588 = vpop.f32.mrb[0].mxu0
        %v2589 = vadd.f32 0.0, %v2588
        %v2590 = vpop.f32.mrb[0].mxu0
        %2591 = vmatprep.mubr.f32.mxu0 0.0
        %2592 = vmatmul.mubr.f32.gmra.mrb[0].mxu0 %v601
        %v2593 = vpop.f32.mrb[0].mxu0
        %v2594 = vadd.f32 0.0, %v2593
        %v2595 = vpop.f32.mrb[0].mxu0
        %2596 = vmatprep.mubr.f32.mxu0 0.0
        %2597 = vmatmul.mubr.f32.gmra.mrb[0].mxu0 %v603
        %v2598 = vpop.f32.mrb[0].mxu0
        %v2599 = vadd.f32 0.0, %v2598
        %v2600 = vpop.f32.mrb[0].mxu0
        %2601 = vmatprep.mubr.f32.mxu0 0.0
        %2602 = vmatmul.mubr.f32.gmra.mrb[0].mxu0 %v605
        %v2603 = vpop.f32.mrb[0].mxu0
        %v2604 = vadd.f32 0.0, %v2603
        %v2605 = vpop.f32.mrb[0].mxu0
        %2606 = vmatprep.mubr.f32.mxu0 0.0
        %2607 = vmatmul.mubr.f32.gmra.mrb[0].mxu0 %v607
        %v2608 = vpop.f32.mrb[0].mxu0
        %v2609 = vadd.f32 0.0, %v2608
        %v2610 = vpop.f32.mrb[0].mxu0
        %2611 = vmatprep.mubr.f32.mxu0 0.0
        %2612 = vmatmul.mubr.f32.gmra.mrb[0].mxu0 %v1684
        %v2613 = vpop.f32.mrb[0].mxu0
        %v2614 = vadd.f32 0.0, %v2613
        %v2615 = vpop.f32.mrb[0].mxu0
        %2616 = vmatprep.mubr.f32.mxu0 0.0
        %2617 = vmatmul.mubr.f32.gmra.mrb[0].mxu0 %v1686
        %v2618 = vpop.f32.mrb[0].mxu0
        %v2619 = vadd.f32 0.0, %v2618
        %v2620 = vpop.f32.mrb[0].mxu0
        %2621 = vmatprep.mubr.f32.mxu0 0.0
        %2622 = vmatmul.mubr.f32.gmra.mrb[0].mxu0 %v2420
        %v2623 = vpop.f32.mrb[0].mxu0
        %v2624 = vadd.f32 0.0, %v2623
        %v2625 = vpop.f32.mrb[0].mxu0
        %2626 = vmatprep.mubr.f32.mxu0 0.0
        %2627 = vmatmul.mubr.f32.gmra.mrb[0].mxu0 %v2422
        %v2628 = vpop.f32.mrb[0].mxu0
        %v2629 = vadd.f32 0.0, %v2628
        %v2630 = vpop.f32.mrb[0].mxu0
        %2631 = vdwg.mxu0
        %v2632 = vadd.f32 %v2385, %v2494
        %v2633 = vadd.f32 %v2386, %v2499
        %v2634 = vadd.f32 %v2387, %v2504
        %v2635 = vadd.f32 %v2388, %v2509
        %v2636 = vadd.f32 %v2389, %v2514
        %v2637 = vadd.f32 %v2390, %v2519
        %v2638 = vadd.f32 %v2391, %v2524
        %v2639 = vadd.f32 %v2392, %v2529
        %v2640 = vadd.f32 %v2393, %v2534
        %v2641 = vadd.f32 %v2394, %v2539
        %v2642 = vadd.f32 %v2395, %v2544
        %v2643 = vadd.f32 %v2396, %v2549
        %v2644 = vadd.f32 %v2397, %v2554
        %v2645 = vadd.f32 %v2398, %v2559
        %v2646 = vadd.f32 %v2399, %v2564
        %v2647 = vadd.f32 %v2400, %v2569
        %v2648 = vadd.f32 %v2401, %v2574
        %v2649 = vadd.f32 %v2402, %v2579
        %v2650 = vadd.f32 %v2403, %v2584
        %v2651 = vadd.f32 %v2404, %v2589
        %v2652 = vadd.f32 %v2405, %v2594
        %v2653 = vadd.f32 %v2406, %v2599
        %v2654 = vadd.f32 %v2407, %v2604
        %v2655 = vadd.f32 %v2408, %v2609
        %v2656 = vadd.f32 %v2409, %v2614
        %v2657 = vadd.f32 %v2410, %v2619
        %v2658 = vadd.f32 %v2411, %v2624
        %v2659 = vadd.f32 %v2412, %v2629
        %s2660 = scalar_lea.vmem %s2, 32
        %v2661 = vld [vmem:[%s2660] sm:$0xf]
        %v2662 = vrot.slane %v460, 2
        %v2663 = vsel %vm1084, %v1928, %v2662
        %v2664 = vrot.slane %v461, 2
        %v2665 = vsel %vm1084, %v2662, %v2664
        %v2666 = vsel %vm552, %v2663, 0
        %v2668 = vsel %vm552, %v2665, 0
        %v2671 = vsel %vm609, %v2661, 0
        %2673 = vmatprep.subr.mxu0 0.0
        %2674 = vmatpush1.msra.mxu0 %v2671
        %2675 = vmatprep.subr.mxu0 0.0
        %2676 = vmatpush1.msra.mxu0 0.0
        %2677 = vmatprep.subr.mxu0 0.0
        %2678 = vmatpush1.msra.mxu0 0.0
        %2679 = vmatprep.subr.mxu0 0.0
        %2680 = vmatpush1.msra.mxu0 0.0
        %2681 = vmatprep.subr.mxu0 0.0
        %2682 = vmatpush1.msra.mxu0 0.0
        %2683 = vmatprep.subr.mxu0 0.0
        %2684 = vmatpush1.msra.mxu0 0.0
        %2685 = vmatprep.subr.mxu0 0.0
        %2686 = vmatpush1.msra.mxu0 0.0
        %2687 = vmatprep.subr.mxu0 0.0
        %2688 = vmatpush1.msra.mxu0 0.0
        %2689 = vmatprep.subr.mxu0 0.0
        %2690 = vmatpush1.msra.mxu0 0.0
        %2691 = vmatprep.subr.mxu0 0.0
        %2692 = vmatpush1.msra.mxu0 0.0
        %2693 = vmatprep.subr.mxu0 0.0
        %2694 = vmatpush1.msra.mxu0 0.0
        %2695 = vmatprep.subr.mxu0 0.0
        %2696 = vmatpush1.msra.mxu0 0.0
        %2697 = vmatprep.subr.mxu0 0.0
        %2698 = vmatpush1.msra.mxu0 0.0
        %2699 = vmatprep.subr.mxu0 0.0
        %2700 = vmatpush1.msra.mxu0 0.0
        %2701 = vmatprep.subr.mxu0 0.0
        %2702 = vmatpush1.msra.mxu0 0.0
        %2703 = vmatprep.subr.mxu0 0.0
        %2704 = vmatpush1.msra.mxu0 0.0
        %2705 = vmatprep.subr.mxu0 0.0
        %2706 = vmatpush1.msra.mxu0 0.0
        %2707 = vmatprep.subr.mxu0 0.0
        %2708 = vmatpush1.msra.mxu0 0.0
        %2709 = vmatprep.subr.mxu0 0.0
        %2710 = vmatpush1.msra.mxu0 0.0
        %2711 = vmatprep.subr.mxu0 0.0
        %2712 = vmatpush1.msra.mxu0 0.0
        %2713 = vmatprep.subr.mxu0 0.0
        %2714 = vmatpush1.msra.mxu0 0.0
        %2715 = vmatprep.subr.mxu0 0.0
        %2716 = vmatpush1.msra.mxu0 0.0
        %2717 = vmatprep.subr.mxu0 0.0
        %2718 = vmatpush1.msra.mxu0 0.0
        %2719 = vmatprep.subr.mxu0 0.0
        %2720 = vmatpush1.msra.mxu0 0.0
        %2721 = vmatprep.subr.mxu0 0.0
        %2722 = vmatpush1.msra.mxu0 0.0
        %2723 = vmatprep.subr.mxu0 0.0
        %2724 = vmatpush1.msra.mxu0 0.0
        %2725 = vmatprep.subr.mxu0 0.0
        %2726 = vmatpush1.msra.mxu0 0.0
        %2727 = vmatprep.subr.mxu0 0.0
        %2728 = vmatpush1.msra.mxu0 0.0
        %2729 = vmatprep.subr.mxu0 0.0
        %2730 = vmatpush1.msra.mxu0 0.0
        %2731 = vmatprep.subr.mxu0 0.0
        %2732 = vmatpush1.msra.mxu0 0.0
        %2733 = vmatprep.subr.mxu0 0.0
        %2734 = vmatpush1.msra.mxu0 0.0
        %2735 = vmatprep.subr.mxu0 0.0
        %2736 = vmatpush1.msra.mxu0 0.0
        %2737 = vmatprep.mubr.f32.mxu0 0.0
        %2738 = vmatmul.mubr.f32.gmra.mrb[0].mxu0 %v1150
        %v2739 = vpop.f32.mrb[0].mxu0
        %v2740 = vadd.f32 0.0, %v2739
        %v2741 = vpop.f32.mrb[0].mxu0
        %2742 = vmatprep.mubr.f32.mxu0 0.0
        %2743 = vmatmul.mubr.f32.gmra.mrb[0].mxu0 %v1152
        %v2744 = vpop.f32.mrb[0].mxu0
        %v2745 = vadd.f32 0.0, %v2744
        %v2746 = vpop.f32.mrb[0].mxu0
        %2747 = vmatprep.mubr.f32.mxu0 0.0
        %2748 = vmatmul.mubr.f32.gmra.mrb[0].mxu0 %v1154
        %v2749 = vpop.f32.mrb[0].mxu0
        %v2750 = vadd.f32 0.0, %v2749
        %v2751 = vpop.f32.mrb[0].mxu0
        %2752 = vmatprep.mubr.f32.mxu0 0.0
        %2753 = vmatmul.mubr.f32.gmra.mrb[0].mxu0 %v1156
        %v2754 = vpop.f32.mrb[0].mxu0
        %v2755 = vadd.f32 0.0, %v2754
        %v2756 = vpop.f32.mrb[0].mxu0
        %2757 = vmatprep.mubr.f32.mxu0 0.0
        %2758 = vmatmul.mubr.f32.gmra.mrb[0].mxu0 %v1158
        %v2759 = vpop.f32.mrb[0].mxu0
        %v2760 = vadd.f32 0.0, %v2759
        %v2761 = vpop.f32.mrb[0].mxu0
        %2762 = vmatprep.mubr.f32.mxu0 0.0
        %2763 = vmatmul.mubr.f32.gmra.mrb[0].mxu0 %v1160
        %v2764 = vpop.f32.mrb[0].mxu0
        %v2765 = vadd.f32 0.0, %v2764
        %v2766 = vpop.f32.mrb[0].mxu0
        %2767 = vmatprep.mubr.f32.mxu0 0.0
        %2768 = vmatmul.mubr.f32.gmra.mrb[0].mxu0 %v1162
        %v2769 = vpop.f32.mrb[0].mxu0
        %v2770 = vadd.f32 0.0, %v2769
        %v2771 = vpop.f32.mrb[0].mxu0
        %2772 = vmatprep.mubr.f32.mxu0 0.0
        %2773 = vmatmul.mubr.f32.gmra.mrb[0].mxu0 %v1164
        %v2774 = vpop.f32.mrb[0].mxu0
        %v2775 = vadd.f32 0.0, %v2774
        %v2776 = vpop.f32.mrb[0].mxu0
        %2777 = vmatprep.mubr.f32.mxu0 0.0
        %2778 = vmatmul.mubr.f32.gmra.mrb[0].mxu0 %v1166
        %v2779 = vpop.f32.mrb[0].mxu0
        %v2780 = vadd.f32 0.0, %v2779
        %v2781 = vpop.f32.mrb[0].mxu0
        %2782 = vmatprep.mubr.f32.mxu0 0.0
        %2783 = vmatmul.mubr.f32.gmra.mrb[0].mxu0 %v1168
        %v2784 = vpop.f32.mrb[0].mxu0
        %v2785 = vadd.f32 0.0, %v2784
        %v2786 = vpop.f32.mrb[0].mxu0
        %2787 = vmatprep.mubr.f32.mxu0 0.0
        %2788 = vmatmul.mubr.f32.gmra.mrb[0].mxu0 %v1170
        %v2789 = vpop.f32.mrb[0].mxu0
        %v2790 = vadd.f32 0.0, %v2789
        %v2791 = vpop.f32.mrb[0].mxu0
        %2792 = vmatprep.mubr.f32.mxu0 0.0
        %2793 = vmatmul.mubr.f32.gmra.mrb[0].mxu0 %v1172
        %v2794 = vpop.f32.mrb[0].mxu0
        %v2795 = vadd.f32 0.0, %v2794
        %v2796 = vpop.f32.mrb[0].mxu0
        %2797 = vmatprep.mubr.f32.mxu0 0.0
        %2798 = vmatmul.mubr.f32.gmra.mrb[0].mxu0 %v1174
        %v2799 = vpop.f32.mrb[0].mxu0
        %v2800 = vadd.f32 0.0, %v2799
        %v2801 = vpop.f32.mrb[0].mxu0
        %2802 = vmatprep.mubr.f32.mxu0 0.0
        %2803 = vmatmul.mubr.f32.gmra.mrb[0].mxu0 %v1176
        %v2804 = vpop.f32.mrb[0].mxu0
        %v2805 = vadd.f32 0.0, %v2804
        %v2806 = vpop.f32.mrb[0].mxu0
        %2807 = vmatprep.mubr.f32.mxu0 0.0
        %2808 = vmatmul.mubr.f32.gmra.mrb[0].mxu0 %v1178
        %v2809 = vpop.f32.mrb[0].mxu0
        %v2810 = vadd.f32 0.0, %v2809
        %v2811 = vpop.f32.mrb[0].mxu0
        %2812 = vmatprep.mubr.f32.mxu0 0.0
        %2813 = vmatmul.mubr.f32.gmra.mrb[0].mxu0 %v1180
        %v2814 = vpop.f32.mrb[0].mxu0
        %v2815 = vadd.f32 0.0, %v2814
        %v2816 = vpop.f32.mrb[0].mxu0
        %2817 = vmatprep.mubr.f32.mxu0 0.0
        %2818 = vmatmul.mubr.f32.gmra.mrb[0].mxu0 %v1182
        %v2819 = vpop.f32.mrb[0].mxu0
        %v2820 = vadd.f32 0.0, %v2819
        %v2821 = vpop.f32.mrb[0].mxu0
        %2822 = vmatprep.mubr.f32.mxu0 0.0
        %2823 = vmatmul.mubr.f32.gmra.mrb[0].mxu0 %v1184
        %v2824 = vpop.f32.mrb[0].mxu0
        %v2825 = vadd.f32 0.0, %v2824
        %v2826 = vpop.f32.mrb[0].mxu0
        %2827 = vmatprep.mubr.f32.mxu0 0.0
        %2828 = vmatmul.mubr.f32.gmra.mrb[0].mxu0 %v1186
        %v2829 = vpop.f32.mrb[0].mxu0
        %v2830 = vadd.f32 0.0, %v2829
        %v2831 = vpop.f32.mrb[0].mxu0
        %2832 = vmatprep.mubr.f32.mxu0 0.0
        %2833 = vmatmul.mubr.f32.gmra.mrb[0].mxu0 %v1188
        %v2834 = vpop.f32.mrb[0].mxu0
        %v2835 = vadd.f32 0.0, %v2834
        %v2836 = vpop.f32.mrb[0].mxu0
        %2837 = vmatprep.mubr.f32.mxu0 0.0
        %2838 = vmatmul.mubr.f32.gmra.mrb[0].mxu0 %v1190
        %v2839 = vpop.f32.mrb[0].mxu0
        %v2840 = vadd.f32 0.0, %v2839
        %v2841 = vpop.f32.mrb[0].mxu0
        %2842 = vmatprep.mubr.f32.mxu0 0.0
        %2843 = vmatmul.mubr.f32.gmra.mrb[0].mxu0 %v1192
        %v2844 = vpop.f32.mrb[0].mxu0
        %v2845 = vadd.f32 0.0, %v2844
        %v2846 = vpop.f32.mrb[0].mxu0
        %2847 = vmatprep.mubr.f32.mxu0 0.0
        %2848 = vmatmul.mubr.f32.gmra.mrb[0].mxu0 %v1194
        %v2849 = vpop.f32.mrb[0].mxu0
        %v2850 = vadd.f32 0.0, %v2849
        %v2851 = vpop.f32.mrb[0].mxu0
        %2852 = vmatprep.mubr.f32.mxu0 0.0
        %2853 = vmatmul.mubr.f32.gmra.mrb[0].mxu0 %v1196
        %v2854 = vpop.f32.mrb[0].mxu0
        %v2855 = vadd.f32 0.0, %v2854
        %v2856 = vpop.f32.mrb[0].mxu0
        %2857 = vmatprep.mubr.f32.mxu0 0.0
        %2858 = vmatmul.mubr.f32.gmra.mrb[0].mxu0 %v1930
        %v2859 = vpop.f32.mrb[0].mxu0
        %v2860 = vadd.f32 0.0, %v2859
        %v2861 = vpop.f32.mrb[0].mxu0
        %2862 = vmatprep.mubr.f32.mxu0 0.0
        %2863 = vmatmul.mubr.f32.gmra.mrb[0].mxu0 %v1932
        %v2864 = vpop.f32.mrb[0].mxu0
        %v2865 = vadd.f32 0.0, %v2864
        %v2866 = vpop.f32.mrb[0].mxu0
        %2867 = vmatprep.mubr.f32.mxu0 0.0
        %2868 = vmatmul.mubr.f32.gmra.mrb[0].mxu0 %v2666
        %v2869 = vpop.f32.mrb[0].mxu0
        %v2870 = vadd.f32 0.0, %v2869
        %v2871 = vpop.f32.mrb[0].mxu0
        %2872 = vmatprep.mubr.f32.mxu0 0.0
        %2873 = vmatmul.mubr.f32.gmra.mrb[0].mxu0 %v2668
        %v2874 = vpop.f32.mrb[0].mxu0
        %v2875 = vadd.f32 0.0, %v2874
        %v2876 = vpop.f32.mrb[0].mxu0
        %2877 = vdwg.mxu0
        %v2878 = vadd.f32 %v2632, %v2740
        %v2879 = vadd.f32 %v2633, %v2745
        %v2880 = vadd.f32 %v2634, %v2750
        %v2881 = vadd.f32 %v2635, %v2755
        %v2882 = vadd.f32 %v2636, %v2760
        %v2883 = vadd.f32 %v2637, %v2765
        %v2884 = vadd.f32 %v2638, %v2770
        %v2885 = vadd.f32 %v2639, %v2775
        %v2886 = vadd.f32 %v2640, %v2780
        %v2887 = vadd.f32 %v2641, %v2785
        %v2888 = vadd.f32 %v2642, %v2790
        %v2889 = vadd.f32 %v2643, %v2795
        %v2890 = vadd.f32 %v2644, %v2800
        %v2891 = vadd.f32 %v2645, %v2805
        %v2892 = vadd.f32 %v2646, %v2810
        %v2893 = vadd.f32 %v2647, %v2815
        %v2894 = vadd.f32 %v2648, %v2820
        %v2895 = vadd.f32 %v2649, %v2825
        %v2896 = vadd.f32 %v2650, %v2830
        %v2897 = vadd.f32 %v2651, %v2835
        %v2898 = vadd.f32 %v2652, %v2840
        %v2899 = vadd.f32 %v2653, %v2845
        %v2900 = vadd.f32 %v2654, %v2850
        %v2901 = vadd.f32 %v2655, %v2855
        %v2902 = vadd.f32 %v2656, %v2860
        %v2903 = vadd.f32 %v2657, %v2865
        %v2904 = vadd.f32 %v2658, %v2870
        %v2905 = vadd.f32 %v2659, %v2875
        %v2906 = vld [vmem:[%s3] sm:$0x1]
        %v2908 = vlaneseq
        %v2909 = vshrl.u32 %v2908, 7
        %v2910 = vsub.s32 0, %v2909
        %v2911 = vrot.slane %v2906, %v2910
        %v2913 = vadd.f32 %v2878, %v2911
        %v2914 = vadd.f32 %v2879, %v2911
        %v2915 = vadd.f32 %v2880, %v2911
        %v2916 = vadd.f32 %v2881, %v2911
        %v2917 = vadd.f32 %v2882, %v2911
        %v2918 = vadd.f32 %v2883, %v2911
        %v2919 = vadd.f32 %v2884, %v2911
        %v2920 = vadd.f32 %v2885, %v2911
        %v2921 = vadd.f32 %v2886, %v2911
        %v2922 = vadd.f32 %v2887, %v2911
        %v2923 = vadd.f32 %v2888, %v2911
        %v2924 = vadd.f32 %v2889, %v2911
        %v2925 = vadd.f32 %v2890, %v2911
        %v2926 = vadd.f32 %v2891, %v2911
        %v2927 = vadd.f32 %v2892, %v2911
        %v2928 = vadd.f32 %v2893, %v2911
        %v2929 = vadd.f32 %v2894, %v2911
        %v2930 = vadd.f32 %v2895, %v2911
        %v2931 = vadd.f32 %v2896, %v2911
        %v2932 = vadd.f32 %v2897, %v2911
        %v2933 = vadd.f32 %v2898, %v2911
        %v2934 = vadd.f32 %v2899, %v2911
        %v2935 = vadd.f32 %v2900, %v2911
        %v2936 = vadd.f32 %v2901, %v2911
        %v2937 = vadd.f32 %v2902, %v2911
        %v2938 = vadd.f32 %v2903, %v2911
        %v2939 = vadd.f32 %v2904, %v2911
        %v2940 = vadd.f32 %v2905, %v2911
        %vm2941 = vcmp.gt.f32.partialorder %v2913, 0.0
        %vm2942 = vcmp.gt.f32.partialorder %v2914, 0.0
        %vm2943 = vcmp.gt.f32.partialorder %v2915, 0.0
        %vm2944 = vcmp.gt.f32.partialorder %v2916, 0.0
        %vm2945 = vcmp.gt.f32.partialorder %v2917, 0.0
        %vm2946 = vcmp.gt.f32.partialorder %v2918, 0.0
        %vm2947 = vcmp.gt.f32.partialorder %v2919, 0.0
        %vm2948 = vcmp.gt.f32.partialorder %v2920, 0.0
        %vm2949 = vcmp.gt.f32.partialorder %v2921, 0.0
        %vm2950 = vcmp.gt.f32.partialorder %v2922, 0.0
        %vm2951 = vcmp.gt.f32.partialorder %v2923, 0.0
        %vm2952 = vcmp.gt.f32.partialorder %v2924, 0.0
        %vm2953 = vcmp.gt.f32.partialorder %v2925, 0.0
        %vm2954 = vcmp.gt.f32.partialorder %v2926, 0.0
        %vm2955 = vcmp.gt.f32.partialorder %v2927, 0.0
        %vm2956 = vcmp.gt.f32.partialorder %v2928, 0.0
        %vm2957 = vcmp.gt.f32.partialorder %v2929, 0.0
        %vm2958 = vcmp.gt.f32.partialorder %v2930, 0.0
        %vm2959 = vcmp.gt.f32.partialorder %v2931, 0.0
        %vm2960 = vcmp.gt.f32.partialorder %v2932, 0.0
        %vm2961 = vcmp.gt.f32.partialorder %v2933, 0.0
        %vm2962 = vcmp.gt.f32.partialorder %v2934, 0.0
        %vm2963 = vcmp.gt.f32.partialorder %v2935, 0.0
        %vm2964 = vcmp.gt.f32.partialorder %v2936, 0.0
        %vm2965 = vcmp.gt.f32.partialorder %v2937, 0.0
        %vm2966 = vcmp.gt.f32.partialorder %v2938, 0.0
        %vm2967 = vcmp.gt.f32.partialorder %v2939, 0.0
        %vm2968 = vcmp.gt.f32.partialorder %v2940, 0.0
        %v2969 = vstv %s425
        %v2970 = vmul.f32 %v2969, %v2913
        %v2971 = vmul.f32 %v2969, %v2914
        %v2972 = vmul.f32 %v2969, %v2915
        %v2973 = vmul.f32 %v2969, %v2916
        %v2974 = vmul.f32 %v2969, %v2917
        %v2975 = vmul.f32 %v2969, %v2918
        %v2976 = vmul.f32 %v2969, %v2919
        %v2977 = vmul.f32 %v2969, %v2920
        %v2978 = vmul.f32 %v2969, %v2921
        %v2979 = vmul.f32 %v2969, %v2922
        %v2980 = vmul.f32 %v2969, %v2923
        %v2981 = vmul.f32 %v2969, %v2924
        %v2982 = vmul.f32 %v2969, %v2925
        %v2983 = vmul.f32 %v2969, %v2926
        %v2984 = vmul.f32 %v2969, %v2927
        %v2985 = vmul.f32 %v2969, %v2928
        %v2986 = vmul.f32 %v2969, %v2929
        %v2987 = vmul.f32 %v2969, %v2930
        %v2988 = vmul.f32 %v2969, %v2931
        %v2989 = vmul.f32 %v2969, %v2932
        %v2990 = vmul.f32 %v2969, %v2933
        %v2991 = vmul.f32 %v2969, %v2934
        %v2992 = vmul.f32 %v2969, %v2935
        %v2993 = vmul.f32 %v2969, %v2936
        %v2994 = vmul.f32 %v2969, %v2937
        %v2995 = vmul.f32 %v2969, %v2938
        %v2996 = vmul.f32 %v2969, %v2939
        %v2997 = vmul.f32 %v2969, %v2940
        %v2998 = vsel %vm2941, %v2913, %v2970
        %v2999 = vsel %vm2942, %v2914, %v2971
        %v3000 = vsel %vm2943, %v2915, %v2972
        %v3001 = vsel %vm2944, %v2916, %v2973
        %v3002 = vsel %vm2945, %v2917, %v2974
        %v3003 = vsel %vm2946, %v2918, %v2975
        %v3004 = vsel %vm2947, %v2919, %v2976
        %v3005 = vsel %vm2948, %v2920, %v2977
        %v3006 = vsel %vm2949, %v2921, %v2978
        %v3007 = vsel %vm2950, %v2922, %v2979
        %v3008 = vsel %vm2951, %v2923, %v2980
        %v3009 = vsel %vm2952, %v2924, %v2981
        %v3010 = vsel %vm2953, %v2925, %v2982
        %v3011 = vsel %vm2954, %v2926, %v2983
        %v3012 = vsel %vm2955, %v2927, %v2984
        %v3013 = vsel %vm2956, %v2928, %v2985
        %v3014 = vsel %vm2957, %v2929, %v2986
        %v3015 = vsel %vm2958, %v2930, %v2987
        %v3016 = vsel %vm2959, %v2931, %v2988
        %v3017 = vsel %vm2960, %v2932, %v2989
        %v3018 = vsel %vm2961, %v2933, %v2990
        %v3019 = vsel %vm2962, %v2934, %v2991
        %v3020 = vsel %vm2963, %v2935, %v2992
        %v3021 = vsel %vm2964, %v2936, %v2993
        %v3022 = vsel %vm2965, %v2937, %v2994
        %v3023 = vsel %vm2966, %v2938, %v2995
        %v3024 = vsel %vm2967, %v2939, %v2996
        %v3025 = vsel %vm2968, %v2940, %v2997
        %v3026 = vmax.f32 %v2998, %v3000
        %v3027 = vmax.f32 %v2999, %v3001
        %v3028 = vmax.f32 %v3000, %v3002
        %v3029 = vmax.f32 %v3001, %v3003
        %v3030 = vmax.f32 %v3002, %v3004
        %v3031 = vmax.f32 %v3003, %v3005
        %v3032 = vmax.f32 %v3004, %v3006
        %v3033 = vmax.f32 %v3005, %v3007
        %v3034 = vmax.f32 %v3006, %v3008
        %v3035 = vmax.f32 %v3007, %v3009
        %v3036 = vmax.f32 %v3008, %v3010
        %v3037 = vmax.f32 %v3009, %v3011
        %v3038 = vmax.f32 %v3010, %v3012
        %v3039 = vmax.f32 %v3011, %v3013
        %v3040 = vmax.f32 %v3012, %v3014
        %v3041 = vmax.f32 %v3013, %v3015
        %v3042 = vmax.f32 %v3014, %v3016
        %v3043 = vmax.f32 %v3015, %v3017
        %v3044 = vmax.f32 %v3016, %v3018
        %v3045 = vmax.f32 %v3017, %v3019
        %v3046 = vmax.f32 %v3018, %v3020
        %v3047 = vmax.f32 %v3019, %v3021
        %v3048 = vmax.f32 %v3020, %v3022
        %v3049 = vmax.f32 %v3021, %v3023
        %v3050 = vmax.f32 %v3022, %v3024
        %v3051 = vmax.f32 %v3023, %v3025
        %v3078 = vrot.slane %v3026, 1
        %v3079 = vrot.slane %v3027, 1
        %v3080 = vsel %vm494, %v3078, %v3079
        %v3081 = vrot.slane %v3028, 1
        %v3082 = vsel %vm494, %v3079, %v3081
        %v3083 = vrot.slane %v3029, 1
        %v3084 = vsel %vm494, %v3081, %v3083
        %v3085 = vrot.slane %v3030, 1
        %v3086 = vsel %vm494, %v3083, %v3085
        %v3087 = vrot.slane %v3031, 1
        %v3088 = vsel %vm494, %v3085, %v3087
        %v3089 = vrot.slane %v3032, 1
        %v3090 = vsel %vm494, %v3087, %v3089
        %v3091 = vrot.slane %v3033, 1
        %v3092 = vsel %vm494, %v3089, %v3091
        %v3093 = vrot.slane %v3034, 1
        %v3094 = vsel %vm494, %v3091, %v3093
        %v3095 = vrot.slane %v3035, 1
        %v3096 = vsel %vm494, %v3093, %v3095
        %v3097 = vrot.slane %v3036, 1
        %v3098 = vsel %vm494, %v3095, %v3097
        %v3099 = vrot.slane %v3037, 1
        %v3100 = vsel %vm494, %v3097, %v3099
        %v3101 = vrot.slane %v3038, 1
        %v3102 = vsel %vm494, %v3099, %v3101
        %v3103 = vrot.slane %v3039, 1
        %v3104 = vsel %vm494, %v3101, %v3103
        %v3105 = vrot.slane %v3040, 1
        %v3106 = vsel %vm494, %v3103, %v3105
        %v3107 = vrot.slane %v3041, 1
        %v3108 = vsel %vm494, %v3105, %v3107
        %v3109 = vrot.slane %v3042, 1
        %v3110 = vsel %vm494, %v3107, %v3109
        %v3111 = vrot.slane %v3043, 1
        %v3112 = vsel %vm494, %v3109, %v3111
        %v3113 = vrot.slane %v3044, 1
        %v3114 = vsel %vm494, %v3111, %v3113
        %v3115 = vrot.slane %v3045, 1
        %v3116 = vsel %vm494, %v3113, %v3115
        %v3117 = vrot.slane %v3046, 1
        %v3118 = vsel %vm494, %v3115, %v3117
        %v3119 = vrot.slane %v3047, 1
        %v3120 = vsel %vm494, %v3117, %v3119
        %v3121 = vrot.slane %v3048, 1
        %v3122 = vsel %vm494, %v3119, %v3121
        %v3123 = vrot.slane %v3049, 1
        %v3124 = vsel %vm494, %v3121, %v3123
        %v3125 = vrot.slane %v3050, 1
        %v3126 = vsel %vm494, %v3123, %v3125
        %v3127 = vrot.slane %v3051, 1
        %v3128 = vsel %vm494, %v3125, %v3127
        %v3155 = vmax.f32 %v3026, %v3080
        %v3156 = vmax.f32 %v3027, %v3082
        %v3157 = vmax.f32 %v3028, %v3084
        %v3158 = vmax.f32 %v3029, %v3086
        %v3159 = vmax.f32 %v3030, %v3088
        %v3160 = vmax.f32 %v3031, %v3090
        %v3161 = vmax.f32 %v3032, %v3092
        %v3162 = vmax.f32 %v3033, %v3094
        %v3163 = vmax.f32 %v3034, %v3096
        %v3164 = vmax.f32 %v3035, %v3098
        %v3165 = vmax.f32 %v3036, %v3100
        %v3166 = vmax.f32 %v3037, %v3102
        %v3167 = vmax.f32 %v3038, %v3104
        %v3168 = vmax.f32 %v3039, %v3106
        %v3169 = vmax.f32 %v3040, %v3108
        %v3170 = vmax.f32 %v3041, %v3110
        %v3171 = vmax.f32 %v3042, %v3112
        %v3172 = vmax.f32 %v3043, %v3114
        %v3173 = vmax.f32 %v3044, %v3116
        %v3174 = vmax.f32 %v3045, %v3118
        %v3175 = vmax.f32 %v3046, %v3120
        %v3176 = vmax.f32 %v3047, %v3122
        %v3177 = vmax.f32 %v3048, %v3124
        %v3178 = vmax.f32 %v3049, %v3126
        %v3179 = vmax.f32 %v3050, %v3128
        %v3180 = vmax.f32 %v3051, %v3127
        %v3181 = vld [vmem:[%s4] sm:$0xff]
        %v3182 = vld [vmem:[%s4 + $0x8] sm:$0xff]
        %v3183 = vld [vmem:[%s4 + $0x10] sm:$0xff]
        %v3184 = vld [vmem:[%s4 + $0x18] sm:$0xff]
        %v3185 = vld [vmem:[%s4 + $0x20] sm:$0xff]
        %v3186 = vld [vmem:[%s4 + $0x28] sm:$0xff]
        %v3187 = vld [vmem:[%s4 + $0x30] sm:$0xff]
        %v3188 = vld [vmem:[%s4 + $0x38] sm:$0xff]
        %v3189 = vld [vmem:[%s4 + $0x40] sm:$0xff]
        %v3190 = vld [vmem:[%s4 + $0x48] sm:$0xff]
        %v3191 = vld [vmem:[%s4 + $0x50] sm:$0xff]
        %v3192 = vld [vmem:[%s4 + $0x58] sm:$0xff]
        %v3193 = vld [vmem:[%s4 + $0x60] sm:$0xff]
        %v3194 = vld [vmem:[%s4 + $0x68] sm:$0xff]
        %vm3195 = vcmask 646144
        %v3197 = vsel %vm3195, %v3182, 0
        %v3200 = vsel %vm3195, %v3184, 0
        %v3203 = vsel %vm3195, %v3186, 0
        %v3206 = vsel %vm3195, %v3188, 0
        %v3209 = vsel %vm3195, %v3190, 0
        %v3212 = vsel %vm3195, %v3192, 0
        %v3215 = vsel %vm3195, %v3194, 0
        %v3218 = vsel %vm494, %v3180, 0
        %3220 = vmatprep.subr.mxu0 0.0
        %3221 = vmatpush1.msra.mxu0 %v3155
        %3222 = vmatprep.subr.mxu0 0.0
        %3223 = vmatpush1.msra.mxu0 %v3156
        %3224 = vmatprep.subr.mxu0 0.0
        %3225 = vmatpush1.msra.mxu0 %v3157
        %3226 = vmatprep.subr.mxu0 0.0
        %3227 = vmatpush1.msra.mxu0 %v3158
        %3228 = vmatprep.subr.mxu0 0.0
        %3229 = vmatpush1.msra.mxu0 %v3159
        %3230 = vmatprep.subr.mxu0 0.0
        %3231 = vmatpush1.msra.mxu0 %v3160
        %3232 = vmatprep.subr.mxu0 0.0
        %3233 = vmatpush1.msra.mxu0 %v3161
        %3234 = vmatprep.subr.mxu0 0.0
        %3235 = vmatpush1.msra.mxu0 %v3162
        %3236 = vmatprep.subr.mxu0 0.0
        %3237 = vmatpush1.msra.mxu0 %v3163
        %3238 = vmatprep.subr.mxu0 0.0
        %3239 = vmatpush1.msra.mxu0 %v3164
        %3240 = vmatprep.subr.mxu0 0.0
        %3241 = vmatpush1.msra.mxu0 %v3165
        %3242 = vmatprep.subr.mxu0 0.0
        %3243 = vmatpush1.msra.mxu0 %v3166
        %3244 = vmatprep.subr.mxu0 0.0
        %3245 = vmatpush1.msra.mxu0 %v3167
        %3246 = vmatprep.subr.mxu0 0.0
        %3247 = vmatpush1.msra.mxu0 %v3168
        %3248 = vmatprep.subr.mxu0 0.0
        %3249 = vmatpush1.msra.mxu0 %v3169
        %3250 = vmatprep.subr.mxu0 0.0
        %3251 = vmatpush1.msra.mxu0 %v3170
        %3252 = vmatprep.subr.mxu0 0.0
        %3253 = vmatpush1.msra.mxu0 %v3171
        %3254 = vmatprep.subr.mxu0 0.0
        %3255 = vmatpush1.msra.mxu0 %v3172
        %3256 = vmatprep.subr.mxu0 0.0
        %3257 = vmatpush1.msra.mxu0 %v3173
        %3258 = vmatprep.subr.mxu0 0.0
        %3259 = vmatpush1.msra.mxu0 %v3174
        %3260 = vmatprep.subr.mxu0 0.0
        %3261 = vmatpush1.msra.mxu0 %v3175
        %3262 = vmatprep.subr.mxu0 0.0
        %3263 = vmatpush1.msra.mxu0 %v3176
        %3264 = vmatprep.subr.mxu0 0.0
        %3265 = vmatpush1.msra.mxu0 %v3177
        %3266 = vmatprep.subr.mxu0 0.0
        %3267 = vmatpush1.msra.mxu0 %v3178
        %3268 = vmatprep.subr.mxu0 0.0
        %3269 = vmatpush1.msra.mxu0 %v3179
        %3270 = vmatprep.subr.mxu0 0.0
        %3271 = vmatpush1.msra.mxu0 %v3218
        %3272 = vmatprep.subr.mxu0 0.0
        %3273 = vmatpush1.msra.mxu0 0.0
        %3274 = vmatprep.subr.mxu0 0.0
        %3275 = vmatpush1.msra.mxu0 0.0
        %3276 = vmatprep.subr.mxu0 0.0
        %3277 = vmatpush1.msra.mxu0 0.0
        %3278 = vmatprep.subr.mxu0 0.0
        %3279 = vmatpush1.msra.mxu0 0.0
        %3280 = vmatprep.subr.mxu0 0.0
        %3281 = vmatpush1.msra.mxu0 0.0
        %3282 = vmatprep.subr.mxu0 0.0
        %3283 = vmatpush1.msra.mxu0 0.0
        %3284 = vmatprep.mubr.f32.mxu0 %v3197
        %3285 = vmatmul.mubr.f32.gmra.mrb[0].mxu0 %v3181
        %v3286 = vpop.f32.mrb[0].mxu0
        %v3287 = vadd.f32 0.0, %v3286
        %v3288 = vpop.f32.mrb[0].mxu0
        %3289 = vmatprep.mubr.f32.mxu0 %v3200
        %3290 = vmatmul.mubr.f32.gmra.mrb[0].mxu0 %v3183
        %v3291 = vpop.f32.mrb[0].mxu0
        %v3292 = vadd.f32 0.0, %v3291
        %v3293 = vpop.f32.mrb[0].mxu0
        %3294 = vmatprep.mubr.f32.mxu0 %v3203
        %3295 = vmatmul.mubr.f32.gmra.mrb[0].mxu0 %v3185
        %v3296 = vpop.f32.mrb[0].mxu0
        %v3297 = vadd.f32 0.0, %v3296
        %v3298 = vpop.f32.mrb[0].mxu0
        %3299 = vmatprep.mubr.f32.mxu0 %v3206
        %3300 = vmatmul.mubr.f32.gmra.mrb[0].mxu0 %v3187
        %v3301 = vpop.f32.mrb[0].mxu0
        %v3302 = vadd.f32 0.0, %v3301
        %v3303 = vpop.f32.mrb[0].mxu0
        %3304 = vmatprep.mubr.f32.mxu0 %v3209
        %3305 = vmatmul.mubr.f32.gmra.mrb[0].mxu0 %v3189
        %v3306 = vpop.f32.mrb[0].mxu0
        %v3307 = vadd.f32 0.0, %v3306
        %v3308 = vpop.f32.mrb[0].mxu0
        %3309 = vmatprep.mubr.f32.mxu0 %v3212
        %3310 = vmatmul.mubr.f32.gmra.mrb[0].mxu0 %v3191
        %v3311 = vpop.f32.mrb[0].mxu0
        %v3312 = vadd.f32 0.0, %v3311
        %v3313 = vpop.f32.mrb[0].mxu0
        %3314 = vmatprep.mubr.f32.mxu0 %v3215
        %3315 = vmatmul.mubr.f32.gmra.mrb[0].mxu0 %v3193
        %v3316 = vpop.f32.mrb[0].mxu0
        %v3317 = vadd.f32 0.0, %v3316
        %v3318 = vpop.f32.mrb[0].mxu0
        %3319 = vdwg.mxu0
        %v3320 = vld [vmem:[%s5] sm:$0xff]
        %v3321 = vld [vmem:[%s5 + $0x8] sm:$0xff]
        %v3322 = vld [vmem:[%s5 + $0x10] sm:$0xff]
        %v3323 = vld [vmem:[%s5 + $0x18] sm:$0xff]
        %v3324 = vld [vmem:[%s5 + $0x20] sm:$0xff]
        %v3325 = vld [vmem:[%s5 + $0x28] sm:$0xff]
        %v3326 = vld [vmem:[%s5 + $0x30] sm:$0xff]
        %v3327 = vld [vmem:[%s5 + $0x38] sm:$0xff]
        %s3328 = scalar_lea.vmem %s5, 64
        %v3329 = vld [vmem:[%s3328] sm:$0xff]
        %v3330 = vld [vmem:[%s3328 + $0x8] sm:$0xff]
        %v3331 = vld [vmem:[%s3328 + $0x10] sm:$0xff]
        %v3332 = vld [vmem:[%s3328 + $0x18] sm:$0xff]
        %v3333 = vld [vmem:[%s3328 + $0x20] sm:$0xff]
        %v3334 = vld [vmem:[%s3328 + $0x28] sm:$0xff]
        %v3335 = vld [vmem:[%s3328 + $0x30] sm:$0xff]
        %v3336 = vld [vmem:[%s3328 + $0x38] sm:$0xff]
        %v3342 = vrot.slane %v3287, 1
        %v3343 = vrot.slane %v3292, 1
        %v3344 = vsel %vm494, %v3342, %v3343
        %v3345 = vrot.slane %v3297, 1
        %v3346 = vsel %vm494, %v3343, %v3345
        %v3347 = vrot.slane %v3302, 1
        %v3348 = vsel %vm494, %v3345, %v3347
        %v3349 = vrot.slane %v3307, 1
        %v3350 = vsel %vm494, %v3347, %v3349
        %vm3351 = vcmask 523264
        %v3352 = vsel %vm3351, %v3344, 0
        %v3354 = vsel %vm3351, %v3346, 0
        %v3356 = vsel %vm3351, %v3348, 0
        %v3358 = vsel %vm3351, %v3350, 0
        %v3360 = vsel %vm3351, %v3349, 0
        %3362 = vmatprep.subr.mxu0 0.0
        %3363 = vmatpush1.msra.mxu0 %v3329
        %3364 = vmatprep.subr.mxu0 0.0
        %3365 = vmatpush1.msra.mxu0 %v3330
        %3366 = vmatprep.subr.mxu0 0.0
        %3367 = vmatpush1.msra.mxu0 %v3331
        %3368 = vmatprep.subr.mxu0 0.0
        %3369 = vmatpush1.msra.mxu0 %v3332
        %3370 = vmatprep.subr.mxu0 0.0
        %3371 = vmatpush1.msra.mxu0 %v3333
        %3372 = vmatprep.subr.mxu0 0.0
        %3373 = vmatpush1.msra.mxu0 %v3334
        %3374 = vmatprep.subr.mxu0 0.0
        %3375 = vmatpush1.msra.mxu0 %v3335
        %3376 = vmatprep.subr.mxu0 0.0
        %3377 = vmatpush1.msra.mxu0 %v3336
        %3378 = vmatprep.subr.mxu0 0.0
        %3379 = vmatpush1.msra.mxu0 0.0
        %3380 = vmatprep.subr.mxu0 0.0
        %3381 = vmatpush1.msra.mxu0 0.0
        %3382 = vmatprep.subr.mxu0 0.0
        %3383 = vmatpush1.msra.mxu0 0.0
        %3384 = vmatprep.subr.mxu0 0.0
        %3385 = vmatpush1.msra.mxu0 0.0
        %3386 = vmatprep.subr.mxu0 0.0
        %3387 = vmatpush1.msra.mxu0 0.0
        %3388 = vmatprep.subr.mxu0 0.0
        %3389 = vmatpush1.msra.mxu0 0.0
        %3390 = vmatprep.subr.mxu0 0.0
        %3391 = vmatpush1.msra.mxu0 0.0
        %3392 = vmatprep.subr.mxu0 0.0
        %3393 = vmatpush1.msra.mxu0 0.0
        %3394 = vmatprep.subr.mxu0 0.0
        %3395 = vmatpush1.msra.mxu0 0.0
        %3396 = vmatprep.subr.mxu0 0.0
        %3397 = vmatpush1.msra.mxu0 0.0
        %3398 = vmatprep.subr.mxu0 0.0
        %3399 = vmatpush1.msra.mxu0 0.0
        %3400 = vmatprep.subr.mxu0 0.0
        %3401 = vmatpush1.msra.mxu0 0.0
        %3402 = vmatprep.subr.mxu0 0.0
        %3403 = vmatpush1.msra.mxu0 0.0
        %3404 = vmatprep.subr.mxu0 0.0
        %3405 = vmatpush1.msra.mxu0 0.0
        %3406 = vmatprep.subr.mxu0 0.0
        %3407 = vmatpush1.msra.mxu0 0.0
        %3408 = vmatprep.subr.mxu0 0.0
        %3409 = vmatpush1.msra.mxu0 0.0
        %3410 = vmatprep.subr.mxu0 0.0
        %3411 = vmatpush1.msra.mxu0 0.0
        %3412 = vmatprep.subr.mxu0 0.0
        %3413 = vmatpush1.msra.mxu0 0.0
        %3414 = vmatprep.subr.mxu0 0.0
        %3415 = vmatpush1.msra.mxu0 0.0
        %3416 = vmatprep.subr.mxu0 0.0
        %3417 = vmatpush1.msra.mxu0 0.0
        %3418 = vmatprep.subr.mxu0 0.0
        %3419 = vmatpush1.msra.mxu0 0.0
        %3420 = vmatprep.subr.mxu0 0.0
        %3421 = vmatpush1.msra.mxu0 0.0
        %3422 = vmatprep.subr.mxu0 0.0
        %3423 = vmatpush1.msra.mxu0 0.0
        %3424 = vmatprep.subr.mxu0 0.0
        %3425 = vmatpush1.msra.mxu0 0.0
        %3426 = vmatprep.mubr.f32.mxu0 0.0
        %3427 = vmatmul.mubr.f32.gmra.mrb[0].mxu0 %v3352
        %v3428 = vpop.f32.mrb[0].mxu0
        %v3429 = vadd.f32 0.0, %v3428
        %v3430 = vpop.f32.mrb[0].mxu0
        %3431 = vmatprep.mubr.f32.mxu0 0.0
        %3432 = vmatmul.mubr.f32.gmra.mrb[0].mxu0 %v3354
        %v3433 = vpop.f32.mrb[0].mxu0
        %v3434 = vadd.f32 0.0, %v3433
        %v3435 = vpop.f32.mrb[0].mxu0
        %3436 = vmatprep.mubr.f32.mxu0 0.0
        %3437 = vmatmul.mubr.f32.gmra.mrb[0].mxu0 %v3356
        %v3438 = vpop.f32.mrb[0].mxu0
        %v3439 = vadd.f32 0.0, %v3438
        %v3440 = vpop.f32.mrb[0].mxu0
        %3441 = vmatprep.mubr.f32.mxu0 0.0
        %3442 = vmatmul.mubr.f32.gmra.mrb[0].mxu0 %v3358
        %v3443 = vpop.f32.mrb[0].mxu0
        %v3444 = vadd.f32 0.0, %v3443
        %v3445 = vpop.f32.mrb[0].mxu0
        %3446 = vmatprep.mubr.f32.mxu0 0.0
        %3447 = vmatmul.mubr.f32.gmra.mrb[0].mxu0 %v3360
        %v3448 = vpop.f32.mrb[0].mxu0
        %v3449 = vadd.f32 0.0, %v3448
        %v3450 = vpop.f32.mrb[0].mxu0
        %3451 = vdwg.mxu0
        %v3452 = vsel %vm3351, %v3287, 0
        %v3454 = vsel %vm3351, %v3292, 0
        %v3456 = vsel %vm3351, %v3297, 0
        %v3458 = vsel %vm3351, %v3302, 0
        %v3460 = vsel %vm3351, %v3307, 0
        %3462 = vmatprep.subr.mxu0 0.0
        %3463 = vmatpush1.msra.mxu0 %v3320
        %3464 = vmatprep.subr.mxu0 0.0
        %3465 = vmatpush1.msra.mxu0 %v3321
        %3466 = vmatprep.subr.mxu0 0.0
        %3467 = vmatpush1.msra.mxu0 %v3322
        %3468 = vmatprep.subr.mxu0 0.0
        %3469 = vmatpush1.msra.mxu0 %v3323
        %3470 = vmatprep.subr.mxu0 0.0
        %3471 = vmatpush1.msra.mxu0 %v3324
        %3472 = vmatprep.subr.mxu0 0.0
        %3473 = vmatpush1.msra.mxu0 %v3325
        %3474 = vmatprep.subr.mxu0 0.0
        %3475 = vmatpush1.msra.mxu0 %v3326
        %3476 = vmatprep.subr.mxu0 0.0
        %3477 = vmatpush1.msra.mxu0 %v3327
        %3478 = vmatprep.subr.mxu0 0.0
        %3479 = vmatpush1.msra.mxu0 0.0
        %3480 = vmatprep.subr.mxu0 0.0
        %3481 = vmatpush1.msra.mxu0 0.0
        %3482 = vmatprep.subr.mxu0 0.0
        %3483 = vmatpush1.msra.mxu0 0.0
        %3484 = vmatprep.subr.mxu0 0.0
        %3485 = vmatpush1.msra.mxu0 0.0
        %3486 = vmatprep.subr.mxu0 0.0
        %3487 = vmatpush1.msra.mxu0 0.0
        %3488 = vmatprep.subr.mxu0 0.0
        %3489 = vmatpush1.msra.mxu0 0.0
        %3490 = vmatprep.subr.mxu0 0.0
        %3491 = vmatpush1.msra.mxu0 0.0
        %3492 = vmatprep.subr.mxu0 0.0
        %3493 = vmatpush1.msra.mxu0 0.0
        %3494 = vmatprep.subr.mxu0 0.0
        %3495 = vmatpush1.msra.mxu0 0.0
        %3496 = vmatprep.subr.mxu0 0.0
        %3497 = vmatpush1.msra.mxu0 0.0
        %3498 = vmatprep.subr.mxu0 0.0
        %3499 = vmatpush1.msra.mxu0 0.0
        %3500 = vmatprep.subr.mxu0 0.0
        %3501 = vmatpush1.msra.mxu0 0.0
        %3502 = vmatprep.subr.mxu0 0.0
        %3503 = vmatpush1.msra.mxu0 0.0
        %3504 = vmatprep.subr.mxu0 0.0
        %3505 = vmatpush1.msra.mxu0 0.0
        %3506 = vmatprep.subr.mxu0 0.0
        %3507 = vmatpush1.msra.mxu0 0.0
        %3508 = vmatprep.subr.mxu0 0.0
        %3509 = vmatpush1.msra.mxu0 0.0
        %3510 = vmatprep.subr.mxu0 0.0
        %3511 = vmatpush1.msra.mxu0 0.0
        %3512 = vmatprep.subr.mxu0 0.0
        %3513 = vmatpush1.msra.mxu0 0.0
        %3514 = vmatprep.subr.mxu0 0.0
        %3515 = vmatpush1.msra.mxu0 0.0
        %3516 = vmatprep.subr.mxu0 0.0
        %3517 = vmatpush1.msra.mxu0 0.0
        %3518 = vmatprep.subr.mxu0 0.0
        %3519 = vmatpush1.msra.mxu0 0.0
        %3520 = vmatprep.subr.mxu0 0.0
        %3521 = vmatpush1.msra.mxu0 0.0
        %3522 = vmatprep.subr.mxu0 0.0
        %3523 = vmatpush1.msra.mxu0 0.0
        %3524 = vmatprep.subr.mxu0 0.0
        %3525 = vmatpush1.msra.mxu0 0.0
        %3526 = vmatprep.mubr.f32.mxu0 0.0
        %3527 = vmatmul.mubr.f32.gmra.mrb[0].mxu0 %v3452
        %v3528 = vpop.f32.mrb[0].mxu0
        %v3529 = vadd.f32 %v3429, %v3528
        %v3530 = vpop.f32.mrb[0].mxu0
        %3531 = vmatprep.mubr.f32.mxu0 0.0
        %3532 = vmatmul.mubr.f32.gmra.mrb[0].mxu0 %v3454
        %v3533 = vpop.f32.mrb[0].mxu0
        %v3534 = vadd.f32 %v3434, %v3533
        %v3535 = vpop.f32.mrb[0].mxu0
        %3536 = vmatprep.mubr.f32.mxu0 0.0
        %3537 = vmatmul.mubr.f32.gmra.mrb[0].mxu0 %v3456
        %v3538 = vpop.f32.mrb[0].mxu0
        %v3539 = vadd.f32 %v3439, %v3538
        %v3540 = vpop.f32.mrb[0].mxu0
        %3541 = vmatprep.mubr.f32.mxu0 0.0
        %3542 = vmatmul.mubr.f32.gmra.mrb[0].mxu0 %v3458
        %v3543 = vpop.f32.mrb[0].mxu0
        %v3544 = vadd.f32 %v3444, %v3543
        %v3545 = vpop.f32.mrb[0].mxu0
        %3546 = vmatprep.mubr.f32.mxu0 0.0
        %3547 = vmatmul.mubr.f32.gmra.mrb[0].mxu0 %v3460
        %v3548 = vpop.f32.mrb[0].mxu0
        %v3549 = vadd.f32 %v3449, %v3548
        %v3550 = vpop.f32.mrb[0].mxu0
        %3551 = vdwg.mxu0
        %s3552 = scalar_lea.vmem %s5, 128
        %v3553 = vld [vmem:[%s3552] sm:$0xff]
        %v3554 = vld [vmem:[%s3552 + $0x8] sm:$0xff]
        %v3555 = vld [vmem:[%s3552 + $0x10] sm:$0xff]
        %v3556 = vld [vmem:[%s3552 + $0x18] sm:$0xff]
        %v3557 = vld [vmem:[%s3552 + $0x20] sm:$0xff]
        %v3558 = vld [vmem:[%s3552 + $0x28] sm:$0xff]
        %v3559 = vld [vmem:[%s3552 + $0x30] sm:$0xff]
        %v3560 = vld [vmem:[%s3552 + $0x38] sm:$0xff]
        %v3561 = vrot.slane %v3287, 2
        %v3562 = vrot.slane %v3292, 2
        %v3563 = vsel %vm1084, %v3561, %v3562
        %v3564 = vrot.slane %v3297, 2
        %v3565 = vsel %vm1084, %v3562, %v3564
        %v3566 = vrot.slane %v3302, 2
        %v3567 = vsel %vm1084, %v3564, %v3566
        %v3568 = vrot.slane %v3307, 2
        %v3569 = vsel %vm1084, %v3566, %v3568
        %v3570 = vsel %vm3351, %v3563, 0
        %v3572 = vsel %vm3351, %v3565, 0
        %v3574 = vsel %vm3351, %v3567, 0
        %v3576 = vsel %vm3351, %v3569, 0
        %v3578 = vsel %vm3351, %v3568, 0
        %3580 = vmatprep.subr.mxu0 0.0
        %3581 = vmatpush1.msra.mxu0 %v3553
        %3582 = vmatprep.subr.mxu0 0.0
        %3583 = vmatpush1.msra.mxu0 %v3554
        %3584 = vmatprep.subr.mxu0 0.0
        %3585 = vmatpush1.msra.mxu0 %v3555
        %3586 = vmatprep.subr.mxu0 0.0
        %3587 = vmatpush1.msra.mxu0 %v3556
        %3588 = vmatprep.subr.mxu0 0.0
        %3589 = vmatpush1.msra.mxu0 %v3557
        %3590 = vmatprep.subr.mxu0 0.0
        %3591 = vmatpush1.msra.mxu0 %v3558
        %3592 = vmatprep.subr.mxu0 0.0
        %3593 = vmatpush1.msra.mxu0 %v3559
        %3594 = vmatprep.subr.mxu0 0.0
        %3595 = vmatpush1.msra.mxu0 %v3560
        %3596 = vmatprep.subr.mxu0 0.0
        %3597 = vmatpush1.msra.mxu0 0.0
        %3598 = vmatprep.subr.mxu0 0.0
        %3599 = vmatpush1.msra.mxu0 0.0
        %3600 = vmatprep.subr.mxu0 0.0
        %3601 = vmatpush1.msra.mxu0 0.0
        %3602 = vmatprep.subr.mxu0 0.0
        %3603 = vmatpush1.msra.mxu0 0.0
        %3604 = vmatprep.subr.mxu0 0.0
        %3605 = vmatpush1.msra.mxu0 0.0
        %3606 = vmatprep.subr.mxu0 0.0
        %3607 = vmatpush1.msra.mxu0 0.0
        %3608 = vmatprep.subr.mxu0 0.0
        %3609 = vmatpush1.msra.mxu0 0.0
        %3610 = vmatprep.subr.mxu0 0.0
        %3611 = vmatpush1.msra.mxu0 0.0
        %3612 = vmatprep.subr.mxu0 0.0
        %3613 = vmatpush1.msra.mxu0 0.0
        %3614 = vmatprep.subr.mxu0 0.0
        %3615 = vmatpush1.msra.mxu0 0.0
        %3616 = vmatprep.subr.mxu0 0.0
        %3617 = vmatpush1.msra.mxu0 0.0
        %3618 = vmatprep.subr.mxu0 0.0
        %3619 = vmatpush1.msra.mxu0 0.0
        %3620 = vmatprep.subr.mxu0 0.0
        %3621 = vmatpush1.msra.mxu0 0.0
        %3622 = vmatprep.subr.mxu0 0.0
        %3623 = vmatpush1.msra.mxu0 0.0
        %3624 = vmatprep.subr.mxu0 0.0
        %3625 = vmatpush1.msra.mxu0 0.0
        %3626 = vmatprep.subr.mxu0 0.0
        %3627 = vmatpush1.msra.mxu0 0.0
        %3628 = vmatprep.subr.mxu0 0.0
        %3629 = vmatpush1.msra.mxu0 0.0
        %3630 = vmatprep.subr.mxu0 0.0
        %3631 = vmatpush1.msra.mxu0 0.0
        %3632 = vmatprep.subr.mxu0 0.0
        %3633 = vmatpush1.msra.mxu0 0.0
        %3634 = vmatprep.subr.mxu0 0.0
        %3635 = vmatpush1.msra.mxu0 0.0
        %3636 = vmatprep.subr.mxu0 0.0
        %3637 = vmatpush1.msra.mxu0 0.0
        %3638 = vmatprep.subr.mxu0 0.0
        %3639 = vmatpush1.msra.mxu0 0.0
        %3640 = vmatprep.subr.mxu0 0.0
        %3641 = vmatpush1.msra.mxu0 0.0
        %3642 = vmatprep.subr.mxu0 0.0
        %3643 = vmatpush1.msra.mxu0 0.0
        %3644 = vmatprep.mubr.f32.mxu0 0.0
        %3645 = vmatmul.mubr.f32.gmra.mrb[0].mxu0 %v3570
        %v3646 = vpop.f32.mrb[0].mxu0
        %v3647 = vadd.f32 0.0, %v3646
        %v3648 = vpop.f32.mrb[0].mxu0
        %3649 = vmatprep.mubr.f32.mxu0 0.0
        %3650 = vmatmul.mubr.f32.gmra.mrb[0].mxu0 %v3572
        %v3651 = vpop.f32.mrb[0].mxu0
        %v3652 = vadd.f32 0.0, %v3651
        %v3653 = vpop.f32.mrb[0].mxu0
        %3654 = vmatprep.mubr.f32.mxu0 0.0
        %3655 = vmatmul.mubr.f32.gmra.mrb[0].mxu0 %v3574
        %v3656 = vpop.f32.mrb[0].mxu0
        %v3657 = vadd.f32 0.0, %v3656
        %v3658 = vpop.f32.mrb[0].mxu0
        %3659 = vmatprep.mubr.f32.mxu0 0.0
        %3660 = vmatmul.mubr.f32.gmra.mrb[0].mxu0 %v3576
        %v3661 = vpop.f32.mrb[0].mxu0
        %v3662 = vadd.f32 0.0, %v3661
        %v3663 = vpop.f32.mrb[0].mxu0
        %3664 = vmatprep.mubr.f32.mxu0 0.0
        %3665 = vmatmul.mubr.f32.gmra.mrb[0].mxu0 %v3578
        %v3666 = vpop.f32.mrb[0].mxu0
        %v3667 = vadd.f32 0.0, %v3666
        %v3668 = vpop.f32.mrb[0].mxu0
        %3669 = vdwg.mxu0
        %v3670 = vadd.f32 %v3529, %v3647
        %v3671 = vadd.f32 %v3534, %v3652
        %v3672 = vadd.f32 %v3539, %v3657
        %v3673 = vadd.f32 %v3544, %v3662
        %v3674 = vadd.f32 %v3549, %v3667
        %s3675 = scalar_lea.vmem %s5, 192
        %v3676 = vld [vmem:[%s3675] sm:$0xff]
        %v3677 = vld [vmem:[%s3675 + $0x8] sm:$0xff]
        %v3678 = vld [vmem:[%s3675 + $0x10] sm:$0xff]
        %v3679 = vld [vmem:[%s3675 + $0x18] sm:$0xff]
        %v3680 = vld [vmem:[%s3675 + $0x20] sm:$0xff]
        %v3681 = vld [vmem:[%s3675 + $0x28] sm:$0xff]
        %v3682 = vld [vmem:[%s3675 + $0x30] sm:$0xff]
        %v3683 = vld [vmem:[%s3675 + $0x38] sm:$0xff]
        %vm3685 = vcmask 1040384
        %v3686 = vrot.slane %v3287, 7
        %v3687 = vrot.slane %v3292, 7
        %v3688 = vsel %vm3685, %v3686, %v3687
        %v3689 = vrot.slane %v3297, 7
        %v3690 = vsel %vm3685, %v3687, %v3689
        %v3691 = vrot.slane %v3302, 7
        %v3692 = vsel %vm3685, %v3689, %v3691
        %v3693 = vrot.slane %v3307, 7
        %v3694 = vsel %vm3685, %v3691, %v3693
        %v3695 = vrot.slane %v3312, 7
        %v3696 = vsel %vm3685, %v3693, %v3695
        %v3697 = vsel %vm3351, %v3688, 0
        %v3699 = vsel %vm3351, %v3690, 0
        %v3701 = vsel %vm3351, %v3692, 0
        %v3703 = vsel %vm3351, %v3694, 0
        %v3705 = vsel %vm3351, %v3696, 0
        %3707 = vmatprep.subr.mxu0 0.0
        %3708 = vmatpush1.msra.mxu0 %v3676
        %3709 = vmatprep.subr.mxu0 0.0
        %3710 = vmatpush1.msra.mxu0 %v3677
        %3711 = vmatprep.subr.mxu0 0.0
        %3712 = vmatpush1.msra.mxu0 %v3678
        %3713 = vmatprep.subr.mxu0 0.0
        %3714 = vmatpush1.msra.mxu0 %v3679
        %3715 = vmatprep.subr.mxu0 0.0
        %3716 = vmatpush1.msra.mxu0 %v3680
        %3717 = vmatprep.subr.mxu0 0.0
        %3718 = vmatpush1.msra.mxu0 %v3681
        %3719 = vmatprep.subr.mxu0 0.0
        %3720 = vmatpush1.msra.mxu0 %v3682
        %3721 = vmatprep.subr.mxu0 0.0
        %3722 = vmatpush1.msra.mxu0 %v3683
        %3723 = vmatprep.subr.mxu0 0.0
        %3724 = vmatpush1.msra.mxu0 0.0
        %3725 = vmatprep.subr.mxu0 0.0
        %3726 = vmatpush1.msra.mxu0 0.0
        %3727 = vmatprep.subr.mxu0 0.0
        %3728 = vmatpush1.msra.mxu0 0.0
        %3729 = vmatprep.subr.mxu0 0.0
        %3730 = vmatpush1.msra.mxu0 0.0
        %3731 = vmatprep.subr.mxu0 0.0
        %3732 = vmatpush1.msra.mxu0 0.0
        %3733 = vmatprep.subr.mxu0 0.0
        %3734 = vmatpush1.msra.mxu0 0.0
        %3735 = vmatprep.subr.mxu0 0.0
        %3736 = vmatpush1.msra.mxu0 0.0
        %3737 = vmatprep.subr.mxu0 0.0
        %3738 = vmatpush1.msra.mxu0 0.0
        %3739 = vmatprep.subr.mxu0 0.0
        %3740 = vmatpush1.msra.mxu0 0.0
        %3741 = vmatprep.subr.mxu0 0.0
        %3742 = vmatpush1.msra.mxu0 0.0
        %3743 = vmatprep.subr.mxu0 0.0
        %3744 = vmatpush1.msra.mxu0 0.0
        %3745 = vmatprep.subr.mxu0 0.0
        %3746 = vmatpush1.msra.mxu0 0.0
        %3747 = vmatprep.subr.mxu0 0.0
        %3748 = vmatpush1.msra.mxu0 0.0
        %3749 = vmatprep.subr.mxu0 0.0
        %3750 = vmatpush1.msra.mxu0 0.0
        %3751 = vmatprep.subr.mxu0 0.0
        %3752 = vmatpush1.msra.mxu0 0.0
        %3753 = vmatprep.subr.mxu0 0.0
        %3754 = vmatpush1.msra.mxu0 0.0
        %3755 = vmatprep.subr.mxu0 0.0
        %3756 = vmatpush1.msra.mxu0 0.0
        %3757 = vmatprep.subr.mxu0 0.0
        %3758 = vmatpush1.msra.mxu0 0.0
        %3759 = vmatprep.subr.mxu0 0.0
        %3760 = vmatpush1.msra.mxu0 0.0
        %3761 = vmatprep.subr.mxu0 0.0
        %3762 = vmatpush1.msra.mxu0 0.0
        %3763 = vmatprep.subr.mxu0 0.0
        %3764 = vmatpush1.msra.mxu0 0.0
        %3765 = vmatprep.subr.mxu0 0.0
        %3766 = vmatpush1.msra.mxu0 0.0
        %3767 = vmatprep.subr.mxu0 0.0
        %3768 = vmatpush1.msra.mxu0 0.0
        %3769 = vmatprep.subr.mxu0 0.0
        %3770 = vmatpush1.msra.mxu0 0.0
        %3771 = vmatprep.mubr.f32.mxu0 0.0
        %3772 = vmatmul.mubr.f32.gmra.mrb[0].mxu0 %v3697
        %v3773 = vpop.f32.mrb[0].mxu0
        %v3774 = vadd.f32 0.0, %v3773
        %v3775 = vpop.f32.mrb[0].mxu0
        %3776 = vmatprep.mubr.f32.mxu0 0.0
        %3777 = vmatmul.mubr.f32.gmra.mrb[0].mxu0 %v3699
        %v3778 = vpop.f32.mrb[0].mxu0
        %v3779 = vadd.f32 0.0, %v3778
        %v3780 = vpop.f32.mrb[0].mxu0
        %3781 = vmatprep.mubr.f32.mxu0 0.0
        %3782 = vmatmul.mubr.f32.gmra.mrb[0].mxu0 %v3701
        %v3783 = vpop.f32.mrb[0].mxu0
        %v3784 = vadd.f32 0.0, %v3783
        %v3785 = vpop.f32.mrb[0].mxu0
        %3786 = vmatprep.mubr.f32.mxu0 0.0
        %3787 = vmatmul.mubr.f32.gmra.mrb[0].mxu0 %v3703
        %v3788 = vpop.f32.mrb[0].mxu0
        %v3789 = vadd.f32 0.0, %v3788
        %v3790 = vpop.f32.mrb[0].mxu0
        %3791 = vmatprep.mubr.f32.mxu0 0.0
        %3792 = vmatmul.mubr.f32.gmra.mrb[0].mxu0 %v3705
        %v3793 = vpop.f32.mrb[0].mxu0
        %v3794 = vadd.f32 0.0, %v3793
        %v3795 = vpop.f32.mrb[0].mxu0
        %3796 = vdwg.mxu0
        %v3797 = vadd.f32 %v3670, %v3774
        %v3798 = vadd.f32 %v3671, %v3779
        %v3799 = vadd.f32 %v3672, %v3784
        %v3800 = vadd.f32 %v3673, %v3789
        %v3801 = vadd.f32 %v3674, %v3794
        %s3802 = scalar_lea.vmem %s5, 256
        %v3803 = vld [vmem:[%s3802] sm:$0xff]
        %v3804 = vld [vmem:[%s3802 + $0x8] sm:$0xff]
        %v3805 = vld [vmem:[%s3802 + $0x10] sm:$0xff]
        %v3806 = vld [vmem:[%s3802 + $0x18] sm:$0xff]
        %v3807 = vld [vmem:[%s3802 + $0x20] sm:$0xff]
        %v3808 = vld [vmem:[%s3802 + $0x28] sm:$0xff]
        %v3809 = vld [vmem:[%s3802 + $0x30] sm:$0xff]
        %v3810 = vld [vmem:[%s3802 + $0x38] sm:$0xff]
        %v3811 = vsel %vm3351, %v3312, 0
        %3813 = vmatprep.subr.mxu0 0.0
        %3814 = vmatpush1.msra.mxu0 %v3803
        %3815 = vmatprep.subr.mxu0 0.0
        %3816 = vmatpush1.msra.mxu0 %v3804
        %3817 = vmatprep.subr.mxu0 0.0
        %3818 = vmatpush1.msra.mxu0 %v3805
        %3819 = vmatprep.subr.mxu0 0.0
        %3820 = vmatpush1.msra.mxu0 %v3806
        %3821 = vmatprep.subr.mxu0 0.0
        %3822 = vmatpush1.msra.mxu0 %v3807
        %3823 = vmatprep.subr.mxu0 0.0
        %3824 = vmatpush1.msra.mxu0 %v3808
        %3825 = vmatprep.subr.mxu0 0.0
        %3826 = vmatpush1.msra.mxu0 %v3809
        %3827 = vmatprep.subr.mxu0 0.0
        %3828 = vmatpush1.msra.mxu0 %v3810
        %3829 = vmatprep.subr.mxu0 0.0
        %3830 = vmatpush1.msra.mxu0 0.0
        %3831 = vmatprep.subr.mxu0 0.0
        %3832 = vmatpush1.msra.mxu0 0.0
        %3833 = vmatprep.subr.mxu0 0.0
        %3834 = vmatpush1.msra.mxu0 0.0
        %3835 = vmatprep.subr.mxu0 0.0
        %3836 = vmatpush1.msra.mxu0 0.0
        %3837 = vmatprep.subr.mxu0 0.0
        %3838 = vmatpush1.msra.mxu0 0.0
        %3839 = vmatprep.subr.mxu0 0.0
        %3840 = vmatpush1.msra.mxu0 0.0
        %3841 = vmatprep.subr.mxu0 0.0
        %3842 = vmatpush1.msra.mxu0 0.0
        %3843 = vmatprep.subr.mxu0 0.0
        %3844 = vmatpush1.msra.mxu0 0.0
        %3845 = vmatprep.subr.mxu0 0.0
        %3846 = vmatpush1.msra.mxu0 0.0
        %3847 = vmatprep.subr.mxu0 0.0
        %3848 = vmatpush1.msra.mxu0 0.0
        %3849 = vmatprep.subr.mxu0 0.0
        %3850 = vmatpush1.msra.mxu0 0.0
        %3851 = vmatprep.subr.mxu0 0.0
        %3852 = vmatpush1.msra.mxu0 0.0
        %3853 = vmatprep.subr.mxu0 0.0
        %3854 = vmatpush1.msra.mxu0 0.0
        %3855 = vmatprep.subr.mxu0 0.0
        %3856 = vmatpush1.msra.mxu0 0.0
        %3857 = vmatprep.subr.mxu0 0.0
        %3858 = vmatpush1.msra.mxu0 0.0
        %3859 = vmatprep.subr.mxu0 0.0
        %3860 = vmatpush1.msra.mxu0 0.0
        %3861 = vmatprep.subr.mxu0 0.0
        %3862 = vmatpush1.msra.mxu0 0.0
        %3863 = vmatprep.subr.mxu0 0.0
        %3864 = vmatpush1.msra.mxu0 0.0
        %3865 = vmatprep.subr.mxu0 0.0
        %3866 = vmatpush1.msra.mxu0 0.0
        %3867 = vmatprep.subr.mxu0 0.0
        %3868 = vmatpush1.msra.mxu0 0.0
        %3869 = vmatprep.subr.mxu0 0.0
        %3870 = vmatpush1.msra.mxu0 0.0
        %3871 = vmatprep.subr.mxu0 0.0
        %3872 = vmatpush1.msra.mxu0 0.0
        %3873 = vmatprep.subr.mxu0 0.0
        %3874 = vmatpush1.msra.mxu0 0.0
        %3875 = vmatprep.subr.mxu0 0.0
        %3876 = vmatpush1.msra.mxu0 0.0
        %3877 = vmatprep.mubr.f32.mxu0 0.0
        %3878 = vmatmul.mubr.f32.gmra.mrb[0].mxu0 %v3454
        %v3879 = vpop.f32.mrb[0].mxu0
        %v3880 = vadd.f32 0.0, %v3879
        %v3881 = vpop.f32.mrb[0].mxu0
        %3882 = vmatprep.mubr.f32.mxu0 0.0
        %3883 = vmatmul.mubr.f32.gmra.mrb[0].mxu0 %v3456
        %v3884 = vpop.f32.mrb[0].mxu0
        %v3885 = vadd.f32 0.0, %v3884
        %v3886 = vpop.f32.mrb[0].mxu0
        %3887 = vmatprep.mubr.f32.mxu0 0.0
        %3888 = vmatmul.mubr.f32.gmra.mrb[0].mxu0 %v3458
        %v3889 = vpop.f32.mrb[0].mxu0
        %v3890 = vadd.f32 0.0, %v3889
        %v3891 = vpop.f32.mrb[0].mxu0
        %3892 = vmatprep.mubr.f32.mxu0 0.0
        %3893 = vmatmul.mubr.f32.gmra.mrb[0].mxu0 %v3460
        %v3894 = vpop.f32.mrb[0].mxu0
        %v3895 = vadd.f32 0.0, %v3894
        %v3896 = vpop.f32.mrb[0].mxu0
        %3897 = vmatprep.mubr.f32.mxu0 0.0
        %3898 = vmatmul.mubr.f32.gmra.mrb[0].mxu0 %v3811
        %v3899 = vpop.f32.mrb[0].mxu0
        %v3900 = vadd.f32 0.0, %v3899
        %v3901 = vpop.f32.mrb[0].mxu0
        %3902 = vdwg.mxu0
        %v3903 = vadd.f32 %v3797, %v3880
        %v3904 = vadd.f32 %v3798, %v3885
        %v3905 = vadd.f32 %v3799, %v3890
        %v3906 = vadd.f32 %v3800, %v3895
        %v3907 = vadd.f32 %v3801, %v3900
        %s3908 = scalar_lea.vmem %s5, 320
        %v3909 = vld [vmem:[%s3908] sm:$0xff]
        %v3910 = vld [vmem:[%s3908 + $0x8] sm:$0xff]
        %v3911 = vld [vmem:[%s3908 + $0x10] sm:$0xff]
        %v3912 = vld [vmem:[%s3908 + $0x18] sm:$0xff]
        %v3913 = vld [vmem:[%s3908 + $0x20] sm:$0xff]
        %v3914 = vld [vmem:[%s3908 + $0x28] sm:$0xff]
        %v3915 = vld [vmem:[%s3908 + $0x30] sm:$0xff]
        %v3916 = vld [vmem:[%s3908 + $0x38] sm:$0xff]
        %v3917 = vrot.slane %v3312, 1
        %v3918 = vsel %vm494, %v3349, %v3917
        %v3919 = vsel %vm3351, %v3918, 0
        %v3921 = vsel %vm3351, %v3917, 0
        %3923 = vmatprep.subr.mxu0 0.0
        %3924 = vmatpush1.msra.mxu0 %v3909
        %3925 = vmatprep.subr.mxu0 0.0
        %3926 = vmatpush1.msra.mxu0 %v3910
        %3927 = vmatprep.subr.mxu0 0.0
        %3928 = vmatpush1.msra.mxu0 %v3911
        %3929 = vmatprep.subr.mxu0 0.0
        %3930 = vmatpush1.msra.mxu0 %v3912
        %3931 = vmatprep.subr.mxu0 0.0
        %3932 = vmatpush1.msra.mxu0 %v3913
        %3933 = vmatprep.subr.mxu0 0.0
        %3934 = vmatpush1.msra.mxu0 %v3914
        %3935 = vmatprep.subr.mxu0 0.0
        %3936 = vmatpush1.msra.mxu0 %v3915
        %3937 = vmatprep.subr.mxu0 0.0
        %3938 = vmatpush1.msra.mxu0 %v3916
        %3939 = vmatprep.subr.mxu0 0.0
        %3940 = vmatpush1.msra.mxu0 0.0
        %3941 = vmatprep.subr.mxu0 0.0
        %3942 = vmatpush1.msra.mxu0 0.0
        %3943 = vmatprep.subr.mxu0 0.0
        %3944 = vmatpush1.msra.mxu0 0.0
        %3945 = vmatprep.subr.mxu0 0.0
        %3946 = vmatpush1.msra.mxu0 0.0
        %3947 = vmatprep.subr.mxu0 0.0
        %3948 = vmatpush1.msra.mxu0 0.0
        %3949 = vmatprep.subr.mxu0 0.0
        %3950 = vmatpush1.msra.mxu0 0.0
        %3951 = vmatprep.subr.mxu0 0.0
        %3952 = vmatpush1.msra.mxu0 0.0
        %3953 = vmatprep.subr.mxu0 0.0
        %3954 = vmatpush1.msra.mxu0 0.0
        %3955 = vmatprep.subr.mxu0 0.0
        %3956 = vmatpush1.msra.mxu0 0.0
        %3957 = vmatprep.subr.mxu0 0.0
        %3958 = vmatpush1.msra.mxu0 0.0
        %3959 = vmatprep.subr.mxu0 0.0
        %3960 = vmatpush1.msra.mxu0 0.0
        %3961 = vmatprep.subr.mxu0 0.0
        %3962 = vmatpush1.msra.mxu0 0.0
        %3963 = vmatprep.subr.mxu0 0.0
        %3964 = vmatpush1.msra.mxu0 0.0
        %3965 = vmatprep.subr.mxu0 0.0
        %3966 = vmatpush1.msra.mxu0 0.0
        %3967 = vmatprep.subr.mxu0 0.0
        %3968 = vmatpush1.msra.mxu0 0.0
        %3969 = vmatprep.subr.mxu0 0.0
        %3970 = vmatpush1.msra.mxu0 0.0
        %3971 = vmatprep.subr.mxu0 0.0
        %3972 = vmatpush1.msra.mxu0 0.0
        %3973 = vmatprep.subr.mxu0 0.0
        %3974 = vmatpush1.msra.mxu0 0.0
        %3975 = vmatprep.subr.mxu0 0.0
        %3976 = vmatpush1.msra.mxu0 0.0
        %3977 = vmatprep.subr.mxu0 0.0
        %3978 = vmatpush1.msra.mxu0 0.0
        %3979 = vmatprep.subr.mxu0 0.0
        %3980 = vmatpush1.msra.mxu0 0.0
        %3981 = vmatprep.subr.mxu0 0.0
        %3982 = vmatpush1.msra.mxu0 0.0
        %3983 = vmatprep.subr.mxu0 0.0
        %3984 = vmatpush1.msra.mxu0 0.0
        %3985 = vmatprep.subr.mxu0 0.0
        %3986 = vmatpush1.msra.mxu0 0.0
        %3987 = vmatprep.mubr.f32.mxu0 0.0
        %3988 = vmatmul.mubr.f32.gmra.mrb[0].mxu0 %v3354
        %v3989 = vpop.f32.mrb[0].mxu0
        %v3990 = vadd.f32 0.0, %v3989
        %v3991 = vpop.f32.mrb[0].mxu0
        %3992 = vmatprep.mubr.f32.mxu0 0.0
        %3993 = vmatmul.mubr.f32.gmra.mrb[0].mxu0 %v3356
        %v3994 = vpop.f32.mrb[0].mxu0
        %v3995 = vadd.f32 0.0, %v3994
        %v3996 = vpop.f32.mrb[0].mxu0
        %3997 = vmatprep.mubr.f32.mxu0 0.0
        %3998 = vmatmul.mubr.f32.gmra.mrb[0].mxu0 %v3358
        %v3999 = vpop.f32.mrb[0].mxu0
        %v4000 = vadd.f32 0.0, %v3999
        %v4001 = vpop.f32.mrb[0].mxu0
        %4002 = vmatprep.mubr.f32.mxu0 0.0
        %4003 = vmatmul.mubr.f32.gmra.mrb[0].mxu0 %v3919
        %v4004 = vpop.f32.mrb[0].mxu0
        %v4005 = vadd.f32 0.0, %v4004
        %v4006 = vpop.f32.mrb[0].mxu0
        %4007 = vmatprep.mubr.f32.mxu0 0.0
        %4008 = vmatmul.mubr.f32.gmra.mrb[0].mxu0 %v3921
        %v4009 = vpop.f32.mrb[0].mxu0
        %v4010 = vadd.f32 0.0, %v4009
        %v4011 = vpop.f32.mrb[0].mxu0
        %4012 = vdwg.mxu0
        %v4013 = vadd.f32 %v3903, %v3990
        %v4014 = vadd.f32 %v3904, %v3995
        %v4015 = vadd.f32 %v3905, %v4000
        %v4016 = vadd.f32 %v3906, %v4005
        %v4017 = vadd.f32 %v3907, %v4010
        %s4018 = scalar_lea.vmem %s5, 384
        %v4019 = vld [vmem:[%s4018] sm:$0xff]
        %v4020 = vld [vmem:[%s4018 + $0x8] sm:$0xff]
        %v4021 = vld [vmem:[%s4018 + $0x10] sm:$0xff]
        %v4022 = vld [vmem:[%s4018 + $0x18] sm:$0xff]
        %v4023 = vld [vmem:[%s4018 + $0x20] sm:$0xff]
        %v4024 = vld [vmem:[%s4018 + $0x28] sm:$0xff]
        %v4025 = vld [vmem:[%s4018 + $0x30] sm:$0xff]
        %v4026 = vld [vmem:[%s4018 + $0x38] sm:$0xff]
        %vm4028 = vcmask 1041408
        %v4029 = vrot.slane %v3292, 6
        %v4030 = vrot.slane %v3297, 6
        %v4031 = vsel %vm4028, %v4029, %v4030
        %v4032 = vrot.slane %v3302, 6
        %v4033 = vsel %vm4028, %v4030, %v4032
        %v4034 = vrot.slane %v3307, 6
        %v4035 = vsel %vm4028, %v4032, %v4034
        %v4036 = vrot.slane %v3312, 6
        %v4037 = vsel %vm4028, %v4034, %v4036
        %v4038 = vrot.slane %v3317, 6
        %v4039 = vsel %vm4028, %v4036, %v4038
        %v4040 = vsel %vm3351, %v4031, 0
        %v4042 = vsel %vm3351, %v4033, 0
        %v4044 = vsel %vm3351, %v4035, 0
        %v4046 = vsel %vm3351, %v4037, 0
        %v4048 = vsel %vm3351, %v4039, 0
        %4050 = vmatprep.subr.mxu0 0.0
        %4051 = vmatpush1.msra.mxu0 %v4019
        %4052 = vmatprep.subr.mxu0 0.0
        %4053 = vmatpush1.msra.mxu0 %v4020
        %4054 = vmatprep.subr.mxu0 0.0
        %4055 = vmatpush1.msra.mxu0 %v4021
        %4056 = vmatprep.subr.mxu0 0.0
        %4057 = vmatpush1.msra.mxu0 %v4022
        %4058 = vmatprep.subr.mxu0 0.0
        %4059 = vmatpush1.msra.mxu0 %v4023
        %4060 = vmatprep.subr.mxu0 0.0
        %4061 = vmatpush1.msra.mxu0 %v4024
        %4062 = vmatprep.subr.mxu0 0.0
        %4063 = vmatpush1.msra.mxu0 %v4025
        %4064 = vmatprep.subr.mxu0 0.0
        %4065 = vmatpush1.msra.mxu0 %v4026
        %4066 = vmatprep.subr.mxu0 0.0
        %4067 = vmatpush1.msra.mxu0 0.0
        %4068 = vmatprep.subr.mxu0 0.0
        %4069 = vmatpush1.msra.mxu0 0.0
        %4070 = vmatprep.subr.mxu0 0.0
        %4071 = vmatpush1.msra.mxu0 0.0
        %4072 = vmatprep.subr.mxu0 0.0
        %4073 = vmatpush1.msra.mxu0 0.0
        %4074 = vmatprep.subr.mxu0 0.0
        %4075 = vmatpush1.msra.mxu0 0.0
        %4076 = vmatprep.subr.mxu0 0.0
        %4077 = vmatpush1.msra.mxu0 0.0
        %4078 = vmatprep.subr.mxu0 0.0
        %4079 = vmatpush1.msra.mxu0 0.0
        %4080 = vmatprep.subr.mxu0 0.0
        %4081 = vmatpush1.msra.mxu0 0.0
        %4082 = vmatprep.subr.mxu0 0.0
        %4083 = vmatpush1.msra.mxu0 0.0
        %4084 = vmatprep.subr.mxu0 0.0
        %4085 = vmatpush1.msra.mxu0 0.0
        %4086 = vmatprep.subr.mxu0 0.0
        %4087 = vmatpush1.msra.mxu0 0.0
        %4088 = vmatprep.subr.mxu0 0.0
        %4089 = vmatpush1.msra.mxu0 0.0
        %4090 = vmatprep.subr.mxu0 0.0
        %4091 = vmatpush1.msra.mxu0 0.0
        %4092 = vmatprep.subr.mxu0 0.0
        %4093 = vmatpush1.msra.mxu0 0.0
        %4094 = vmatprep.subr.mxu0 0.0
        %4095 = vmatpush1.msra.mxu0 0.0
        %4096 = vmatprep.subr.mxu0 0.0
        %4097 = vmatpush1.msra.mxu0 0.0
        %4098 = vmatprep.subr.mxu0 0.0
        %4099 = vmatpush1.msra.mxu0 0.0
        %4100 = vmatprep.subr.mxu0 0.0
        %4101 = vmatpush1.msra.mxu0 0.0
        %4102 = vmatprep.subr.mxu0 0.0
        %4103 = vmatpush1.msra.mxu0 0.0
        %4104 = vmatprep.subr.mxu0 0.0
        %4105 = vmatpush1.msra.mxu0 0.0
        %4106 = vmatprep.subr.mxu0 0.0
        %4107 = vmatpush1.msra.mxu0 0.0
        %4108 = vmatprep.subr.mxu0 0.0
        %4109 = vmatpush1.msra.mxu0 0.0
        %4110 = vmatprep.subr.mxu0 0.0
        %4111 = vmatpush1.msra.mxu0 0.0
        %4112 = vmatprep.subr.mxu0 0.0
        %4113 = vmatpush1.msra.mxu0 0.0
        %4114 = vmatprep.mubr.f32.mxu0 0.0
        %4115 = vmatmul.mubr.f32.gmra.mrb[0].mxu0 %v4040
        %v4116 = vpop.f32.mrb[0].mxu0
        %v4117 = vadd.f32 0.0, %v4116
        %v4118 = vpop.f32.mrb[0].mxu0
        %4119 = vmatprep.mubr.f32.mxu0 0.0
        %4120 = vmatmul.mubr.f32.gmra.mrb[0].mxu0 %v4042
        %v4121 = vpop.f32.mrb[0].mxu0
        %v4122 = vadd.f32 0.0, %v4121
        %v4123 = vpop.f32.mrb[0].mxu0
        %4124 = vmatprep.mubr.f32.mxu0 0.0
        %4125 = vmatmul.mubr.f32.gmra.mrb[0].mxu0 %v4044
        %v4126 = vpop.f32.mrb[0].mxu0
        %v4127 = vadd.f32 0.0, %v4126
        %v4128 = vpop.f32.mrb[0].mxu0
        %4129 = vmatprep.mubr.f32.mxu0 0.0
        %4130 = vmatmul.mubr.f32.gmra.mrb[0].mxu0 %v4046
        %v4131 = vpop.f32.mrb[0].mxu0
        %v4132 = vadd.f32 0.0, %v4131
        %v4133 = vpop.f32.mrb[0].mxu0
        %4134 = vmatprep.mubr.f32.mxu0 0.0
        %4135 = vmatmul.mubr.f32.gmra.mrb[0].mxu0 %v4048
        %v4136 = vpop.f32.mrb[0].mxu0
        %v4137 = vadd.f32 0.0, %v4136
        %v4138 = vpop.f32.mrb[0].mxu0
        %4139 = vdwg.mxu0
        %v4140 = vadd.f32 %v4013, %v4117
        %v4141 = vadd.f32 %v4014, %v4122
        %v4142 = vadd.f32 %v4015, %v4127
        %v4143 = vadd.f32 %v4016, %v4132
        %v4144 = vadd.f32 %v4017, %v4137
        %s4145 = scalar_lea.vmem %s5, 448
        %v4146 = vld [vmem:[%s4145] sm:$0xff]
        %v4147 = vld [vmem:[%s4145 + $0x8] sm:$0xff]
        %v4148 = vld [vmem:[%s4145 + $0x10] sm:$0xff]
        %v4149 = vld [vmem:[%s4145 + $0x18] sm:$0xff]
        %v4150 = vld [vmem:[%s4145 + $0x20] sm:$0xff]
        %v4151 = vld [vmem:[%s4145 + $0x28] sm:$0xff]
        %v4152 = vld [vmem:[%s4145 + $0x30] sm:$0xff]
        %v4153 = vld [vmem:[%s4145 + $0x38] sm:$0xff]
        %v4154 = vrot.slane %v3317, 7
        %v4155 = vsel %vm3685, %v3695, %v4154
        %v4156 = vsel %vm3351, %v4155, 0
        %4158 = vmatprep.subr.mxu0 0.0
        %4159 = vmatpush1.msra.mxu0 %v4146
        %4160 = vmatprep.subr.mxu0 0.0
        %4161 = vmatpush1.msra.mxu0 %v4147
        %4162 = vmatprep.subr.mxu0 0.0
        %4163 = vmatpush1.msra.mxu0 %v4148
        %4164 = vmatprep.subr.mxu0 0.0
        %4165 = vmatpush1.msra.mxu0 %v4149
        %4166 = vmatprep.subr.mxu0 0.0
        %4167 = vmatpush1.msra.mxu0 %v4150
        %4168 = vmatprep.subr.mxu0 0.0
        %4169 = vmatpush1.msra.mxu0 %v4151
        %4170 = vmatprep.subr.mxu0 0.0
        %4171 = vmatpush1.msra.mxu0 %v4152
        %4172 = vmatprep.subr.mxu0 0.0
        %4173 = vmatpush1.msra.mxu0 %v4153
        %4174 = vmatprep.subr.mxu0 0.0
        %4175 = vmatpush1.msra.mxu0 0.0
        %4176 = vmatprep.subr.mxu0 0.0
        %4177 = vmatpush1.msra.mxu0 0.0
        %4178 = vmatprep.subr.mxu0 0.0
        %4179 = vmatpush1.msra.mxu0 0.0
        %4180 = vmatprep.subr.mxu0 0.0
        %4181 = vmatpush1.msra.mxu0 0.0
        %4182 = vmatprep.subr.mxu0 0.0
        %4183 = vmatpush1.msra.mxu0 0.0
        %4184 = vmatprep.subr.mxu0 0.0
        %4185 = vmatpush1.msra.mxu0 0.0
        %4186 = vmatprep.subr.mxu0 0.0
        %4187 = vmatpush1.msra.mxu0 0.0
        %4188 = vmatprep.subr.mxu0 0.0
        %4189 = vmatpush1.msra.mxu0 0.0
        %4190 = vmatprep.subr.mxu0 0.0
        %4191 = vmatpush1.msra.mxu0 0.0
        %4192 = vmatprep.subr.mxu0 0.0
        %4193 = vmatpush1.msra.mxu0 0.0
        %4194 = vmatprep.subr.mxu0 0.0
        %4195 = vmatpush1.msra.mxu0 0.0
        %4196 = vmatprep.subr.mxu0 0.0
        %4197 = vmatpush1.msra.mxu0 0.0
        %4198 = vmatprep.subr.mxu0 0.0
        %4199 = vmatpush1.msra.mxu0 0.0
        %4200 = vmatprep.subr.mxu0 0.0
        %4201 = vmatpush1.msra.mxu0 0.0
        %4202 = vmatprep.subr.mxu0 0.0
        %4203 = vmatpush1.msra.mxu0 0.0
        %4204 = vmatprep.subr.mxu0 0.0
        %4205 = vmatpush1.msra.mxu0 0.0
        %4206 = vmatprep.subr.mxu0 0.0
        %4207 = vmatpush1.msra.mxu0 0.0
        %4208 = vmatprep.subr.mxu0 0.0
        %4209 = vmatpush1.msra.mxu0 0.0
        %4210 = vmatprep.subr.mxu0 0.0
        %4211 = vmatpush1.msra.mxu0 0.0
        %4212 = vmatprep.subr.mxu0 0.0
        %4213 = vmatpush1.msra.mxu0 0.0
        %4214 = vmatprep.subr.mxu0 0.0
        %4215 = vmatpush1.msra.mxu0 0.0
        %4216 = vmatprep.subr.mxu0 0.0
        %4217 = vmatpush1.msra.mxu0 0.0
        %4218 = vmatprep.subr.mxu0 0.0
        %4219 = vmatpush1.msra.mxu0 0.0
        %4220 = vmatprep.subr.mxu0 0.0
        %4221 = vmatpush1.msra.mxu0 0.0
        %4222 = vmatprep.mubr.f32.mxu0 0.0
        %4223 = vmatmul.mubr.f32.gmra.mrb[0].mxu0 %v3699
        %v4224 = vpop.f32.mrb[0].mxu0
        %v4225 = vadd.f32 0.0, %v4224
        %v4226 = vpop.f32.mrb[0].mxu0
        %4227 = vmatprep.mubr.f32.mxu0 0.0
        %4228 = vmatmul.mubr.f32.gmra.mrb[0].mxu0 %v3701
        %v4229 = vpop.f32.mrb[0].mxu0
        %v4230 = vadd.f32 0.0, %v4229
        %v4231 = vpop.f32.mrb[0].mxu0
        %4232 = vmatprep.mubr.f32.mxu0 0.0
        %4233 = vmatmul.mubr.f32.gmra.mrb[0].mxu0 %v3703
        %v4234 = vpop.f32.mrb[0].mxu0
        %v4235 = vadd.f32 0.0, %v4234
        %v4236 = vpop.f32.mrb[0].mxu0
        %4237 = vmatprep.mubr.f32.mxu0 0.0
        %4238 = vmatmul.mubr.f32.gmra.mrb[0].mxu0 %v3705
        %v4239 = vpop.f32.mrb[0].mxu0
        %v4240 = vadd.f32 0.0, %v4239
        %v4241 = vpop.f32.mrb[0].mxu0
        %4242 = vmatprep.mubr.f32.mxu0 0.0
        %4243 = vmatmul.mubr.f32.gmra.mrb[0].mxu0 %v4156
        %v4244 = vpop.f32.mrb[0].mxu0
        %v4245 = vadd.f32 0.0, %v4244
        %v4246 = vpop.f32.mrb[0].mxu0
        %4247 = vdwg.mxu0
        %v4248 = vadd.f32 %v4140, %v4225
        %v4249 = vadd.f32 %v4141, %v4230
        %v4250 = vadd.f32 %v4142, %v4235
        %v4251 = vadd.f32 %v4143, %v4240
        %v4252 = vadd.f32 %v4144, %v4245
        %s4253 = scalar_lea.vmem %s5, 512
        %v4254 = vld [vmem:[%s4253] sm:$0xff]
        %v4255 = vld [vmem:[%s4253 + $0x8] sm:$0xff]
        %v4256 = vld [vmem:[%s4253 + $0x10] sm:$0xff]
        %v4257 = vld [vmem:[%s4253 + $0x18] sm:$0xff]
        %v4258 = vld [vmem:[%s4253 + $0x20] sm:$0xff]
        %v4259 = vld [vmem:[%s4253 + $0x28] sm:$0xff]
        %v4260 = vld [vmem:[%s4253 + $0x30] sm:$0xff]
        %v4261 = vld [vmem:[%s4253 + $0x38] sm:$0xff]
        %v4262 = vsel %vm3351, %v3317, 0
        %4264 = vmatprep.subr.mxu0 0.0
        %4265 = vmatpush1.msra.mxu0 %v4254
        %4266 = vmatprep.subr.mxu0 0.0
        %4267 = vmatpush1.msra.mxu0 %v4255
        %4268 = vmatprep.subr.mxu0 0.0
        %4269 = vmatpush1.msra.mxu0 %v4256
        %4270 = vmatprep.subr.mxu0 0.0
        %4271 = vmatpush1.msra.mxu0 %v4257
        %4272 = vmatprep.subr.mxu0 0.0
        %4273 = vmatpush1.msra.mxu0 %v4258
        %4274 = vmatprep.subr.mxu0 0.0
        %4275 = vmatpush1.msra.mxu0 %v4259
        %4276 = vmatprep.subr.mxu0 0.0
        %4277 = vmatpush1.msra.mxu0 %v4260
        %4278 = vmatprep.subr.mxu0 0.0
        %4279 = vmatpush1.msra.mxu0 %v4261
        %4280 = vmatprep.subr.mxu0 0.0
        %4281 = vmatpush1.msra.mxu0 0.0
        %4282 = vmatprep.subr.mxu0 0.0
        %4283 = vmatpush1.msra.mxu0 0.0
        %4284 = vmatprep.subr.mxu0 0.0
        %4285 = vmatpush1.msra.mxu0 0.0
        %4286 = vmatprep.subr.mxu0 0.0
        %4287 = vmatpush1.msra.mxu0 0.0
        %4288 = vmatprep.subr.mxu0 0.0
        %4289 = vmatpush1.msra.mxu0 0.0
        %4290 = vmatprep.subr.mxu0 0.0
        %4291 = vmatpush1.msra.mxu0 0.0
        %4292 = vmatprep.subr.mxu0 0.0
        %4293 = vmatpush1.msra.mxu0 0.0
        %4294 = vmatprep.subr.mxu0 0.0
        %4295 = vmatpush1.msra.mxu0 0.0
        %4296 = vmatprep.subr.mxu0 0.0
        %4297 = vmatpush1.msra.mxu0 0.0
        %4298 = vmatprep.subr.mxu0 0.0
        %4299 = vmatpush1.msra.mxu0 0.0
        %4300 = vmatprep.subr.mxu0 0.0
        %4301 = vmatpush1.msra.mxu0 0.0
        %4302 = vmatprep.subr.mxu0 0.0
        %4303 = vmatpush1.msra.mxu0 0.0
        %4304 = vmatprep.subr.mxu0 0.0
        %4305 = vmatpush1.msra.mxu0 0.0
        %4306 = vmatprep.subr.mxu0 0.0
        %4307 = vmatpush1.msra.mxu0 0.0
        %4308 = vmatprep.subr.mxu0 0.0
        %4309 = vmatpush1.msra.mxu0 0.0
        %4310 = vmatprep.subr.mxu0 0.0
        %4311 = vmatpush1.msra.mxu0 0.0
        %4312 = vmatprep.subr.mxu0 0.0
        %4313 = vmatpush1.msra.mxu0 0.0
        %4314 = vmatprep.subr.mxu0 0.0
        %4315 = vmatpush1.msra.mxu0 0.0
        %4316 = vmatprep.subr.mxu0 0.0
        %4317 = vmatpush1.msra.mxu0 0.0
        %4318 = vmatprep.subr.mxu0 0.0
        %4319 = vmatpush1.msra.mxu0 0.0
        %4320 = vmatprep.subr.mxu0 0.0
        %4321 = vmatpush1.msra.mxu0 0.0
        %4322 = vmatprep.subr.mxu0 0.0
        %4323 = vmatpush1.msra.mxu0 0.0
        %4324 = vmatprep.subr.mxu0 0.0
        %4325 = vmatpush1.msra.mxu0 0.0
        %4326 = vmatprep.subr.mxu0 0.0
        %4327 = vmatpush1.msra.mxu0 0.0
        %4328 = vmatprep.mubr.f32.mxu0 0.0
        %4329 = vmatmul.mubr.f32.gmra.mrb[0].mxu0 %v3456
        %v4330 = vpop.f32.mrb[0].mxu0
        %v4331 = vadd.f32 0.0, %v4330
        %v4332 = vpop.f32.mrb[0].mxu0
        %4333 = vmatprep.mubr.f32.mxu0 0.0
        %4334 = vmatmul.mubr.f32.gmra.mrb[0].mxu0 %v3458
        %v4335 = vpop.f32.mrb[0].mxu0
        %v4336 = vadd.f32 0.0, %v4335
        %v4337 = vpop.f32.mrb[0].mxu0
        %4338 = vmatprep.mubr.f32.mxu0 0.0
        %4339 = vmatmul.mubr.f32.gmra.mrb[0].mxu0 %v3460
        %v4340 = vpop.f32.mrb[0].mxu0
        %v4341 = vadd.f32 0.0, %v4340
        %v4342 = vpop.f32.mrb[0].mxu0
        %4343 = vmatprep.mubr.f32.mxu0 0.0
        %4344 = vmatmul.mubr.f32.gmra.mrb[0].mxu0 %v3811
        %v4345 = vpop.f32.mrb[0].mxu0
        %v4346 = vadd.f32 0.0, %v4345
        %v4347 = vpop.f32.mrb[0].mxu0
        %4348 = vmatprep.mubr.f32.mxu0 0.0
        %4349 = vmatmul.mubr.f32.gmra.mrb[0].mxu0 %v4262
        %v4350 = vpop.f32.mrb[0].mxu0
        %v4351 = vadd.f32 0.0, %v4350
        %v4352 = vpop.f32.mrb[0].mxu0
        %4353 = vdwg.mxu0
        %v4354 = vadd.f32 %v4248, %v4331
        %v4355 = vadd.f32 %v4249, %v4336
        %v4356 = vadd.f32 %v4250, %v4341
        %v4357 = vadd.f32 %v4251, %v4346
        %v4358 = vadd.f32 %v4252, %v4351
        %v4359 = vld [vmem:[%s6] sm:$0x1]
        %v4361 = vlaneseq
        %v4362 = vshrl.u32 %v4361, 7
        %v4363 = vsub.s32 0, %v4362
        %v4364 = vrot.slane %v4359, %v4363
        %v4366 = vadd.f32 %v4354, %v4364
        %v4367 = vadd.f32 %v4355, %v4364
        %v4368 = vadd.f32 %v4356, %v4364
        %v4369 = vadd.f32 %v4357, %v4364
        %v4370 = vadd.f32 %v4358, %v4364
        %vm4371 = vcmp.gt.f32.partialorder %v4366, 0.0
        %vm4372 = vcmp.gt.f32.partialorder %v4367, 0.0
        %vm4373 = vcmp.gt.f32.partialorder %v4368, 0.0
        %vm4374 = vcmp.gt.f32.partialorder %v4369, 0.0
        %vm4375 = vcmp.gt.f32.partialorder %v4370, 0.0
        %v4376 = vstv %s426
        %v4377 = vmul.f32 %v4376, %v4366
        %v4378 = vmul.f32 %v4376, %v4367
        %v4379 = vmul.f32 %v4376, %v4368
        %v4380 = vmul.f32 %v4376, %v4369
        %v4381 = vmul.f32 %v4376, %v4370
        %v4382 = vsel %vm4371, %v4366, %v4377
        %v4383 = vsel %vm4372, %v4367, %v4378
        %v4384 = vsel %vm4373, %v4368, %v4379
        %v4385 = vsel %vm4374, %v4369, %v4380
        %v4386 = vsel %vm4375, %v4370, %v4381
        %v4392 = vrot.slane %v4382, 7
        %v4393 = vrot.slane %v4383, 7
        %v4394 = vsel %vm3685, %v4392, %v4393
        %v4395 = vrot.slane %v4384, 7
        %v4396 = vsel %vm3685, %v4393, %v4395
        %v4397 = vrot.slane %v4385, 7
        %v4398 = vsel %vm3685, %v4395, %v4397
        %v4399 = vrot.slane %v4386, 7
        %v4400 = vsel %vm3685, %v4397, %v4399
        %v4405 = vmax.f32 %v4382, %v4394
        %v4406 = vmax.f32 %v4383, %v4396
        %v4407 = vmax.f32 %v4384, %v4398
        %v4408 = vmax.f32 %v4385, %v4400
        %v4413 = vrot.slane %v4405, 1
        %v4414 = vrot.slane %v4406, 1
        %v4415 = vsel %vm494, %v4413, %v4414
        %v4416 = vrot.slane %v4407, 1
        %v4417 = vsel %vm494, %v4414, %v4416
        %v4418 = vrot.slane %v4408, 1
        %v4419 = vsel %vm494, %v4416, %v4418
        %v4424 = vmax.f32 %v4405, %v4415
        %v4425 = vmax.f32 %v4406, %v4417
        %v4426 = vmax.f32 %v4407, %v4419
        %v4427 = vmax.f32 %v4408, %v4418
        %v4428 = vld [vmem:[%s7] sm:$0xf]
        %vm4429 = vcmask 220160
        %v4431 = vsel %vm4429, %v4428, 0
        %vm4433 = vcmask 1042432
        %v4435 = vsel %vm4433, %v4427, 0
        %4437 = vmatprep.subr.mxu0 0.0
        %4438 = vmatpush1.msra.mxu0 %v4424
        %4439 = vmatprep.subr.mxu0 0.0
        %4440 = vmatpush1.msra.mxu0 %v4425
        %4441 = vmatprep.subr.mxu0 0.0
        %4442 = vmatpush1.msra.mxu0 %v4426
        %4443 = vmatprep.subr.mxu0 0.0
        %4444 = vmatpush1.msra.mxu0 %v4435
        %4445 = vmatprep.subr.mxu0 0.0
        %4446 = vmatpush1.msra.mxu0 0.0
        %4447 = vmatprep.subr.mxu0 0.0
        %4448 = vmatpush1.msra.mxu0 0.0
        %4449 = vmatprep.subr.mxu0 0.0
        %4450 = vmatpush1.msra.mxu0 0.0
        %4451 = vmatprep.subr.mxu0 0.0
        %4452 = vmatpush1.msra.mxu0 0.0
        %4453 = vmatprep.subr.mxu0 0.0
        %4454 = vmatpush1.msra.mxu0 0.0
        %4455 = vmatprep.subr.mxu0 0.0
        %4456 = vmatpush1.msra.mxu0 0.0
        %4457 = vmatprep.subr.mxu0 0.0
        %4458 = vmatpush1.msra.mxu0 0.0
        %4459 = vmatprep.subr.mxu0 0.0
        %4460 = vmatpush1.msra.mxu0 0.0
        %4461 = vmatprep.subr.mxu0 0.0
        %4462 = vmatpush1.msra.mxu0 0.0
        %4463 = vmatprep.subr.mxu0 0.0
        %4464 = vmatpush1.msra.mxu0 0.0
        %4465 = vmatprep.subr.mxu0 0.0
        %4466 = vmatpush1.msra.mxu0 0.0
        %4467 = vmatprep.subr.mxu0 0.0
        %4468 = vmatpush1.msra.mxu0 0.0
        %4469 = vmatprep.subr.mxu0 0.0
        %4470 = vmatpush1.msra.mxu0 0.0
        %4471 = vmatprep.subr.mxu0 0.0
        %4472 = vmatpush1.msra.mxu0 0.0
        %4473 = vmatprep.subr.mxu0 0.0
        %4474 = vmatpush1.msra.mxu0 0.0
        %4475 = vmatprep.subr.mxu0 0.0
        %4476 = vmatpush1.msra.mxu0 0.0
        %4477 = vmatprep.subr.mxu0 0.0
        %4478 = vmatpush1.msra.mxu0 0.0
        %4479 = vmatprep.subr.mxu0 0.0
        %4480 = vmatpush1.msra.mxu0 0.0
        %4481 = vmatprep.subr.mxu0 0.0
        %4482 = vmatpush1.msra.mxu0 0.0
        %4483 = vmatprep.subr.mxu0 0.0
        %4484 = vmatpush1.msra.mxu0 0.0
        %4485 = vmatprep.subr.mxu0 0.0
        %4486 = vmatpush1.msra.mxu0 0.0
        %4487 = vmatprep.subr.mxu0 0.0
        %4488 = vmatpush1.msra.mxu0 0.0
        %4489 = vmatprep.subr.mxu0 0.0
        %4490 = vmatpush1.msra.mxu0 0.0
        %4491 = vmatprep.subr.mxu0 0.0
        %4492 = vmatpush1.msra.mxu0 0.0
        %4493 = vmatprep.subr.mxu0 0.0
        %4494 = vmatpush1.msra.mxu0 0.0
        %4495 = vmatprep.subr.mxu0 0.0
        %4496 = vmatpush1.msra.mxu0 0.0
        %4497 = vmatprep.subr.mxu0 0.0
        %4498 = vmatpush1.msra.mxu0 0.0
        %4499 = vmatprep.subr.mxu0 0.0
        %4500 = vmatpush1.msra.mxu0 0.0
        %4501 = vmatprep.mubr.f32.mxu0 0.0
        %4502 = vmatmul.mubr.f32.gmra.mrb[0].mxu0 %v4431
        %v4503 = vpop.f32.mrb[0].mxu0
        %v4504 = vadd.f32 0.0, %v4503
        %v4505 = vpop.f32.mrb[0].mxu0
        %4506 = vdwg.mxu0
        %v4507 = vld [vmem:[%s9] sm:$0x1]
        %v4508 = vld [vmem:[%s8] sm:$0xff]
        %v4509 = vld [vmem:[%s8 + $0x8] sm:$0xff]
        %v4510 = vld [vmem:[%s8 + $0x10] sm:$0xff]
        %v4511 = vld [vmem:[%s8 + $0x18] sm:$0xff]
        %v4512 = vld [vmem:[%s8 + $0x20] sm:$0xff]
        %v4513 = vld [vmem:[%s8 + $0x28] sm:$0xff]
        %v4514 = vld [vmem:[%s8 + $0x30] sm:$0xff]
        %v4515 = vld [vmem:[%s8 + $0x38] sm:$0xff]
        %v4516 = vld [vmem:[%s8 + $0x40] sm:$0xff]
        %v4517 = vld [vmem:[%s8 + $0x48] sm:$0xff]
        %v4518 = vld [vmem:[%s8 + $0x50] sm:$0xff]
        %v4519 = vld [vmem:[%s8 + $0x58] sm:$0xff]
        %v4520 = vld [vmem:[%s8 + $0x60] sm:$0xff]
        %v4521 = vld [vmem:[%s8 + $0x68] sm:$0xff]
        %v4522 = vld [vmem:[%s8 + $0x70] sm:$0xff]
        %v4523 = vld [vmem:[%s8 + $0x78] sm:$0xff]
        %4524 = vmatprep.subr.mxu0 0.0
        %4525 = vmatpush1.msra.mxu0 %v4508
        %4526 = vmatprep.subr.mxu0 0.0
        %4527 = vmatpush1.msra.mxu0 %v4509
        %4528 = vmatprep.subr.mxu0 0.0
        %4529 = vmatpush1.msra.mxu0 %v4510
        %4530 = vmatprep.subr.mxu0 0.0
        %4531 = vmatpush1.msra.mxu0 %v4511
        %4532 = vmatprep.subr.mxu0 0.0
        %4533 = vmatpush1.msra.mxu0 %v4512
        %4534 = vmatprep.subr.mxu0 0.0
        %4535 = vmatpush1.msra.mxu0 %v4513
        %4536 = vmatprep.subr.mxu0 0.0
        %4537 = vmatpush1.msra.mxu0 %v4514
        %4538 = vmatprep.subr.mxu0 0.0
        %4539 = vmatpush1.msra.mxu0 %v4515
        %4540 = vmatprep.subr.mxu0 0.0
        %4541 = vmatpush1.msra.mxu0 %v4516
        %4542 = vmatprep.subr.mxu0 0.0
        %4543 = vmatpush1.msra.mxu0 %v4517
        %4544 = vmatprep.subr.mxu0 0.0
        %4545 = vmatpush1.msra.mxu0 %v4518
        %4546 = vmatprep.subr.mxu0 0.0
        %4547 = vmatpush1.msra.mxu0 %v4519
        %4548 = vmatprep.subr.mxu0 0.0
        %4549 = vmatpush1.msra.mxu0 %v4520
        %4550 = vmatprep.subr.mxu0 0.0
        %4551 = vmatpush1.msra.mxu0 %v4521
        %4552 = vmatprep.subr.mxu0 0.0
        %4553 = vmatpush1.msra.mxu0 %v4522
        %4554 = vmatprep.subr.mxu0 0.0
        %4555 = vmatpush1.msra.mxu0 %v4523
        %4556 = vmatprep.subr.mxu0 0.0
        %4557 = vmatpush1.msra.mxu0 0.0
        %4558 = vmatprep.subr.mxu0 0.0
        %4559 = vmatpush1.msra.mxu0 0.0
        %4560 = vmatprep.subr.mxu0 0.0
        %4561 = vmatpush1.msra.mxu0 0.0
        %4562 = vmatprep.subr.mxu0 0.0
        %4563 = vmatpush1.msra.mxu0 0.0
        %4564 = vmatprep.subr.mxu0 0.0
        %4565 = vmatpush1.msra.mxu0 0.0
        %4566 = vmatprep.subr.mxu0 0.0
        %4567 = vmatpush1.msra.mxu0 0.0
        %4568 = vmatprep.subr.mxu0 0.0
        %4569 = vmatpush1.msra.mxu0 0.0
        %4570 = vmatprep.subr.mxu0 0.0
        %4571 = vmatpush1.msra.mxu0 0.0
        %4572 = vmatprep.subr.mxu0 0.0
        %4573 = vmatpush1.msra.mxu0 0.0
        %4574 = vmatprep.subr.mxu0 0.0
        %4575 = vmatpush1.msra.mxu0 0.0
        %4576 = vmatprep.subr.mxu0 0.0
        %4577 = vmatpush1.msra.mxu0 0.0
        %4578 = vmatprep.subr.mxu0 0.0
        %4579 = vmatpush1.msra.mxu0 0.0
        %4580 = vmatprep.subr.mxu0 0.0
        %4581 = vmatpush1.msra.mxu0 0.0
        %4582 = vmatprep.subr.mxu0 0.0
        %4583 = vmatpush1.msra.mxu0 0.0
        %4584 = vmatprep.subr.mxu0 0.0
        %4585 = vmatpush1.msra.mxu0 0.0
        %4586 = vmatprep.subr.mxu0 0.0
        %4587 = vmatpush1.msra.mxu0 0.0
        %4588 = vmatprep.mubr.f32.mxu0 0.0
        %4589 = vmatmul.mubr.f32.gmra.mrb[0].mxu0 %v4504
        %v4590 = vpop.f32.mrb[0].mxu0
        %v4591 = vadd.f32 0.0, %v4590
        %v4592 = vpop.f32.mrb[0].mxu0
        %4593 = vdwg.mxu0
        %v4594 = vadd.f32 %v4507, %v4591
        %s4595 = scalar_lea.vmem %s8, 128
        %v4596 = vld [vmem:[%s4595] sm:$0xff]
        %v4597 = vld [vmem:[%s4595 + $0x8] sm:$0xff]
        %v4598 = vld [vmem:[%s4595 + $0x10] sm:$0xff]
        %v4599 = vld [vmem:[%s4595 + $0x18] sm:$0xff]
        %v4600 = vld [vmem:[%s4595 + $0x20] sm:$0xff]
        %v4601 = vld [vmem:[%s4595 + $0x28] sm:$0xff]
        %v4602 = vld [vmem:[%s4595 + $0x30] sm:$0xff]
        %v4603 = vld [vmem:[%s4595 + $0x38] sm:$0xff]
        %v4604 = vld [vmem:[%s4595 + $0x40] sm:$0xff]
        %v4605 = vld [vmem:[%s4595 + $0x48] sm:$0xff]
        %v4606 = vld [vmem:[%s4595 + $0x50] sm:$0xff]
        %v4607 = vld [vmem:[%s4595 + $0x58] sm:$0xff]
        %v4608 = vld [vmem:[%s4595 + $0x60] sm:$0xff]
        %v4609 = vld [vmem:[%s4595 + $0x68] sm:$0xff]
        %v4610 = vld [vmem:[%s4595 + $0x70] sm:$0xff]
        %v4611 = vld [vmem:[%s4595 + $0x78] sm:$0xff]
        %v4613 = vrot.slane %v4504, 1
        %4615 = vmatprep.subr.mxu0 0.0
        %4616 = vmatpush1.msra.mxu0 %v4596
        %4617 = vmatprep.subr.mxu0 0.0
        %4618 = vmatpush1.msra.mxu0 %v4597
        %4619 = vmatprep.subr.mxu0 0.0
        %4620 = vmatpush1.msra.mxu0 %v4598
        %4621 = vmatprep.subr.mxu0 0.0
        %4622 = vmatpush1.msra.mxu0 %v4599
        %4623 = vmatprep.subr.mxu0 0.0
        %4624 = vmatpush1.msra.mxu0 %v4600
        %4625 = vmatprep.subr.mxu0 0.0
        %4626 = vmatpush1.msra.mxu0 %v4601
        %4627 = vmatprep.subr.mxu0 0.0
        %4628 = vmatpush1.msra.mxu0 %v4602
        %4629 = vmatprep.subr.mxu0 0.0
        %4630 = vmatpush1.msra.mxu0 %v4603
        %4631 = vmatprep.subr.mxu0 0.0
        %4632 = vmatpush1.msra.mxu0 %v4604
        %4633 = vmatprep.subr.mxu0 0.0
        %4634 = vmatpush1.msra.mxu0 %v4605
        %4635 = vmatprep.subr.mxu0 0.0
        %4636 = vmatpush1.msra.mxu0 %v4606
        %4637 = vmatprep.subr.mxu0 0.0
        %4638 = vmatpush1.msra.mxu0 %v4607
        %4639 = vmatprep.subr.mxu0 0.0
        %4640 = vmatpush1.msra.mxu0 %v4608
        %4641 = vmatprep.subr.mxu0 0.0
        %4642 = vmatpush1.msra.mxu0 %v4609
        %4643 = vmatprep.subr.mxu0 0.0
        %4644 = vmatpush1.msra.mxu0 %v4610
        %4645 = vmatprep.subr.mxu0 0.0
        %4646 = vmatpush1.msra.mxu0 %v4611
        %4647 = vmatprep.subr.mxu0 0.0
        %4648 = vmatpush1.msra.mxu0 0.0
        %4649 = vmatprep.subr.mxu0 0.0
        %4650 = vmatpush1.msra.mxu0 0.0
        %4651 = vmatprep.subr.mxu0 0.0
        %4652 = vmatpush1.msra.mxu0 0.0
        %4653 = vmatprep.subr.mxu0 0.0
        %4654 = vmatpush1.msra.mxu0 0.0
        %4655 = vmatprep.subr.mxu0 0.0
        %4656 = vmatpush1.msra.mxu0 0.0
        %4657 = vmatprep.subr.mxu0 0.0
        %4658 = vmatpush1.msra.mxu0 0.0
        %4659 = vmatprep.subr.mxu0 0.0
        %4660 = vmatpush1.msra.mxu0 0.0
        %4661 = vmatprep.subr.mxu0 0.0
        %4662 = vmatpush1.msra.mxu0 0.0
        %4663 = vmatprep.subr.mxu0 0.0
        %4664 = vmatpush1.msra.mxu0 0.0
        %4665 = vmatprep.subr.mxu0 0.0
        %4666 = vmatpush1.msra.mxu0 0.0
        %4667 = vmatprep.subr.mxu0 0.0
        %4668 = vmatpush1.msra.mxu0 0.0
        %4669 = vmatprep.subr.mxu0 0.0
        %4670 = vmatpush1.msra.mxu0 0.0
        %4671 = vmatprep.subr.mxu0 0.0
        %4672 = vmatpush1.msra.mxu0 0.0
        %4673 = vmatprep.subr.mxu0 0.0
        %4674 = vmatpush1.msra.mxu0 0.0
        %4675 = vmatprep.subr.mxu0 0.0
        %4676 = vmatpush1.msra.mxu0 0.0
        %4677 = vmatprep.subr.mxu0 0.0
        %4678 = vmatpush1.msra.mxu0 0.0
        %4679 = vmatprep.mubr.f32.mxu0 0.0
        %4680 = vmatmul.mubr.f32.gmra.mrb[0].mxu0 %v4613
        %v4681 = vpop.f32.mrb[0].mxu0
        %v4682 = vadd.f32 0.0, %v4681
        %v4683 = vpop.f32.mrb[0].mxu0
        %4684 = vdwg.mxu0
        %v4685 = vadd.f32 %v4594, %v4682
        %s4686 = scalar_lea.vmem %s8, 256
        %v4687 = vld [vmem:[%s4686] sm:$0xff]
        %v4688 = vld [vmem:[%s4686 + $0x8] sm:$0xff]
        %v4689 = vld [vmem:[%s4686 + $0x10] sm:$0xff]
        %v4690 = vld [vmem:[%s4686 + $0x18] sm:$0xff]
        %v4691 = vld [vmem:[%s4686 + $0x20] sm:$0xff]
        %v4692 = vld [vmem:[%s4686 + $0x28] sm:$0xff]
        %v4693 = vld [vmem:[%s4686 + $0x30] sm:$0xff]
        %v4694 = vld [vmem:[%s4686 + $0x38] sm:$0xff]
        %v4695 = vld [vmem:[%s4686 + $0x40] sm:$0xff]
        %v4696 = vld [vmem:[%s4686 + $0x48] sm:$0xff]
        %v4697 = vld [vmem:[%s4686 + $0x50] sm:$0xff]
        %v4698 = vld [vmem:[%s4686 + $0x58] sm:$0xff]
        %v4699 = vld [vmem:[%s4686 + $0x60] sm:$0xff]
        %v4700 = vld [vmem:[%s4686 + $0x68] sm:$0xff]
        %v4701 = vld [vmem:[%s4686 + $0x70] sm:$0xff]
        %v4702 = vld [vmem:[%s4686 + $0x78] sm:$0xff]
        %v4703 = vrot.slane %v4504, 2
        %4705 = vmatprep.subr.mxu0 0.0
        %4706 = vmatpush1.msra.mxu0 %v4687
        %4707 = vmatprep.subr.mxu0 0.0
        %4708 = vmatpush1.msra.mxu0 %v4688
        %4709 = vmatprep.subr.mxu0 0.0
        %4710 = vmatpush1.msra.mxu0 %v4689
        %4711 = vmatprep.subr.mxu0 0.0
        %4712 = vmatpush1.msra.mxu0 %v4690
        %4713 = vmatprep.subr.mxu0 0.0
        %4714 = vmatpush1.msra.mxu0 %v4691
        %4715 = vmatprep.subr.mxu0 0.0
        %4716 = vmatpush1.msra.mxu0 %v4692
        %4717 = vmatprep.subr.mxu0 0.0
        %4718 = vmatpush1.msra.mxu0 %v4693
        %4719 = vmatprep.subr.mxu0 0.0
        %4720 = vmatpush1.msra.mxu0 %v4694
        %4721 = vmatprep.subr.mxu0 0.0
        %4722 = vmatpush1.msra.mxu0 %v4695
        %4723 = vmatprep.subr.mxu0 0.0
        %4724 = vmatpush1.msra.mxu0 %v4696
        %4725 = vmatprep.subr.mxu0 0.0
        %4726 = vmatpush1.msra.mxu0 %v4697
        %4727 = vmatprep.subr.mxu0 0.0
        %4728 = vmatpush1.msra.mxu0 %v4698
        %4729 = vmatprep.subr.mxu0 0.0
        %4730 = vmatpush1.msra.mxu0 %v4699
        %4731 = vmatprep.subr.mxu0 0.0
        %4732 = vmatpush1.msra.mxu0 %v4700
        %4733 = vmatprep.subr.mxu0 0.0
        %4734 = vmatpush1.msra.mxu0 %v4701
        %4735 = vmatprep.subr.mxu0 0.0
        %4736 = vmatpush1.msra.mxu0 %v4702
        %4737 = vmatprep.subr.mxu0 0.0
        %4738 = vmatpush1.msra.mxu0 0.0
        %4739 = vmatprep.subr.mxu0 0.0
        %4740 = vmatpush1.msra.mxu0 0.0
        %4741 = vmatprep.subr.mxu0 0.0
        %4742 = vmatpush1.msra.mxu0 0.0
        %4743 = vmatprep.subr.mxu0 0.0
        %4744 = vmatpush1.msra.mxu0 0.0
        %4745 = vmatprep.subr.mxu0 0.0
        %4746 = vmatpush1.msra.mxu0 0.0
        %4747 = vmatprep.subr.mxu0 0.0
        %4748 = vmatpush1.msra.mxu0 0.0
        %4749 = vmatprep.subr.mxu0 0.0
        %4750 = vmatpush1.msra.mxu0 0.0
        %4751 = vmatprep.subr.mxu0 0.0
        %4752 = vmatpush1.msra.mxu0 0.0
        %4753 = vmatprep.subr.mxu0 0.0
        %4754 = vmatpush1.msra.mxu0 0.0
        %4755 = vmatprep.subr.mxu0 0.0
        %4756 = vmatpush1.msra.mxu0 0.0
        %4757 = vmatprep.subr.mxu0 0.0
        %4758 = vmatpush1.msra.mxu0 0.0
        %4759 = vmatprep.subr.mxu0 0.0
        %4760 = vmatpush1.msra.mxu0 0.0
        %4761 = vmatprep.subr.mxu0 0.0
        %4762 = vmatpush1.msra.mxu0 0.0
        %4763 = vmatprep.subr.mxu0 0.0
        %4764 = vmatpush1.msra.mxu0 0.0
        %4765 = vmatprep.subr.mxu0 0.0
        %4766 = vmatpush1.msra.mxu0 0.0
        %4767 = vmatprep.subr.mxu0 0.0
        %4768 = vmatpush1.msra.mxu0 0.0
        %4769 = vmatprep.mubr.f32.mxu0 0.0
        %4770 = vmatmul.mubr.f32.gmra.mrb[0].mxu0 %v4703
        %v4771 = vpop.f32.mrb[0].mxu0
        %v4772 = vadd.f32 0.0, %v4771
        %v4773 = vpop.f32.mrb[0].mxu0
        %4774 = vdwg.mxu0
        %v4775 = vadd.f32 %v4685, %v4772
        %s4776 = scalar_lea.vmem %s8, 384
        %v4777 = vld [vmem:[%s4776] sm:$0xff]
        %v4778 = vld [vmem:[%s4776 + $0x8] sm:$0xff]
        %v4779 = vld [vmem:[%s4776 + $0x10] sm:$0xff]
        %v4780 = vld [vmem:[%s4776 + $0x18] sm:$0xff]
        %v4781 = vld [vmem:[%s4776 + $0x20] sm:$0xff]
        %v4782 = vld [vmem:[%s4776 + $0x28] sm:$0xff]
        %v4783 = vld [vmem:[%s4776 + $0x30] sm:$0xff]
        %v4784 = vld [vmem:[%s4776 + $0x38] sm:$0xff]
        %v4785 = vld [vmem:[%s4776 + $0x40] sm:$0xff]
        %v4786 = vld [vmem:[%s4776 + $0x48] sm:$0xff]
        %v4787 = vld [vmem:[%s4776 + $0x50] sm:$0xff]
        %v4788 = vld [vmem:[%s4776 + $0x58] sm:$0xff]
        %v4789 = vld [vmem:[%s4776 + $0x60] sm:$0xff]
        %v4790 = vld [vmem:[%s4776 + $0x68] sm:$0xff]
        %v4791 = vld [vmem:[%s4776 + $0x70] sm:$0xff]
        %v4792 = vld [vmem:[%s4776 + $0x78] sm:$0xff]
        %v4793 = vrot.slane %v4504, 3
        %4795 = vmatprep.subr.mxu0 0.0
        %4796 = vmatpush1.msra.mxu0 %v4777
        %4797 = vmatprep.subr.mxu0 0.0
        %4798 = vmatpush1.msra.mxu0 %v4778
        %4799 = vmatprep.subr.mxu0 0.0
        %4800 = vmatpush1.msra.mxu0 %v4779
        %4801 = vmatprep.subr.mxu0 0.0
        %4802 = vmatpush1.msra.mxu0 %v4780
        %4803 = vmatprep.subr.mxu0 0.0
        %4804 = vmatpush1.msra.mxu0 %v4781
        %4805 = vmatprep.subr.mxu0 0.0
        %4806 = vmatpush1.msra.mxu0 %v4782
        %4807 = vmatprep.subr.mxu0 0.0
        %4808 = vmatpush1.msra.mxu0 %v4783
        %4809 = vmatprep.subr.mxu0 0.0
        %4810 = vmatpush1.msra.mxu0 %v4784
        %4811 = vmatprep.subr.mxu0 0.0
        %4812 = vmatpush1.msra.mxu0 %v4785
        %4813 = vmatprep.subr.mxu0 0.0
        %4814 = vmatpush1.msra.mxu0 %v4786
        %4815 = vmatprep.subr.mxu0 0.0
        %4816 = vmatpush1.msra.mxu0 %v4787
        %4817 = vmatprep.subr.mxu0 0.0
        %4818 = vmatpush1.msra.mxu0 %v4788
        %4819 = vmatprep.subr.mxu0 0.0
        %4820 = vmatpush1.msra.mxu0 %v4789
        %4821 = vmatprep.subr.mxu0 0.0
        %4822 = vmatpush1.msra.mxu0 %v4790
        %4823 = vmatprep.subr.mxu0 0.0
        %4824 = vmatpush1.msra.mxu0 %v4791
        %4825 = vmatprep.subr.mxu0 0.0
        %4826 = vmatpush1.msra.mxu0 %v4792
        %4827 = vmatprep.subr.mxu0 0.0
        %4828 = vmatpush1.msra.mxu0 0.0
        %4829 = vmatprep.subr.mxu0 0.0
        %4830 = vmatpush1.msra.mxu0 0.0
        %4831 = vmatprep.subr.mxu0 0.0
        %4832 = vmatpush1.msra.mxu0 0.0
        %4833 = vmatprep.subr.mxu0 0.0
        %4834 = vmatpush1.msra.mxu0 0.0
        %4835 = vmatprep.subr.mxu0 0.0
        %4836 = vmatpush1.msra.mxu0 0.0
        %4837 = vmatprep.subr.mxu0 0.0
        %4838 = vmatpush1.msra.mxu0 0.0
        %4839 = vmatprep.subr.mxu0 0.0
        %4840 = vmatpush1.msra.mxu0 0.0
        %4841 = vmatprep.subr.mxu0 0.0
        %4842 = vmatpush1.msra.mxu0 0.0
        %4843 = vmatprep.subr.mxu0 0.0
        %4844 = vmatpush1.msra.mxu0 0.0
        %4845 = vmatprep.subr.mxu0 0.0
        %4846 = vmatpush1.msra.mxu0 0.0
        %4847 = vmatprep.subr.mxu0 0.0
        %4848 = vmatpush1.msra.mxu0 0.0
        %4849 = vmatprep.subr.mxu0 0.0
        %4850 = vmatpush1.msra.mxu0 0.0
        %4851 = vmatprep.subr.mxu0 0.0
        %4852 = vmatpush1.msra.mxu0 0.0
        %4853 = vmatprep.subr.mxu0 0.0
        %4854 = vmatpush1.msra.mxu0 0.0
        %4855 = vmatprep.subr.mxu0 0.0
        %4856 = vmatpush1.msra.mxu0 0.0
        %4857 = vmatprep.subr.mxu0 0.0
        %4858 = vmatpush1.msra.mxu0 0.0
        %4859 = vmatprep.mubr.f32.mxu0 0.0
        %4860 = vmatmul.mubr.f32.gmra.mrb[0].mxu0 %v4793
        %v4861 = vpop.f32.mrb[0].mxu0
        %v4862 = vadd.f32 0.0, %v4861
        %v4863 = vpop.f32.mrb[0].mxu0
        %4864 = vdwg.mxu0
        %v4865 = vadd.f32 %v4775, %v4862
        %vm4866 = vcmp.gt.f32.partialorder %v4865, 0.0
        %v4867 = vstv %s427
        %v4868 = vmul.f32 %v4867, %v4865
        %v4869 = vsel %vm4866, %v4865, %v4868
        %v4870 = vld [vmem:[%s10] sm:$0xff]
        %v4871 = vld [vmem:[%s10 + $0x8] sm:$0xff]
        %v4872 = vld [vmem:[%s10 + $0x10] sm:$0xff]
        %v4873 = vld [vmem:[%s10 + $0x18] sm:$0xff]
        %v4874 = vld [vmem:[%s11] sm:$0x1]
        %vm4875 = vcmask 261120
        %v4877 = vsel %vm4875, %v4869, 0
        %4879 = vmatprep.subr.mxu0 0.0
        %4880 = vmatpush1.msra.mxu0 %v4870
        %4881 = vmatprep.subr.mxu0 0.0
        %4882 = vmatpush1.msra.mxu0 %v4871
        %4883 = vmatprep.subr.mxu0 0.0
        %4884 = vmatpush1.msra.mxu0 %v4872
        %4885 = vmatprep.subr.mxu0 0.0
        %4886 = vmatpush1.msra.mxu0 %v4873
        %4887 = vmatprep.subr.mxu0 0.0
        %4888 = vmatpush1.msra.mxu0 0.0
        %4889 = vmatprep.subr.mxu0 0.0
        %4890 = vmatpush1.msra.mxu0 0.0
        %4891 = vmatprep.subr.mxu0 0.0
        %4892 = vmatpush1.msra.mxu0 0.0
        %4893 = vmatprep.subr.mxu0 0.0
        %4894 = vmatpush1.msra.mxu0 0.0
        %4895 = vmatprep.subr.mxu0 0.0
        %4896 = vmatpush1.msra.mxu0 0.0
        %4897 = vmatprep.subr.mxu0 0.0
        %4898 = vmatpush1.msra.mxu0 0.0
        %4899 = vmatprep.subr.mxu0 0.0
        %4900 = vmatpush1.msra.mxu0 0.0
        %4901 = vmatprep.subr.mxu0 0.0
        %4902 = vmatpush1.msra.mxu0 0.0
        %4903 = vmatprep.subr.mxu0 0.0
        %4904 = vmatpush1.msra.mxu0 0.0
        %4905 = vmatprep.subr.mxu0 0.0
        %4906 = vmatpush1.msra.mxu0 0.0
        %4907 = vmatprep.subr.mxu0 0.0
        %4908 = vmatpush1.msra.mxu0 0.0
        %4909 = vmatprep.subr.mxu0 0.0
        %4910 = vmatpush1.msra.mxu0 0.0
        %4911 = vmatprep.subr.mxu0 0.0
        %4912 = vmatpush1.msra.mxu0 0.0
        %4913 = vmatprep.subr.mxu0 0.0
        %4914 = vmatpush1.msra.mxu0 0.0
        %4915 = vmatprep.subr.mxu0 0.0
        %4916 = vmatpush1.msra.mxu0 0.0
        %4917 = vmatprep.subr.mxu0 0.0
        %4918 = vmatpush1.msra.mxu0 0.0
        %4919 = vmatprep.subr.mxu0 0.0
        %4920 = vmatpush1.msra.mxu0 0.0
        %4921 = vmatprep.subr.mxu0 0.0
        %4922 = vmatpush1.msra.mxu0 0.0
        %4923 = vmatprep.subr.mxu0 0.0
        %4924 = vmatpush1.msra.mxu0 0.0
        %4925 = vmatprep.subr.mxu0 0.0
        %4926 = vmatpush1.msra.mxu0 0.0
        %4927 = vmatprep.subr.mxu0 0.0
        %4928 = vmatpush1.msra.mxu0 0.0
        %4929 = vmatprep.subr.mxu0 0.0
        %4930 = vmatpush1.msra.mxu0 0.0
        %4931 = vmatprep.subr.mxu0 0.0
        %4932 = vmatpush1.msra.mxu0 0.0
        %4933 = vmatprep.subr.mxu0 0.0
        %4934 = vmatpush1.msra.mxu0 0.0
        %4935 = vmatprep.subr.mxu0 0.0
        %4936 = vmatpush1.msra.mxu0 0.0
        %4937 = vmatprep.subr.mxu0 0.0
        %4938 = vmatpush1.msra.mxu0 0.0
        %4939 = vmatprep.subr.mxu0 0.0
        %4940 = vmatpush1.msra.mxu0 0.0
        %4941 = vmatprep.subr.mxu0 0.0
        %4942 = vmatpush1.msra.mxu0 0.0
        %4943 = vmatprep.mubr.f32.mxu0 0.0
        %4944 = vmatmul.mubr.f32.gmra.mrb[0].mxu0 %v4877
        %v4945 = vpop.f32.mrb[0].mxu0
        %v4946 = vadd.f32 %v4874, %v4945
        %v4947 = vpop.f32.mrb[0].mxu0
        %4948 = vdwg.mxu0
        %vm4949 = vcmp.gt.f32.partialorder %v4946, 0.0
        %v4950 = vstv %s428
        %v4951 = vmul.f32 %v4950, %v4946
        %v4952 = vsel %vm4949, %v4946, %v4951
        %vm4953 = vcmask 253952
        %4954 = vst.msk [vmem:[%s419] sm:$0x1] %vm4953, %v4952
        %s4955 = sand.u32 %s292, 1
        %s4956 = scalar_lea.sflag [#allocation3], %s4955
        %s4957 = sand.u32 %s292, 1
        %s4958 = scalar_lea.vmem [#allocation5], %s4957
        // Predicated region
        $region73: #{featurizer_forward.1} parent=67 // pred_check
          %p4959 = pneg %p302
        $region74: #{featurizer_forward.1} parent=67 // pred_check_branch
          %4961 = sbr.rel (%p4959) target = $region76
        $region75: #{featurizer_forward.1} parent=67 // pred_region
          %s4963 = ssub.s32 16, 16
          %4964 = vsyncadd %s4956, %s4963
          %s4965 = smul.addr %s27, 16
          %s4966 = scalar_lea.hbm %s12, %s4965
          %s4968 = sshll.u32 %s4958, 4
          %s4969 = int_to_ptr.vmem [resolvable:$true] %s4968
          %4971 = dma.vmem_to_hbm [thread:$0]  %s4969, 16, %s4966, %s4956
        $region76: #{featurizer_forward.1} parent=67 // pred_fallthru
          _
      $region68: #{featurizer_forward.1} parent=5 // pred_fallthru
        _
      %p4972 = scmp.le.s32.totalorder 2, %s22
      // Predicated region
      $region77: #{featurizer_forward.1} parent=5 // pred_check
        %p4973 = pneg %p4972
      $region78: #{featurizer_forward.1} parent=5 // pred_check_branch
        %4975 = sbr.rel (%p4973) target = $region80
      $region79: #{featurizer_forward.1} parent=5 // pred_region
        %s4976 = ssub.s32 %s22, 2
        // Predicated region
        $region81: #{featurizer_forward.1} parent=79 // pred_check
          %p4977 = pneg %p308
        $region82: #{featurizer_forward.1} parent=79 // pred_check_branch
          %4979 = sbr.rel (%p4977) target = $region84
        $region83: #{featurizer_forward.1} parent=79 // pred_region
          %s4980 = sand.u32 %s293, 1
          %s4981 = scalar_lea.sflag [#allocation3], %s4980
          %s4982 = sand.u32 %s293, 1
          %s4983 = scalar_lea.vmem [#allocation5], %s4982
          %4984 = dma.done %s4981, 16
        $region84: #{featurizer_forward.1} parent=79 // pred_fallthru
          _
      $region80: #{featurizer_forward.1} parent=5 // pred_fallthru
        _
    $region6: #{featurizer_forward.1} parent=1 // loop_footer
      %s26 = sadd.s32 1, %s22
    $region7: #{featurizer_forward.1} parent=1 // loop_footer_branch
      %21 = sbr.rel target = $region3
    $region8: #{featurizer_forward.1} parent=1 // loop_exit
      _
    %4985 = vsyncpa [#allocation3], 1
    %s4986 = scalar_lea.sflag [#allocation3], 1
    %4987 = vsyncpa %s4986, 1
    %4988 = vsyncpa [#allocation4], 1
    %s4989 = scalar_lea.sflag [#allocation4], 1
    %4990 = vsyncpa %s4989, 1

</llo_original>
